<compile_context>
chip_gen: v6e
topology: v6e:2x2x1
jax: 0.10.0
libtpu: 0.0.40
codegen_flags: <defaults>
</compile_context>

<pallas_src>
import functools
import math

import jax
import jax.numpy as jnp
from jax.experimental import pallas as pl
from jax.experimental.pallas import tpu as pltpu


_EPS = 1e-6
_PARALLEL1 = pltpu.CompilerParams(dimension_semantics=("parallel",))


def _row_tile(m, target):
    """Largest row-block that tiles m evenly (multiple of 8 when actually tiling)."""
    if m <= target:
        return m
    for tm in range(min(target, m), 7, -1):
        if m % tm == 0 and tm % 8 == 0:
            return tm
    return m


def _layernorm_f32(x, g, b):
    """Spec LayerNorm: unbiased (ddof=1) variance, eps added to std**2."""
    d = x.shape[-1]
    mean = jnp.mean(x, axis=-1, keepdims=True)
    xc = x - mean
    var = jnp.sum(xc * xc, axis=-1, keepdims=True) * (1.0 / (d - 1))
    return g * xc * jax.lax.rsqrt(var + _EPS) + b


def _attention_core(q, k, v, mask, *, n_heads, scale):
    """q: (Tq, D) f32, k/v: (Tk, D) f32, mask: (1|Tq, Tk) int32 -> (Tq, D) f32."""
    d_model = q.shape[-1]
    dk = d_model // n_heads
    masked = mask == 0
    neg = jnp.float32(-1e9)
    heads = []
    for h in range(n_heads):           # static head loop, one grid step per batch
        sl = slice(h * dk, (h + 1) * dk)
        qh = q[:, sl].astype(jnp.bfloat16)
        kh = k[:, sl].astype(jnp.bfloat16)
        vh = v[:, sl].astype(jnp.bfloat16)
        s = jax.lax.dot_general(qh, kh, (((1,), (1,)), ((), ())),
                                preferred_element_type=jnp.float32) * scale
        s = jnp.where(masked, neg, s)
        s = s - jnp.max(s, axis=-1, keepdims=True)
        p = jnp.exp(s)
        p = p * pl.reciprocal(jnp.sum(p, axis=-1, keepdims=True), approx=True)
        heads.append(jnp.dot(p.astype(jnp.bfloat16), vh,
                             preferred_element_type=jnp.float32))
    return jnp.concatenate(heads, axis=-1)


# -----------------------------------------------------------------------------
# Kernels (one per sublayer)
# -----------------------------------------------------------------------------

def _self_attn_sublayer_kernel(x_ref, m_ref, g_ref, b_ref, wqkv_ref, bqkv_ref,
                               wo_ref, bo_ref, o_ref, *, n_heads, scale):
    x = x_ref[...].astype(jnp.float32)                       # (Tq, D)
    d = x.shape[-1]
    y = _layernorm_f32(x, g_ref[...], b_ref[...])
    qkv = jnp.dot(y.astype(jnp.bfloat16), wqkv_ref[...],
                  preferred_element_type=jnp.float32) + bqkv_ref[...]
    attn = _attention_core(qkv[:, :d], qkv[:, d:2 * d], qkv[:, 2 * d:],
                           m_ref[...], n_heads=n_heads, scale=scale)
    out = jnp.dot(attn.astype(jnp.bfloat16), wo_ref[...],
                  preferred_element_type=jnp.float32) + bo_ref[...]
    o_ref[...] = (x + out).astype(o_ref.dtype)


def _cross_attn_sublayer_kernel(x_ref, mem_ref, m_ref, g_ref, b_ref,
                                wq_ref, bq_ref, wkv_ref, bkv_ref,
                                wo_ref, bo_ref, o_ref, *, n_heads, scale):
    x = x_ref[...].astype(jnp.float32)                       # (Tq, D)
    d = x.shape[-1]
    y = _layernorm_f32(x, g_ref[...], b_ref[...])
    q = jnp.dot(y.astype(jnp.bfloat16), wq_ref[...],
                preferred_element_type=jnp.float32) + bq_ref[...]
    kv = jnp.dot(mem_ref[...].astype(jnp.bfloat16), wkv_ref[...],
                 preferred_element_type=jnp.float32) + bkv_ref[...]
    attn = _attention_core(q, kv[:, :d], kv[:, d:], m_ref[...],
                           n_heads=n_heads, scale=scale)
    out = jnp.dot(attn.astype(jnp.bfloat16), wo_ref[...],
                  preferred_element_type=jnp.float32) + bo_ref[...]
    o_ref[...] = (x + out).astype(o_ref.dtype)


def _ln_ffn_kernel(x_ref, g_ref, b_ref, w1_ref, b1_ref, w2_ref, b2_ref, o_ref):
    x = x_ref[...].astype(jnp.float32)
    y = _layernorm_f32(x, g_ref[...], b_ref[...])
    h = jnp.dot(y.astype(jnp.bfloat16), w1_ref[...],
                preferred_element_type=jnp.float32) + b1_ref[...]
    h = jnp.maximum(h, 0.0)
    z = jnp.dot(h.astype(jnp.bfloat16), w2_ref[...],
                preferred_element_type=jnp.float32) + b2_ref[...]
    o_ref[...] = (x + z).astype(o_ref.dtype)


# -----------------------------------------------------------------------------
# Wrappers
# -----------------------------------------------------------------------------

def self_attn_sublayer(x2d, mask, g, b, wqkv, bqkv, wo, bo, *, n_heads, seq):
    m, d = x2d.shape
    batch = m // seq
    mask_rows = mask.shape[1]
    scale = 1.0 / math.sqrt(d // n_heads)
    return pl.pallas_call(
        functools.partial(_self_attn_sublayer_kernel, n_heads=n_heads, scale=scale),
        out_shape=jax.ShapeDtypeStruct((m, d), jnp.float32),
        grid=(batch,),
        in_specs=[
            pl.BlockSpec((seq, d), lambda i: (i, 0)),
            pl.BlockSpec((None, mask_rows, seq), lambda i: (i, 0, 0)),
            pl.BlockSpec((1, d), lambda i: (0, 0)),
            pl.BlockSpec((1, d), lambda i: (0, 0)),
            pl.BlockSpec((d, 3 * d), lambda i: (0, 0)),
            pl.BlockSpec((1, 3 * d), lambda i: (0, 0)),
            pl.BlockSpec((d, d), lambda i: (0, 0)),
            pl.BlockSpec((1, d), lambda i: (0, 0)),
        ],
        out_specs=pl.BlockSpec((seq, d), lambda i: (i, 0)),
        compiler_params=_PARALLEL1,
    )(x2d, mask, g.reshape(1, d), b.reshape(1, d),
      wqkv, bqkv.reshape(1, 3 * d), wo, bo.reshape(1, d))


def cross_attn_sublayer(x2d, mem2d, mask, g, b, wq, bq, wkv, bkv, wo, bo, *,
                        n_heads, q_seq, kv_seq):
    m, d = x2d.shape
    batch = m // q_seq
    mask_rows = mask.shape[1]
    scale = 1.0 / math.sqrt(d // n_heads)
    return pl.pallas_call(
        functools.partial(_cross_attn_sublayer_kernel, n_heads=n_heads, scale=scale),
        out_shape=jax.ShapeDtypeStruct((m, d), jnp.float32),
        grid=(batch,),
        in_specs=[
            pl.BlockSpec((q_seq, d), lambda i: (i, 0)),
            pl.BlockSpec((kv_seq, d), lambda i: (i, 0)),
            pl.BlockSpec((None, mask_rows, kv_seq), lambda i: (i, 0, 0)),
            pl.BlockSpec((1, d), lambda i: (0, 0)),
            pl.BlockSpec((1, d), lambda i: (0, 0)),
            pl.BlockSpec((d, d), lambda i: (0, 0)),
            pl.BlockSpec((1, d), lambda i: (0, 0)),
            pl.BlockSpec((d, 2 * d), lambda i: (0, 0)),
            pl.BlockSpec((1, 2 * d), lambda i: (0, 0)),
            pl.BlockSpec((d, d), lambda i: (0, 0)),
            pl.BlockSpec((1, d), lambda i: (0, 0)),
        ],
        out_specs=pl.BlockSpec((q_seq, d), lambda i: (i, 0)),
        compiler_params=_PARALLEL1,
    )(x2d, mem2d, mask, g.reshape(1, d), b.reshape(1, d),
      wq, bq.reshape(1, d), wkv, bkv.reshape(1, 2 * d), wo, bo.reshape(1, d))


def ln_ffn(x2d, g, b, w1, b1, w2, b2, *, row_block=256):
    m, d = x2d.shape
    f = w1.shape[1]
    tm = _row_tile(m, row_block)
    return pl.pallas_call(
        _ln_ffn_kernel,
        out_shape=jax.ShapeDtypeStruct((m, d), jnp.float32),
        grid=(m // tm,),
        in_specs=[
            pl.BlockSpec((tm, d), lambda i: (i, 0)),
            pl.BlockSpec((1, d), lambda i: (0, 0)),
            pl.BlockSpec((1, d), lambda i: (0, 0)),
            pl.BlockSpec((d, f), lambda i: (0, 0)),
            pl.BlockSpec((1, f), lambda i: (0, 0)),
            pl.BlockSpec((f, d), lambda i: (0, 0)),
            pl.BlockSpec((1, d), lambda i: (0, 0)),
        ],
        out_specs=pl.BlockSpec((tm, d), lambda i: (i, 0)),
        compiler_params=_PARALLEL1,
    )(x2d, g.reshape(1, d), b.reshape(1, d), w1, b1.reshape(1, f),
      w2, b2.reshape(1, d))


# -----------------------------------------------------------------------------
# DecoderLayer forward (matches the PyTorch module's forward)
# -----------------------------------------------------------------------------

def decoder_layer_forward(x, memory, src_mask, tgt_mask, params, *,
                          n_heads, row_block=256):
    b, tq, d = x.shape
    tk = memory.shape[1]
    x2 = x.reshape(b * tq, d)
    m2 = memory.reshape(b * tk, d)
    src_mask = src_mask.astype(jnp.int32)
    tgt_mask = tgt_mask.astype(jnp.int32)

    # sublayer 0: x + SelfAttn(LN1(x), tgt_mask)       -- single fused kernel
    sa = params["self_attn"]
    x2 = self_attn_sublayer(x2, tgt_mask, params["ln1_g"], params["ln1_b"],
                            sa["wqkv"], sa["bqkv"], sa["wo"], sa["bo"],
                            n_heads=n_heads, seq=tq)

    # sublayer 1: x + SrcAttn(LN2(x), memory, src_mask) -- single fused kernel
    ca = params["src_attn"]
    x2 = cross_attn_sublayer(x2, m2, src_mask, params["ln2_g"], params["ln2_b"],
                             ca["wq"], ca["bq"], ca["wkv"], ca["bkv"],
                             ca["wo"], ca["bo"],
                             n_heads=n_heads, q_seq=tq, kv_seq=tk)

    # sublayer 2: x + FFN(LN3(x))                       -- row-tiled fused kernel
    ff = params["ff"]
    x2 = ln_ffn(x2, params["ln3_g"], params["ln3_b"], ff["w1"], ff["b1"],
                ff["w2"], ff["b2"], row_block=row_block)
    return x2.reshape(b, tq, d)


# -----------------------------------------------------------------------------
# Parameters
# -----------------------------------------------------------------------------

def init_decoder_layer_params(key, d_model, d_ff):
    kit = iter(jax.random.split(key, 32))

    def lin(din, dout):
        w = (jax.random.normal(next(kit), (din, dout), jnp.float32)
             / math.sqrt(din)).astype(jnp.bfloat16)
        bvec = 0.02 * jax.random.normal(next(kit), (dout,), jnp.float32)
        return w, bvec

    wq, bq = lin(d_model, d_model)
    wk, bk = lin(d_model, d_model)
    wv, bv = lin(d_model, d_model)
    wos, bos = lin(d_model, d_model)
    self_attn = dict(wqkv=jnp.concatenate([wq, wk, wv], axis=1),
                     bqkv=jnp.concatenate([bq, bk, bv], axis=0),
                     wo=wos, bo=bos)

    wq2, bq2 = lin(d_model, d_model)
    wk2, bk2 = lin(d_model, d_model)
    wv2, bv2 = lin(d_model, d_model)
    woc, boc = lin(d_model, d_model)
    src_attn = dict(wq=wq2, bq=bq2,
                    wkv=jnp.concatenate([wk2, wv2], axis=1),
                    bkv=jnp.concatenate([bk2, bv2], axis=0),
                    wo=woc, bo=boc)

    w1, b1 = lin(d_model, d_ff)
    w2, b2 = lin(d_ff, d_model)

    def ln_pair():
        g = 1.0 + 0.1 * jax.random.normal(next(kit), (d_model,), jnp.float32)
        bvec = 0.1 * jax.random.normal(next(kit), (d_model,), jnp.float32)
        return g, bvec

    ln1_g, ln1_b = ln_pair()
    ln2_g, ln2_b = ln_pair()
    ln3_g, ln3_b = ln_pair()

    return dict(self_attn=self_attn, src_attn=src_attn,
                ff=dict(w1=w1, b1=b1, w2=w2, b2=b2),
                ln1_g=ln1_g, ln1_b=ln1_b, ln2_g=ln2_g, ln2_b=ln2_b,
                ln3_g=ln3_g, ln3_b=ln3_b)


# -----------------------------------------------------------------------------
# Pure-JAX reference (bf16 matmuls, f32 everywhere else) for correctness check
# -----------------------------------------------------------------------------

def reference_decoder_layer(x, memory, src_mask, tgt_mask, params, *, n_heads):
    d = x.shape[-1]

    def ln(v, g, bvec):
        mean = v.mean(-1, keepdims=True)
        vc = v - mean
        var = (vc * vc).sum(-1, keepdims=True) / (d - 1)
        return g * vc / jnp.sqrt(var + _EPS) + bvec

    def dense_ref(v, w, bvec):
        return jnp.dot(v.astype(jnp.bfloat16), w,
                       preferred_element_type=jnp.float32) + bvec

    def attn_ref(q, k, v, mask):
        bsz, tq, _ = q.shape
        tk = k.shape[1]
        dk = d // n_heads
        qh = q.reshape(bsz, tq, n_heads, dk).transpose(0, 2, 1, 3).astype(jnp.bfloat16)
        kh = k.reshape(bsz, tk, n_heads, dk).transpose(0, 2, 1, 3).astype(jnp.bfloat16)
        vh = v.reshape(bsz, tk, n_heads, dk).transpose(0, 2, 1, 3).astype(jnp.bfloat16)
        s = jnp.einsum("bhqd,bhkd->bhqk", qh, kh,
                       preferred_element_type=jnp.float32) / math.sqrt(dk)
        s = jnp.where(mask[:, None, :, :] == 0, -1e9, s)
        p = jax.nn.softmax(s, axis=-1).astype(jnp.bfloat16)
        o = jnp.einsum("bhqk,bhkd->bhqd", p, vh,
                       preferred_element_type=jnp.float32)
        return o.transpose(0, 2, 1, 3).reshape(bsz, tq, d)

    sa = params["self_attn"]
    y = ln(x, params["ln1_g"], params["ln1_b"])
    qkv = dense_ref(y, sa["wqkv"], sa["bqkv"])
    a = attn_ref(qkv[..., :d], qkv[..., d:2 * d], qkv[..., 2 * d:], tgt_mask)
    x = x + dense_ref(a, sa["wo"], sa["bo"])

    ca = params["src_attn"]
    y = ln(x, params["ln2_g"], params["ln2_b"])
    q = dense_ref(y, ca["wq"], ca["bq"])
    kv = dense_ref(memory, ca["wkv"], ca["bkv"])
    a = attn_ref(q, kv[..., :d], kv[..., d:], src_mask)
    x = x + dense_ref(a, ca["wo"], ca["bo"])

    ff = params["ff"]
    y = ln(x, params["ln3_g"], params["ln3_b"])
    h = jnp.maximum(dense_ref(y, ff["w1"], ff["b1"]), 0.0)
    return x + dense_ref(h, ff["w2"], ff["b2"])


# -----------------------------------------------------------------------------
# Driver
# -----------------------------------------------------------------------------

if __name__ == "__main__":
    batch, tq, tk = 2, 16, 16
    d_model, d_ff, n_heads = 128, 256, 4

    key = jax.random.PRNGKey(0)
    kp, kx, km = jax.random.split(key, 3)

    params = init_decoder_layer_params(kp, d_model, d_ff)
    x = jax.random.normal(kx, (batch, tq, d_model), jnp.float32)
    memory = jax.random.normal(km, (batch, tk, d_model), jnp.float32)

    # src_mask: key-padding only, (B, 1, Tk); tgt_mask: padding & causal, (B, Tq, Tq)
    src_lens = jnp.array([tk, tk - 3])
    src_mask = (jnp.arange(tk)[None, :] < src_lens[:, None]).astype(jnp.int32)[:, None, :]
    tgt_lens = jnp.array([tq, tq - 2])
    pad = (jnp.arange(tq)[None, :] < tgt_lens[:, None]).astype(jnp.int32)
    causal = jnp.tril(jnp.ones((tq, tq), jnp.int32))
    tgt_mask = (pad[:, None, :] * causal[None]).astype(jnp.int32)

    fwd = jax.jit(functools.partial(decoder_layer_forward, n_heads=n_heads,
                                    row_block=16))
    out = jax.block_until_ready(fwd(x, memory, src_mask, tgt_mask, params))

    assert out.shape == (batch, tq, d_model), out.shape
    assert bool(jnp.all(jnp.isfinite(out)))

    ref = reference_decoder_layer(x, memory, src_mask, tgt_mask, params,
                                  n_heads=n_heads)
    assert bool(jnp.allclose(out, ref, atol=5e-2, rtol=5e-2)), \
        float(jnp.max(jnp.abs(out - ref)))

    print("KERNEL_OK")
</pallas_src>

<mosaic_0001>
module attributes {stable_mosaic.version = 11 : i64} {
  func.func @_ln_ffn_kernel(%arg0: i32, %arg1: memref<16x128xf32, #tpu.memory_space<vmem>>, %arg2: memref<1x128xf32, #tpu.memory_space<vmem>>, %arg3: memref<1x128xf32, #tpu.memory_space<vmem>>, %arg4: memref<128x256xbf16, #tpu.memory_space<vmem>>, %arg5: memref<1x256xf32, #tpu.memory_space<vmem>>, %arg6: memref<256x128xbf16, #tpu.memory_space<vmem>>, %arg7: memref<1x128xf32, #tpu.memory_space<vmem>>, %arg8: memref<16x128xf32, #tpu.memory_space<vmem>>) attributes {dimension_semantics = [#tpu.dimension_semantics<parallel>], iteration_bounds = array<i64: 2>, scalar_prefetch = 0 : i64, scratch_operands = 0 : i64, tpu.core_type = #tpu.core_type<tc>, window_params = [{transform_indices = @transform_0, window_bounds = array<i64: 16, 128>}, {pipeline_mode = #tpu.pipeline_mode<synchronous>, transform_indices = @transform_1, window_bounds = array<i64: 1, 128>}, {pipeline_mode = #tpu.pipeline_mode<synchronous>, transform_indices = @transform_2, window_bounds = array<i64: 1, 128>}, {pipeline_mode = #tpu.pipeline_mode<synchronous>, transform_indices = @transform_3, window_bounds = array<i64: 128, 256>}, {pipeline_mode = #tpu.pipeline_mode<synchronous>, transform_indices = @transform_4, window_bounds = array<i64: 1, 256>}, {pipeline_mode = #tpu.pipeline_mode<synchronous>, transform_indices = @transform_5, window_bounds = array<i64: 256, 128>}, {pipeline_mode = #tpu.pipeline_mode<synchronous>, transform_indices = @transform_6, window_bounds = array<i64: 1, 128>}, {transform_indices = @transform_7, window_bounds = array<i64: 16, 128>}]} {
    %c0 = arith.constant 0 : index
    %c0_0 = arith.constant 0 : index
    %0 = vector.load %arg1[%c0, %c0_0] : memref<16x128xf32, #tpu.memory_space<vmem>>, vector<16x128xf32>
    %c0_1 = arith.constant 0 : index
    %c0_2 = arith.constant 0 : index
    %1 = vector.load %arg2[%c0_1, %c0_2] : memref<1x128xf32, #tpu.memory_space<vmem>>, vector<1x128xf32>
    %c0_3 = arith.constant 0 : index
    %c0_4 = arith.constant 0 : index
    %2 = vector.load %arg3[%c0_3, %c0_4] : memref<1x128xf32, #tpu.memory_space<vmem>>, vector<1x128xf32>
    %cst = arith.constant dense<0.000000e+00> : vector<16xf32>
    %3 = vector.multi_reduction <add>, %0, %cst [1] : vector<16x128xf32> to vector<16xf32>
    %4 = vector.shape_cast %3 : vector<16xf32> to vector<16x1xf32>
    %cst_5 = arith.constant 1.280000e+02 : f32
    %5 = vector.broadcast %cst_5 : f32 to vector<16x1xf32>
    %6 = arith.divf %4, %5 : vector<16x1xf32>
    %7 = vector.broadcast %6 : vector<16x1xf32> to vector<16x128xf32>
    %8 = arith.subf %0, %7 : vector<16x128xf32>
    %9 = arith.mulf %8, %8 : vector<16x128xf32>
    %cst_6 = arith.constant dense<0.000000e+00> : vector<16xf32>
    %10 = vector.multi_reduction <add>, %9, %cst_6 [1] : vector<16x128xf32> to vector<16xf32>
    %11 = vector.shape_cast %10 : vector<16xf32> to vector<16x1xf32>
    %cst_7 = arith.constant 0.00787401571 : f32
    %12 = vector.broadcast %cst_7 : f32 to vector<16x1xf32>
    %13 = arith.mulf %11, %12 : vector<16x1xf32>
    %14 = vector.broadcast %1 : vector<1x128xf32> to vector<16x128xf32>
    %15 = arith.mulf %14, %8 : vector<16x128xf32>
    %cst_8 = arith.constant 9.99999997E-7 : f32
    %16 = vector.broadcast %cst_8 : f32 to vector<16x1xf32>
    %17 = arith.addf %13, %16 : vector<16x1xf32>
    %18 = math.rsqrt %17 : vector<16x1xf32>
    %19 = vector.broadcast %18 : vector<16x1xf32> to vector<16x128xf32>
    %20 = arith.mulf %15, %19 : vector<16x128xf32>
    %21 = vector.broadcast %2 : vector<1x128xf32> to vector<16x128xf32>
    %22 = arith.addf %20, %21 : vector<16x128xf32>
    %23 = arith.truncf %22 : vector<16x128xf32> to vector<16x128xbf16>
    %c0_9 = arith.constant 0 : index
    %c0_10 = arith.constant 0 : index
    %24 = vector.load %arg4[%c0_9, %c0_10] : memref<128x256xbf16, #tpu.memory_space<vmem>>, vector<128x256xbf16>
    %cst_11 = arith.constant dense<0.000000e+00> : vector<16x256xf32>
    %25 = tpu.matmul %23, %24, %cst_11 {dimension_numbers = #tpu.dot_dimension_numbers<[1], [0], [0], [1], [0, 0, 1, 1], [], []>} : vector<16x128xbf16>, vector<128x256xbf16>, vector<16x256xf32> -> vector<16x256xf32>
    %c0_12 = arith.constant 0 : index
    %c0_13 = arith.constant 0 : index
    %26 = vector.load %arg5[%c0_12, %c0_13] : memref<1x256xf32, #tpu.memory_space<vmem>>, vector<1x256xf32>
    %27 = vector.broadcast %26 : vector<1x256xf32> to vector<16x256xf32>
    %28 = arith.addf %25, %27 : vector<16x256xf32>
    %cst_14 = arith.constant 0.000000e+00 : f32
    %29 = vector.broadcast %cst_14 : f32 to vector<16x256xf32>
    %30 = arith.maximumf %28, %29 : vector<16x256xf32>
    %31 = arith.truncf %30 : vector<16x256xf32> to vector<16x256xbf16>
    %c0_15 = arith.constant 0 : index
    %c0_16 = arith.constant 0 : index
    %32 = vector.load %arg6[%c0_15, %c0_16] : memref<256x128xbf16, #tpu.memory_space<vmem>>, vector<256x128xbf16>
    %cst_17 = arith.constant dense<0.000000e+00> : vector<16x128xf32>
    %33 = tpu.matmul %31, %32, %cst_17 {dimension_numbers = #tpu.dot_dimension_numbers<[1], [0], [0], [1], [0, 0, 1, 1], [], []>} : vector<16x256xbf16>, vector<256x128xbf16>, vector<16x128xf32> -> vector<16x128xf32>
    %c0_18 = arith.constant 0 : index
    %c0_19 = arith.constant 0 : index
    %34 = vector.load %arg7[%c0_18, %c0_19] : memref<1x128xf32, #tpu.memory_space<vmem>>, vector<1x128xf32>
    %35 = vector.broadcast %34 : vector<1x128xf32> to vector<16x128xf32>
    %36 = arith.addf %33, %35 : vector<16x128xf32>
    %37 = arith.addf %0, %36 : vector<16x128xf32>
    %c0_20 = arith.constant 0 : index
    %c0_21 = arith.constant 0 : index
    %38 = vector.load %arg8[%c0_20, %c0_21] : memref<16x128xf32, #tpu.memory_space<vmem>>, vector<16x128xf32>
    tpu.vector_store %arg8[%c0_20, %c0_21], %37 {strides = array<i32>} : memref<16x128xf32, #tpu.memory_space<vmem>>, vector<16x128xf32>,
    return
  }
  func.func @transform_0(%arg0: i32) -> (i32, i32) {
    %c0_i32 = arith.constant 0 : i32
    %c0_i32_0 = arith.constant 0 : i32
    return %arg0, %c0_i32 : i32, i32
  }
  func.func @transform_1(%arg0: i32) -> (i32, i32) {
    %c0_i32 = arith.constant 0 : i32
    %c0_i32_0 = arith.constant 0 : i32
    %c0_i32_1 = arith.constant 0 : i32
    return %c0_i32, %c0_i32_0 : i32, i32
  }
  func.func @transform_2(%arg0: i32) -> (i32, i32) {
    %c0_i32 = arith.constant 0 : i32
    %c0_i32_0 = arith.constant 0 : i32
    %c0_i32_1 = arith.constant 0 : i32
    return %c0_i32, %c0_i32_0 : i32, i32
  }
  func.func @transform_3(%arg0: i32) -> (i32, i32) {
    %c0_i32 = arith.constant 0 : i32
    %c0_i32_0 = arith.constant 0 : i32
    %c0_i32_1 = arith.constant 0 : i32
    return %c0_i32, %c0_i32_0 : i32, i32
  }
  func.func @transform_4(%arg0: i32) -> (i32, i32) {
    %c0_i32 = arith.constant 0 : i32
    %c0_i32_0 = arith.constant 0 : i32
    %c0_i32_1 = arith.constant 0 : i32
    return %c0_i32, %c0_i32_0 : i32, i32
  }
  func.func @transform_5(%arg0: i32) -> (i32, i32) {
    %c0_i32 = arith.constant 0 : i32
    %c0_i32_0 = arith.constant 0 : i32
    %c0_i32_1 = arith.constant 0 : i32
    return %c0_i32, %c0_i32_0 : i32, i32
  }
  func.func @transform_6(%arg0: i32) -> (i32, i32) {
    %c0_i32 = arith.constant 0 : i32
    %c0_i32_0 = arith.constant 0 : i32
    %c0_i32_1 = arith.constant 0 : i32
    return %c0_i32, %c0_i32_0 : i32, i32
  }
  func.func @transform_7(%arg0: i32) -> (i32, i32) {
    %c0_i32 = arith.constant 0 : i32
    %c0_i32_0 = arith.constant 0 : i32
    return %arg0, %c0_i32 : i32, i32
  }
}

module attributes {stable_mosaic.version = 11 : i64} {
  func.func @_self_attn_sublayer_kernel(%arg0: i32, %arg1: memref<16x128xf32, #tpu.memory_space<vmem>>, %arg2: memref<1x16x16xi32, #tpu.memory_space<vmem>>, %arg3: memref<1x128xf32, #tpu.memory_space<vmem>>, %arg4: memref<1x128xf32, #tpu.memory_space<vmem>>, %arg5: memref<128x384xbf16, #tpu.memory_space<vmem>>, %arg6: memref<1x384xf32, #tpu.memory_space<vmem>>, %arg7: memref<128x128xbf16, #tpu.memory_space<vmem>>, %arg8: memref<1x128xf32, #tpu.memory_space<vmem>>, %arg9: memref<16x128xf32, #tpu.memory_space<vmem>>) attributes {dimension_semantics = [#tpu.dimension_semantics<parallel>], iteration_bounds = array<i64: 2>, scalar_prefetch = 0 : i64, scratch_operands = 0 : i64, tpu.core_type = #tpu.core_type<tc>, window_params = [{transform_indices = @transform_0, window_bounds = array<i64: 16, 128>}, {transform_indices = @transform_1, window_bounds = array<i64: 1, 16, 16>}, {pipeline_mode = #tpu.pipeline_mode<synchronous>, transform_indices = @transform_2, window_bounds = array<i64: 1, 128>}, {pipeline_mode = #tpu.pipeline_mode<synchronous>, transform_indices = @transform_3, window_bounds = array<i64: 1, 128>}, {pipeline_mode = #tpu.pipeline_mode<synchronous>, transform_indices = @transform_4, window_bounds = array<i64: 128, 384>}, {pipeline_mode = #tpu.pipeline_mode<synchronous>, transform_indices = @transform_5, window_bounds = array<i64: 1, 384>}, {pipeline_mode = #tpu.pipeline_mode<synchronous>, transform_indices = @transform_6, window_bounds = array<i64: 128, 128>}, {pipeline_mode = #tpu.pipeline_mode<synchronous>, transform_indices = @transform_7, window_bounds = array<i64: 1, 128>}, {transform_indices = @transform_8, window_bounds = array<i64: 16, 128>}]} {
    %c0 = arith.constant 0 : index
    %c0_0 = arith.constant 0 : index
    %0 = vector.load %arg1[%c0, %c0_0] : memref<16x128xf32, #tpu.memory_space<vmem>>, vector<16x128xf32>
    %c0_1 = arith.constant 0 : index
    %c0_2 = arith.constant 0 : index
    %1 = vector.load %arg3[%c0_1, %c0_2] : memref<1x128xf32, #tpu.memory_space<vmem>>, vector<1x128xf32>
    %c0_3 = arith.constant 0 : index
    %c0_4 = arith.constant 0 : index
    %2 = vector.load %arg4[%c0_3, %c0_4] : memref<1x128xf32, #tpu.memory_space<vmem>>, vector<1x128xf32>
    %cst = arith.constant dense<0.000000e+00> : vector<16xf32>
    %3 = vector.multi_reduction <add>, %0, %cst [1] : vector<16x128xf32> to vector<16xf32>
    %4 = vector.shape_cast %3 : vector<16xf32> to vector<16x1xf32>
    %cst_5 = arith.constant 1.280000e+02 : f32
    %5 = vector.broadcast %cst_5 : f32 to vector<16x1xf32>
    %6 = arith.divf %4, %5 : vector<16x1xf32>
    %7 = vector.broadcast %6 : vector<16x1xf32> to vector<16x128xf32>
    %8 = arith.subf %0, %7 : vector<16x128xf32>
    %9 = arith.mulf %8, %8 : vector<16x128xf32>
    %cst_6 = arith.constant dense<0.000000e+00> : vector<16xf32>
    %10 = vector.multi_reduction <add>, %9, %cst_6 [1] : vector<16x128xf32> to vector<16xf32>
    %11 = vector.shape_cast %10 : vector<16xf32> to vector<16x1xf32>
    %cst_7 = arith.constant 0.00787401571 : f32
    %12 = vector.broadcast %cst_7 : f32 to vector<16x1xf32>
    %13 = arith.mulf %11, %12 : vector<16x1xf32>
    %14 = vector.broadcast %1 : vector<1x128xf32> to vector<16x128xf32>
    %15 = arith.mulf %14, %8 : vector<16x128xf32>
    %cst_8 = arith.constant 9.99999997E-7 : f32
    %16 = vector.broadcast %cst_8 : f32 to vector<16x1xf32>
    %17 = arith.addf %13, %16 : vector<16x1xf32>
    %18 = math.rsqrt %17 : vector<16x1xf32>
    %19 = vector.broadcast %18 : vector<16x1xf32> to vector<16x128xf32>
    %20 = arith.mulf %15, %19 : vector<16x128xf32>
    %21 = vector.broadcast %2 : vector<1x128xf32> to vector<16x128xf32>
    %22 = arith.addf %20, %21 : vector<16x128xf32>
    %23 = arith.truncf %22 : vector<16x128xf32> to vector<16x128xbf16>
    %c0_9 = arith.constant 0 : index
    %c0_10 = arith.constant 0 : index
    %24 = vector.load %arg5[%c0_9, %c0_10] : memref<128x384xbf16, #tpu.memory_space<vmem>>, vector<128x384xbf16>
    %cst_11 = arith.constant dense<0.000000e+00> : vector<16x384xf32>
    %25 = tpu.matmul %23, %24, %cst_11 {dimension_numbers = #tpu.dot_dimension_numbers<[1], [0], [0], [1], [0, 0, 1, 1], [], []>} : vector<16x128xbf16>, vector<128x384xbf16>, vector<16x384xf32> -> vector<16x384xf32>
    %c0_12 = arith.constant 0 : index
    %c0_13 = arith.constant 0 : index
    %26 = vector.load %arg6[%c0_12, %c0_13] : memref<1x384xf32, #tpu.memory_space<vmem>>, vector<1x384xf32>
    %27 = vector.broadcast %26 : vector<1x384xf32> to vector<16x384xf32>
    %28 = arith.addf %25, %27 : vector<16x384xf32>
    %29 = vector.extract_strided_slice %28 {offsets = [0, 0], sizes = [16, 128], strides = [1, 1]} : vector<16x384xf32> to vector<16x128xf32>
    %30 = vector.extract_strided_slice %28 {offsets = [0, 128], sizes = [16, 128], strides = [1, 1]} : vector<16x384xf32> to vector<16x128xf32>
    %31 = vector.extract_strided_slice %28 {offsets = [0, 256], sizes = [16, 128], strides = [1, 1]} : vector<16x384xf32> to vector<16x128xf32>
    %c0_14 = arith.constant 0 : index
    %c0_15 = arith.constant 0 : index
    %c0_16 = arith.constant 0 : index
    %32 = vector.load %arg2[%c0_14, %c0_15, %c0_16] : memref<1x16x16xi32, #tpu.memory_space<vmem>>, vector<1x16x16xi32>
    %33 = vector.shape_cast %32 : vector<1x16x16xi32> to vector<16x16xi32>
    %c0_i32 = arith.constant 0 : i32
    %34 = vector.broadcast %c0_i32 : i32 to vector<16x16xi32>
    %35 = arith.cmpi eq, %33, %34 : vector<16x16xi32>
    %36 = vector.extract_strided_slice %29 {offsets = [0, 0], sizes = [16, 32], strides = [1, 1]} : vector<16x128xf32> to vector<16x32xf32>
    %37 = arith.truncf %36 : vector<16x32xf32> to vector<16x32xbf16>
    %38 = vector.extract_strided_slice %30 {offsets = [0, 0], sizes = [16, 32], strides = [1, 1]} : vector<16x128xf32> to vector<16x32xf32>
    %39 = arith.truncf %38 : vector<16x32xf32> to vector<16x32xbf16>
    %40 = vector.extract_strided_slice %31 {offsets = [0, 0], sizes = [16, 32], strides = [1, 1]} : vector<16x128xf32> to vector<16x32xf32>
    %41 = arith.truncf %40 : vector<16x32xf32> to vector<16x32xbf16>
    %cst_17 = arith.constant dense<0.000000e+00> : vector<16x16xf32>
    %42 = tpu.matmul %37, %39, %cst_17 {dimension_numbers = #tpu.dot_dimension_numbers<[1], [1], [0], [0], [0, 0, 1, 0], [], []>} : vector<16x32xbf16>, vector<16x32xbf16>, vector<16x16xf32> -> vector<16x16xf32>
    %cst_18 = arith.constant 0.176776692 : f32
    %43 = vector.broadcast %cst_18 : f32 to vector<16x16xf32>
    %44 = arith.mulf %42, %43 : vector<16x16xf32>
    %cst_19 = arith.constant -1.000000e+09 : f32
    %45 = vector.broadcast %cst_19 : f32 to vector<16x16xf32>
    %46 = arith.select %35, %45, %44 : vector<16x16xi1>, vector<16x16xf32>
    %cst_20 = arith.constant dense<0xFF800000> : vector<16xf32>
    %47 = vector.multi_reduction <maximumf>, %46, %cst_20 [1] : vector<16x16xf32> to vector<16xf32>
    %48 = vector.shape_cast %47 : vector<16xf32> to vector<16x1xf32>
    %49 = vector.broadcast %48 : vector<16x1xf32> to vector<16x16xf32>
    %50 = arith.subf %46, %49 : vector<16x16xf32>
    %51 = math.exp %50 : vector<16x16xf32>
    %cst_21 = arith.constant dense<0.000000e+00> : vector<16xf32>
    %52 = vector.multi_reduction <add>, %51, %cst_21 [1] : vector<16x16xf32> to vector<16xf32>
    %53 = vector.shape_cast %52 : vector<16xf32> to vector<16x1xf32>
    %54 = tpu.reciprocal %53 {approx = true} : vector<16x1xf32> -> vector<16x1xf32>
    %55 = vector.broadcast %54 : vector<16x1xf32> to vector<16x16xf32>
    %56 = arith.mulf %51, %55 : vector<16x16xf32>
    %57 = arith.truncf %56 : vector<16x16xf32> to vector<16x16xbf16>
    %cst_22 = arith.constant dense<0.000000e+00> : vector<16x32xf32>
    %58 = tpu.matmul %57, %41, %cst_22 {dimension_numbers = #tpu.dot_dimension_numbers<[1], [0], [0], [1], [0, 0, 1, 1], [], []>} : vector<16x16xbf16>, vector<16x32xbf16>, vector<16x32xf32> -> vector<16x32xf32>
    %59 = vector.extract_strided_slice %29 {offsets = [0, 32], sizes = [16, 32], strides = [1, 1]} : vector<16x128xf32> to vector<16x32xf32>
    %60 = arith.truncf %59 : vector<16x32xf32> to vector<16x32xbf16>
    %61 = vector.extract_strided_slice %30 {offsets = [0, 32], sizes = [16, 32], strides = [1, 1]} : vector<16x128xf32> to vector<16x32xf32>
    %62 = arith.truncf %61 : vector<16x32xf32> to vector<16x32xbf16>
    %63 = vector.extract_strided_slice %31 {offsets = [0, 32], sizes = [16, 32], strides = [1, 1]} : vector<16x128xf32> to vector<16x32xf32>
    %64 = arith.truncf %63 : vector<16x32xf32> to vector<16x32xbf16>
    %cst_23 = arith.constant dense<0.000000e+00> : vector<16x16xf32>
    %65 = tpu.matmul %60, %62, %cst_23 {dimension_numbers = #tpu.dot_dimension_numbers<[1], [1], [0], [0], [0, 0, 1, 0], [], []>} : vector<16x32xbf16>, vector<16x32xbf16>, vector<16x16xf32> -> vector<16x16xf32>
    %cst_24 = arith.constant 0.176776692 : f32
    %66 = vector.broadcast %cst_24 : f32 to vector<16x16xf32>
    %67 = arith.mulf %65, %66 : vector<16x16xf32>
    %cst_25 = arith.constant -1.000000e+09 : f32
    %68 = vector.broadcast %cst_25 : f32 to vector<16x16xf32>
    %69 = arith.select %35, %68, %67 : vector<16x16xi1>, vector<16x16xf32>
    %cst_26 = arith.constant dense<0xFF800000> : vector<16xf32>
    %70 = vector.multi_reduction <maximumf>, %69, %cst_26 [1] : vector<16x16xf32> to vector<16xf32>
    %71 = vector.shape_cast %70 : vector<16xf32> to vector<16x1xf32>
    %72 = vector.broadcast %71 : vector<16x1xf32> to vector<16x16xf32>
    %73 = arith.subf %69, %72 : vector<16x16xf32>
    %74 = math.exp %73 : vector<16x16xf32>
    %cst_27 = arith.constant dense<0.000000e+00> : vector<16xf32>
    %75 = vector.multi_reduction <add>, %74, %cst_27 [1] : vector<16x16xf32> to vector<16xf32>
    %76 = vector.shape_cast %75 : vector<16xf32> to vector<16x1xf32>
    %77 = tpu.reciprocal %76 {approx = true} : vector<16x1xf32> -> vector<16x1xf32>
    %78 = vector.broadcast %77 : vector<16x1xf32> to vector<16x16xf32>
    %79 = arith.mulf %74, %78 : vector<16x16xf32>
    %80 = arith.truncf %79 : vector<16x16xf32> to vector<16x16xbf16>
    %cst_28 = arith.constant dense<0.000000e+00> : vector<16x32xf32>
    %81 = tpu.matmul %80, %64, %cst_28 {dimension_numbers = #tpu.dot_dimension_numbers<[1], [0], [0], [1], [0, 0, 1, 1], [], []>} : vector<16x16xbf16>, vector<16x32xbf16>, vector<16x32xf32> -> vector<16x32xf32>
    %82 = vector.extract_strided_slice %29 {offsets = [0, 64], sizes = [16, 32], strides = [1, 1]} : vector<16x128xf32> to vector<16x32xf32>
    %83 = arith.truncf %82 : vector<16x32xf32> to vector<16x32xbf16>
    %84 = vector.extract_strided_slice %30 {offsets = [0, 64], sizes = [16, 32], strides = [1, 1]} : vector<16x128xf32> to vector<16x32xf32>
    %85 = arith.truncf %84 : vector<16x32xf32> to vector<16x32xbf16>
    %86 = vector.extract_strided_slice %31 {offsets = [0, 64], sizes = [16, 32], strides = [1, 1]} : vector<16x128xf32> to vector<16x32xf32>
    %87 = arith.truncf %86 : vector<16x32xf32> to vector<16x32xbf16>
    %cst_29 = arith.constant dense<0.000000e+00> : vector<16x16xf32>
    %88 = tpu.matmul %83, %85, %cst_29 {dimension_numbers = #tpu.dot_dimension_numbers<[1], [1], [0], [0], [0, 0, 1, 0], [], []>} : vector<16x32xbf16>, vector<16x32xbf16>, vector<16x16xf32> -> vector<16x16xf32>
    %cst_30 = arith.constant 0.176776692 : f32
    %89 = vector.broadcast %cst_30 : f32 to vector<16x16xf32>
    %90 = arith.mulf %88, %89 : vector<16x16xf32>
    %cst_31 = arith.constant -1.000000e+09 : f32
    %91 = vector.broadcast %cst_31 : f32 to vector<16x16xf32>
    %92 = arith.select %35, %91, %90 : vector<16x16xi1>, vector<16x16xf32>
    %cst_32 = arith.constant dense<0xFF800000> : vector<16xf32>
    %93 = vector.multi_reduction <maximumf>, %92, %cst_32 [1] : vector<16x16xf32> to vector<16xf32>
    %94 = vector.shape_cast %93 : vector<16xf32> to vector<16x1xf32>
    %95 = vector.broadcast %94 : vector<16x1xf32> to vector<16x16xf32>
    %96 = arith.subf %92, %95 : vector<16x16xf32>
    %97 = math.exp %96 : vector<16x16xf32>
    %cst_33 = arith.constant dense<0.000000e+00> : vector<16xf32>
    %98 = vector.multi_reduction <add>, %97, %cst_33 [1] : vector<16x16xf32> to vector<16xf32>
    %99 = vector.shape_cast %98 : vector<16xf32> to vector<16x1xf32>
    %100 = tpu.reciprocal %99 {approx = true} : vector<16x1xf32> -> vector<16x1xf32>
    %101 = vector.broadcast %100 : vector<16x1xf32> to vector<16x16xf32>
    %102 = arith.mulf %97, %101 : vector<16x16xf32>
    %103 = arith.truncf %102 : vector<16x16xf32> to vector<16x16xbf16>
    %cst_34 = arith.constant dense<0.000000e+00> : vector<16x32xf32>
    %104 = tpu.matmul %103, %87, %cst_34 {dimension_numbers = #tpu.dot_dimension_numbers<[1], [0], [0], [1], [0, 0, 1, 1], [], []>} : vector<16x16xbf16>, vector<16x32xbf16>, vector<16x32xf32> -> vector<16x32xf32>
    %105 = vector.extract_strided_slice %29 {offsets = [0, 96], sizes = [16, 32], strides = [1, 1]} : vector<16x128xf32> to vector<16x32xf32>
    %106 = arith.truncf %105 : vector<16x32xf32> to vector<16x32xbf16>
    %107 = vector.extract_strided_slice %30 {offsets = [0, 96], sizes = [16, 32], strides = [1, 1]} : vector<16x128xf32> to vector<16x32xf32>
    %108 = arith.truncf %107 : vector<16x32xf32> to vector<16x32xbf16>
    %109 = vector.extract_strided_slice %31 {offsets = [0, 96], sizes = [16, 32], strides = [1, 1]} : vector<16x128xf32> to vector<16x32xf32>
    %110 = arith.truncf %109 : vector<16x32xf32> to vector<16x32xbf16>
    %cst_35 = arith.constant dense<0.000000e+00> : vector<16x16xf32>
    %111 = tpu.matmul %106, %108, %cst_35 {dimension_numbers = #tpu.dot_dimension_numbers<[1], [1], [0], [0], [0, 0, 1, 0], [], []>} : vector<16x32xbf16>, vector<16x32xbf16>, vector<16x16xf32> -> vector<16x16xf32>
    %cst_36 = arith.constant 0.176776692 : f32
    %112 = vector.broadcast %cst_36 : f32 to vector<16x16xf32>
    %113 = arith.mulf %111, %112 : vector<16x16xf32>
    %cst_37 = arith.constant -1.000000e+09 : f32
    %114 = vector.broadcast %cst_37 : f32 to vector<16x16xf32>
    %115 = arith.select %35, %114, %113 : vector<16x16xi1>, vector<16x16xf32>
    %cst_38 = arith.constant dense<0xFF800000> : vector<16xf32>
    %116 = vector.multi_reduction <maximumf>, %115, %cst_38 [1] : vector<16x16xf32> to vector<16xf32>
    %117 = vector.shape_cast %116 : vector<16xf32> to vector<16x1xf32>
    %118 = vector.broadcast %117 : vector<16x1xf32> to vector<16x16xf32>
    %119 = arith.subf %115, %118 : vector<16x16xf32>
    %120 = math.exp %119 : vector<16x16xf32>
    %cst_39 = arith.constant dense<0.000000e+00> : vector<16xf32>
    %121 = vector.multi_reduction <add>, %120, %cst_39 [1] : vector<16x16xf32> to vector<16xf32>
    %122 = vector.shape_cast %121 : vector<16xf32> to vector<16x1xf32>
    %123 = tpu.reciprocal %122 {approx = true} : vector<16x1xf32> -> vector<16x1xf32>
    %124 = vector.broadcast %123 : vector<16x1xf32> to vector<16x16xf32>
    %125 = arith.mulf %120, %124 : vector<16x16xf32>
    %126 = arith.truncf %125 : vector<16x16xf32> to vector<16x16xbf16>
    %cst_40 = arith.constant dense<0.000000e+00> : vector<16x32xf32>
    %127 = tpu.matmul %126, %110, %cst_40 {dimension_numbers = #tpu.dot_dimension_numbers<[1], [0], [0], [1], [0, 0, 1, 1], [], []>} : vector<16x16xbf16>, vector<16x32xbf16>, vector<16x32xf32> -> vector<16x32xf32>
    %128 = tpu.concatenate %58, %81, %104, %127 in 1 : vector<16x32xf32>, vector<16x32xf32>, vector<16x32xf32>, vector<16x32xf32> -> vector<16x128xf32>
    %129 = arith.truncf %128 : vector<16x128xf32> to vector<16x128xbf16>
    %c0_41 = arith.constant 0 : index
    %c0_42 = arith.constant 0 : index
    %130 = vector.load %arg7[%c0_41, %c0_42] : memref<128x128xbf16, #tpu.memory_space<vmem>>, vector<128x128xbf16>
    %cst_43 = arith.constant dense<0.000000e+00> : vector<16x128xf32>
    %131 = tpu.matmul %129, %130, %cst_43 {dimension_numbers = #tpu.dot_dimension_numbers<[1], [0], [0], [1], [0, 0, 1, 1], [], []>} : vector<16x128xbf16>, vector<128x128xbf16>, vector<16x128xf32> -> vector<16x128xf32>
    %c0_44 = arith.constant 0 : index
    %c0_45 = arith.constant 0 : index
    %132 = vector.load %arg8[%c0_44, %c0_45] : memref<1x128xf32, #tpu.memory_space<vmem>>, vector<1x128xf32>
    %133 = vector.broadcast %132 : vector<1x128xf32> to vector<16x128xf32>
    %134 = arith.addf %131, %133 : vector<16x128xf32>
    %135 = arith.addf %0, %134 : vector<16x128xf32>
    %c0_46 = arith.constant 0 : index
    %c0_47 = arith.constant 0 : index
    %136 = vector.load %arg9[%c0_46, %c0_47] : memref<16x128xf32, #tpu.memory_space<vmem>>, vector<16x128xf32>
    tpu.vector_store %arg9[%c0_46, %c0_47], %135 {strides = array<i32>} : memref<16x128xf32, #tpu.memory_space<vmem>>, vector<16x128xf32>,
    return
  }
  func.func @transform_0(%arg0: i32) -> (i32, i32) {
    %c0_i32 = arith.constant 0 : i32
    %c0_i32_0 = arith.constant 0 : i32
    return %arg0, %c0_i32 : i32, i32
  }
  func.func @transform_1(%arg0: i32) -> (i32, i32, i32) {
    %c0_i32 = arith.constant 0 : i32
    %c0_i32_0 = arith.constant 0 : i32
    %c0_i32_1 = arith.constant 0 : i32
    return %arg0, %c0_i32, %c0_i32_0 : i32, i32, i32
  }
  func.func @transform_2(%arg0: i32) -> (i32, i32) {
    %c0_i32 = arith.constant 0 : i32
    %c0_i32_0 = arith.constant 0 : i32
    %c0_i32_1 = arith.constant 0 : i32
    return %c0_i32, %c0_i32_0 : i32, i32
  }
  func.func @transform_3(%arg0: i32) -> (i32, i32) {
    %c0_i32 = arith.constant 0 : i32
    %c0_i32_0 = arith.constant 0 : i32
    %c0_i32_1 = arith.constant 0 : i32
    return %c0_i32, %c0_i32_0 : i32, i32
  }
  func.func @transform_4(%arg0: i32) -> (i32, i32) {
    %c0_i32 = arith.constant 0 : i32
    %c0_i32_0 = arith.constant 0 : i32
    %c0_i32_1 = arith.constant 0 : i32
    return %c0_i32, %c0_i32_0 : i32, i32
  }
  func.func @transform_5(%arg0: i32) -> (i32, i32) {
    %c0_i32 = arith.constant 0 : i32
    %c0_i32_0 = arith.constant 0 : i32
    %c0_i32_1 = arith.constant 0 : i32
    return %c0_i32, %c0_i32_0 : i32, i32
  }
  func.func @transform_6(%arg0: i32) -> (i32, i32) {
    %c0_i32 = arith.constant 0 : i32
    %c0_i32_0 = arith.constant 0 : i32
    %c0_i32_1 = arith.constant 0 : i32
    return %c0_i32, %c0_i32_0 : i32, i32
  }
  func.func @transform_7(%arg0: i32) -> (i32, i32) {
    %c0_i32 = arith.constant 0 : i32
    %c0_i32_0 = arith.constant 0 : i32
    %c0_i32_1 = arith.constant 0 : i32
    return %c0_i32, %c0_i32_0 : i32, i32
  }
  func.func @transform_8(%arg0: i32) -> (i32, i32) {
    %c0_i32 = arith.constant 0 : i32
    %c0_i32_0 = arith.constant 0 : i32
    return %arg0, %c0_i32 : i32, i32
  }
}

module attributes {stable_mosaic.version = 11 : i64} {
  func.func @_cross_attn_sublayer_kernel(%arg0: i32, %arg1: memref<16x128xf32, #tpu.memory_space<vmem>>, %arg2: memref<16x128xf32, #tpu.memory_space<vmem>>, %arg3: memref<1x1x16xi32, #tpu.memory_space<vmem>>, %arg4: memref<1x128xf32, #tpu.memory_space<vmem>>, %arg5: memref<1x128xf32, #tpu.memory_space<vmem>>, %arg6: memref<128x128xbf16, #tpu.memory_space<vmem>>, %arg7: memref<1x128xf32, #tpu.memory_space<vmem>>, %arg8: memref<128x256xbf16, #tpu.memory_space<vmem>>, %arg9: memref<1x256xf32, #tpu.memory_space<vmem>>, %arg10: memref<128x128xbf16, #tpu.memory_space<vmem>>, %arg11: memref<1x128xf32, #tpu.memory_space<vmem>>, %arg12: memref<16x128xf32, #tpu.memory_space<vmem>>) attributes {dimension_semantics = [#tpu.dimension_semantics<parallel>], iteration_bounds = array<i64: 2>, scalar_prefetch = 0 : i64, scratch_operands = 0 : i64, tpu.core_type = #tpu.core_type<tc>, window_params = [{transform_indices = @transform_0, window_bounds = array<i64: 16, 128>}, {transform_indices = @transform_1, window_bounds = array<i64: 16, 128>}, {transform_indices = @transform_2, window_bounds = array<i64: 1, 1, 16>}, {pipeline_mode = #tpu.pipeline_mode<synchronous>, transform_indices = @transform_3, window_bounds = array<i64: 1, 128>}, {pipeline_mode = #tpu.pipeline_mode<synchronous>, transform_indices = @transform_4, window_bounds = array<i64: 1, 128>}, {pipeline_mode = #tpu.pipeline_mode<synchronous>, transform_indices = @transform_5, window_bounds = array<i64: 128, 128>}, {pipeline_mode = #tpu.pipeline_mode<synchronous>, transform_indices = @transform_6, window_bounds = array<i64: 1, 128>}, {pipeline_mode = #tpu.pipeline_mode<synchronous>, transform_indices = @transform_7, window_bounds = array<i64: 128, 256>}, {pipeline_mode = #tpu.pipeline_mode<synchronous>, transform_indices = @transform_8, window_bounds = array<i64: 1, 256>}, {pipeline_mode = #tpu.pipeline_mode<synchronous>, transform_indices = @transform_9, window_bounds = array<i64: 128, 128>}, {pipeline_mode = #tpu.pipeline_mode<synchronous>, transform_indices = @transform_10, window_bounds = array<i64: 1, 128>}, {transform_indices = @transform_11, window_bounds = array<i64: 16, 128>}]} {
    %c0 = arith.constant 0 : index
    %c0_0 = arith.constant 0 : index
    %0 = vector.load %arg1[%c0, %c0_0] : memref<16x128xf32, #tpu.memory_space<vmem>>, vector<16x128xf32>
    %c0_1 = arith.constant 0 : index
    %c0_2 = arith.constant 0 : index
    %1 = vector.load %arg4[%c0_1, %c0_2] : memref<1x128xf32, #tpu.memory_space<vmem>>, vector<1x128xf32>
    %c0_3 = arith.constant 0 : index
    %c0_4 = arith.constant 0 : index
    %2 = vector.load %arg5[%c0_3, %c0_4] : memref<1x128xf32, #tpu.memory_space<vmem>>, vector<1x128xf32>
    %cst = arith.constant dense<0.000000e+00> : vector<16xf32>
    %3 = vector.multi_reduction <add>, %0, %cst [1] : vector<16x128xf32> to vector<16xf32>
    %4 = vector.shape_cast %3 : vector<16xf32> to vector<16x1xf32>
    %cst_5 = arith.constant 1.280000e+02 : f32
    %5 = vector.broadcast %cst_5 : f32 to vector<16x1xf32>
    %6 = arith.divf %4, %5 : vector<16x1xf32>
    %7 = vector.broadcast %6 : vector<16x1xf32> to vector<16x128xf32>
    %8 = arith.subf %0, %7 : vector<16x128xf32>
    %9 = arith.mulf %8, %8 : vector<16x128xf32>
    %cst_6 = arith.constant dense<0.000000e+00> : vector<16xf32>
    %10 = vector.multi_reduction <add>, %9, %cst_6 [1] : vector<16x128xf32> to vector<16xf32>
    %11 = vector.shape_cast %10 : vector<16xf32> to vector<16x1xf32>
    %cst_7 = arith.constant 0.00787401571 : f32
    %12 = vector.broadcast %cst_7 : f32 to vector<16x1xf32>
    %13 = arith.mulf %11, %12 : vector<16x1xf32>
    %14 = vector.broadcast %1 : vector<1x128xf32> to vector<16x128xf32>
    %15 = arith.mulf %14, %8 : vector<16x128xf32>
    %cst_8 = arith.constant 9.99999997E-7 : f32
    %16 = vector.broadcast %cst_8 : f32 to vector<16x1xf32>
    %17 = arith.addf %13, %16 : vector<16x1xf32>
    %18 = math.rsqrt %17 : vector<16x1xf32>
    %19 = vector.broadcast %18 : vector<16x1xf32> to vector<16x128xf32>
    %20 = arith.mulf %15, %19 : vector<16x128xf32>
    %21 = vector.broadcast %2 : vector<1x128xf32> to vector<16x128xf32>
    %22 = arith.addf %20, %21 : vector<16x128xf32>
    %23 = arith.truncf %22 : vector<16x128xf32> to vector<16x128xbf16>
    %c0_9 = arith.constant 0 : index
    %c0_10 = arith.constant 0 : index
    %24 = vector.load %arg6[%c0_9, %c0_10] : memref<128x128xbf16, #tpu.memory_space<vmem>>, vector<128x128xbf16>
    %cst_11 = arith.constant dense<0.000000e+00> : vector<16x128xf32>
    %25 = tpu.matmul %23, %24, %cst_11 {dimension_numbers = #tpu.dot_dimension_numbers<[1], [0], [0], [1], [0, 0, 1, 1], [], []>} : vector<16x128xbf16>, vector<128x128xbf16>, vector<16x128xf32> -> vector<16x128xf32>
    %c0_12 = arith.constant 0 : index
    %c0_13 = arith.constant 0 : index
    %26 = vector.load %arg7[%c0_12, %c0_13] : memref<1x128xf32, #tpu.memory_space<vmem>>, vector<1x128xf32>
    %27 = vector.broadcast %26 : vector<1x128xf32> to vector<16x128xf32>
    %28 = arith.addf %25, %27 : vector<16x128xf32>
    %c0_14 = arith.constant 0 : index
    %c0_15 = arith.constant 0 : index
    %29 = vector.load %arg2[%c0_14, %c0_15] : memref<16x128xf32, #tpu.memory_space<vmem>>, vector<16x128xf32>
    %30 = arith.truncf %29 : vector<16x128xf32> to vector<16x128xbf16>
    %c0_16 = arith.constant 0 : index
    %c0_17 = arith.constant 0 : index
    %31 = vector.load %arg8[%c0_16, %c0_17] : memref<128x256xbf16, #tpu.memory_space<vmem>>, vector<128x256xbf16>
    %cst_18 = arith.constant dense<0.000000e+00> : vector<16x256xf32>
    %32 = tpu.matmul %30, %31, %cst_18 {dimension_numbers = #tpu.dot_dimension_numbers<[1], [0], [0], [1], [0, 0, 1, 1], [], []>} : vector<16x128xbf16>, vector<128x256xbf16>, vector<16x256xf32> -> vector<16x256xf32>
    %c0_19 = arith.constant 0 : index
    %c0_20 = arith.constant 0 : index
    %33 = vector.load %arg9[%c0_19, %c0_20] : memref<1x256xf32, #tpu.memory_space<vmem>>, vector<1x256xf32>
    %34 = vector.broadcast %33 : vector<1x256xf32> to vector<16x256xf32>
    %35 = arith.addf %32, %34 : vector<16x256xf32>
    %36 = vector.extract_strided_slice %35 {offsets = [0, 0], sizes = [16, 128], strides = [1, 1]} : vector<16x256xf32> to vector<16x128xf32>
    %37 = vector.extract_strided_slice %35 {offsets = [0, 128], sizes = [16, 128], strides = [1, 1]} : vector<16x256xf32> to vector<16x128xf32>
    %c0_21 = arith.constant 0 : index
    %c0_22 = arith.constant 0 : index
    %c0_23 = arith.constant 0 : index
    %38 = vector.load %arg3[%c0_21, %c0_22, %c0_23] : memref<1x1x16xi32, #tpu.memory_space<vmem>>, vector<1x1x16xi32>
    %39 = vector.shape_cast %38 : vector<1x1x16xi32> to vector<1x16xi32>
    %c0_i32 = arith.constant 0 : i32
    %40 = vector.broadcast %c0_i32 : i32 to vector<1x16xi32>
    %41 = arith.cmpi eq, %39, %40 : vector<1x16xi32>
    %42 = vector.extract_strided_slice %28 {offsets = [0, 0], sizes = [16, 32], strides = [1, 1]} : vector<16x128xf32> to vector<16x32xf32>
    %43 = arith.truncf %42 : vector<16x32xf32> to vector<16x32xbf16>
    %44 = vector.extract_strided_slice %36 {offsets = [0, 0], sizes = [16, 32], strides = [1, 1]} : vector<16x128xf32> to vector<16x32xf32>
    %45 = arith.truncf %44 : vector<16x32xf32> to vector<16x32xbf16>
    %46 = vector.extract_strided_slice %37 {offsets = [0, 0], sizes = [16, 32], strides = [1, 1]} : vector<16x128xf32> to vector<16x32xf32>
    %47 = arith.truncf %46 : vector<16x32xf32> to vector<16x32xbf16>
    %cst_24 = arith.constant dense<0.000000e+00> : vector<16x16xf32>
    %48 = tpu.matmul %43, %45, %cst_24 {dimension_numbers = #tpu.dot_dimension_numbers<[1], [1], [0], [0], [0, 0, 1, 0], [], []>} : vector<16x32xbf16>, vector<16x32xbf16>, vector<16x16xf32> -> vector<16x16xf32>
    %cst_25 = arith.constant 0.176776692 : f32
    %49 = vector.broadcast %cst_25 : f32 to vector<16x16xf32>
    %50 = arith.mulf %48, %49 : vector<16x16xf32>
    %cst_26 = arith.constant -1.000000e+09 : f32
    %51 = vector.shape_cast %41 : vector<1x16xi1> to vector<1x16xi1>
    %52 = vector.broadcast %51 : vector<1x16xi1> to vector<16x16xi1>
    %53 = vector.broadcast %cst_26 : f32 to vector<16x16xf32>
    %54 = arith.select %52, %53, %50 : vector<16x16xi1>, vector<16x16xf32>
    %cst_27 = arith.constant dense<0xFF800000> : vector<16xf32>
    %55 = vector.multi_reduction <maximumf>, %54, %cst_27 [1] : vector<16x16xf32> to vector<16xf32>
    %56 = vector.shape_cast %55 : vector<16xf32> to vector<16x1xf32>
    %57 = vector.broadcast %56 : vector<16x1xf32> to vector<16x16xf32>
    %58 = arith.subf %54, %57 : vector<16x16xf32>
    %59 = math.exp %58 : vector<16x16xf32>
    %cst_28 = arith.constant dense<0.000000e+00> : vector<16xf32>
    %60 = vector.multi_reduction <add>, %59, %cst_28 [1] : vector<16x16xf32> to vector<16xf32>
    %61 = vector.shape_cast %60 : vector<16xf32> to vector<16x1xf32>
    %62 = tpu.reciprocal %61 {approx = true} : vector<16x1xf32> -> vector<16x1xf32>
    %63 = vector.broadcast %62 : vector<16x1xf32> to vector<16x16xf32>
    %64 = arith.mulf %59, %63 : vector<16x16xf32>
    %65 = arith.truncf %64 : vector<16x16xf32> to vector<16x16xbf16>
    %cst_29 = arith.constant dense<0.000000e+00> : vector<16x32xf32>
    %66 = tpu.matmul %65, %47, %cst_29 {dimension_numbers = #tpu.dot_dimension_numbers<[1], [0], [0], [1], [0, 0, 1, 1], [], []>} : vector<16x16xbf16>, vector<16x32xbf16>, vector<16x32xf32> -> vector<16x32xf32>
    %67 = vector.extract_strided_slice %28 {offsets = [0, 32], sizes = [16, 32], strides = [1, 1]} : vector<16x128xf32> to vector<16x32xf32>
    %68 = arith.truncf %67 : vector<16x32xf32> to vector<16x32xbf16>
    %69 = vector.extract_strided_slice %36 {offsets = [0, 32], sizes = [16, 32], strides = [1, 1]} : vector<16x128xf32> to vector<16x32xf32>
    %70 = arith.truncf %69 : vector<16x32xf32> to vector<16x32xbf16>
    %71 = vector.extract_strided_slice %37 {offsets = [0, 32], sizes = [16, 32], strides = [1, 1]} : vector<16x128xf32> to vector<16x32xf32>
    %72 = arith.truncf %71 : vector<16x32xf32> to vector<16x32xbf16>
    %cst_30 = arith.constant dense<0.000000e+00> : vector<16x16xf32>
    %73 = tpu.matmul %68, %70, %cst_30 {dimension_numbers = #tpu.dot_dimension_numbers<[1], [1], [0], [0], [0, 0, 1, 0], [], []>} : vector<16x32xbf16>, vector<16x32xbf16>, vector<16x16xf32> -> vector<16x16xf32>
    %cst_31 = arith.constant 0.176776692 : f32
    %74 = vector.broadcast %cst_31 : f32 to vector<16x16xf32>
    %75 = arith.mulf %73, %74 : vector<16x16xf32>
    %cst_32 = arith.constant -1.000000e+09 : f32
    %76 = vector.shape_cast %41 : vector<1x16xi1> to vector<1x16xi1>
    %77 = vector.broadcast %76 : vector<1x16xi1> to vector<16x16xi1>
    %78 = vector.broadcast %cst_32 : f32 to vector<16x16xf32>
    %79 = arith.select %77, %78, %75 : vector<16x16xi1>, vector<16x16xf32>
    %cst_33 = arith.constant dense<0xFF800000> : vector<16xf32>
    %80 = vector.multi_reduction <maximumf>, %79, %cst_33 [1] : vector<16x16xf32> to vector<16xf32>
    %81 = vector.shape_cast %80 : vector<16xf32> to vector<16x1xf32>
    %82 = vector.broadcast %81 : vector<16x1xf32> to vector<16x16xf32>
    %83 = arith.subf %79, %82 : vector<16x16xf32>
    %84 = math.exp %83 : vector<16x16xf32>
    %cst_34 = arith.constant dense<0.000000e+00> : vector<16xf32>
    %85 = vector.multi_reduction <add>, %84, %cst_34 [1] : vector<16x16xf32> to vector<16xf32>
    %86 = vector.shape_cast %85 : vector<16xf32> to vector<16x1xf32>
    %87 = tpu.reciprocal %86 {approx = true} : vector<16x1xf32> -> vector<16x1xf32>
    %88 = vector.broadcast %87 : vector<16x1xf32> to vector<16x16xf32>
    %89 = arith.mulf %84, %88 : vector<16x16xf32>
    %90 = arith.truncf %89 : vector<16x16xf32> to vector<16x16xbf16>
    %cst_35 = arith.constant dense<0.000000e+00> : vector<16x32xf32>
    %91 = tpu.matmul %90, %72, %cst_35 {dimension_numbers = #tpu.dot_dimension_numbers<[1], [0], [0], [1], [0, 0, 1, 1], [], []>} : vector<16x16xbf16>, vector<16x32xbf16>, vector<16x32xf32> -> vector<16x32xf32>
    %92 = vector.extract_strided_slice %28 {offsets = [0, 64], sizes = [16, 32], strides = [1, 1]} : vector<16x128xf32> to vector<16x32xf32>
    %93 = arith.truncf %92 : vector<16x32xf32> to vector<16x32xbf16>
    %94 = vector.extract_strided_slice %36 {offsets = [0, 64], sizes = [16, 32], strides = [1, 1]} : vector<16x128xf32> to vector<16x32xf32>
    %95 = arith.truncf %94 : vector<16x32xf32> to vector<16x32xbf16>
    %96 = vector.extract_strided_slice %37 {offsets = [0, 64], sizes = [16, 32], strides = [1, 1]} : vector<16x128xf32> to vector<16x32xf32>
    %97 = arith.truncf %96 : vector<16x32xf32> to vector<16x32xbf16>
    %cst_36 = arith.constant dense<0.000000e+00> : vector<16x16xf32>
    %98 = tpu.matmul %93, %95, %cst_36 {dimension_numbers = #tpu.dot_dimension_numbers<[1], [1], [0], [0], [0, 0, 1, 0], [], []>} : vector<16x32xbf16>, vector<16x32xbf16>, vector<16x16xf32> -> vector<16x16xf32>
    %cst_37 = arith.constant 0.176776692 : f32
    %99 = vector.broadcast %cst_37 : f32 to vector<16x16xf32>
    %100 = arith.mulf %98, %99 : vector<16x16xf32>
    %cst_38 = arith.constant -1.000000e+09 : f32
    %101 = vector.shape_cast %41 : vector<1x16xi1> to vector<1x16xi1>
    %102 = vector.broadcast %101 : vector<1x16xi1> to vector<16x16xi1>
    %103 = vector.broadcast %cst_38 : f32 to vector<16x16xf32>
    %104 = arith.select %102, %103, %100 : vector<16x16xi1>, vector<16x16xf32>
    %cst_39 = arith.constant dense<0xFF800000> : vector<16xf32>
    %105 = vector.multi_reduction <maximumf>, %104, %cst_39 [1] : vector<16x16xf32> to vector<16xf32>
    %106 = vector.shape_cast %105 : vector<16xf32> to vector<16x1xf32>
    %107 = vector.broadcast %106 : vector<16x1xf32> to vector<16x16xf32>
    %108 = arith.subf %104, %107 : vector<16x16xf32>
    %109 = math.exp %108 : vector<16x16xf32>
    %cst_40 = arith.constant dense<0.000000e+00> : vector<16xf32>
    %110 = vector.multi_reduction <add>, %109, %cst_40 [1] : vector<16x16xf32> to vector<16xf32>
    %111 = vector.shape_cast %110 : vector<16xf32> to vector<16x1xf32>
    %112 = tpu.reciprocal %111 {approx = true} : vector<16x1xf32> -> vector<16x1xf32>
    %113 = vector.broadcast %112 : vector<16x1xf32> to vector<16x16xf32>
    %114 = arith.mulf %109, %113 : vector<16x16xf32>
    %115 = arith.truncf %114 : vector<16x16xf32> to vector<16x16xbf16>
    %cst_41 = arith.constant dense<0.000000e+00> : vector<16x32xf32>
    %116 = tpu.matmul %115, %97, %cst_41 {dimension_numbers = #tpu.dot_dimension_numbers<[1], [0], [0], [1], [0, 0, 1, 1], [], []>} : vector<16x16xbf16>, vector<16x32xbf16>, vector<16x32xf32> -> vector<16x32xf32>
    %117 = vector.extract_strided_slice %28 {offsets = [0, 96], sizes = [16, 32], strides = [1, 1]} : vector<16x128xf32> to vector<16x32xf32>
    %118 = arith.truncf %117 : vector<16x32xf32> to vector<16x32xbf16>
    %119 = vector.extract_strided_slice %36 {offsets = [0, 96], sizes = [16, 32], strides = [1, 1]} : vector<16x128xf32> to vector<16x32xf32>
    %120 = arith.truncf %119 : vector<16x32xf32> to vector<16x32xbf16>
    %121 = vector.extract_strided_slice %37 {offsets = [0, 96], sizes = [16, 32], strides = [1, 1]} : vector<16x128xf32> to vector<16x32xf32>
    %122 = arith.truncf %121 : vector<16x32xf32> to vector<16x32xbf16>
    %cst_42 = arith.constant dense<0.000000e+00> : vector<16x16xf32>
    %123 = tpu.matmul %118, %120, %cst_42 {dimension_numbers = #tpu.dot_dimension_numbers<[1], [1], [0], [0], [0, 0, 1, 0], [], []>} : vector<16x32xbf16>, vector<16x32xbf16>, vector<16x16xf32> -> vector<16x16xf32>
    %cst_43 = arith.constant 0.176776692 : f32
    %124 = vector.broadcast %cst_43 : f32 to vector<16x16xf32>
    %125 = arith.mulf %123, %124 : vector<16x16xf32>
    %cst_44 = arith.constant -1.000000e+09 : f32
    %126 = vector.shape_cast %41 : vector<1x16xi1> to vector<1x16xi1>
    %127 = vector.broadcast %126 : vector<1x16xi1> to vector<16x16xi1>
    %128 = vector.broadcast %cst_44 : f32 to vector<16x16xf32>
    %129 = arith.select %127, %128, %125 : vector<16x16xi1>, vector<16x16xf32>
    %cst_45 = arith.constant dense<0xFF800000> : vector<16xf32>
    %130 = vector.multi_reduction <maximumf>, %129, %cst_45 [1] : vector<16x16xf32> to vector<16xf32>
    %131 = vector.shape_cast %130 : vector<16xf32> to vector<16x1xf32>
    %132 = vector.broadcast %131 : vector<16x1xf32> to vector<16x16xf32>
    %133 = arith.subf %129, %132 : vector<16x16xf32>
    %134 = math.exp %133 : vector<16x16xf32>
    %cst_46 = arith.constant dense<0.000000e+00> : vector<16xf32>
    %135 = vector.multi_reduction <add>, %134, %cst_46 [1] : vector<16x16xf32> to vector<16xf32>
    %136 = vector.shape_cast %135 : vector<16xf32> to vector<16x1xf32>
    %137 = tpu.reciprocal %136 {approx = true} : vector<16x1xf32> -> vector<16x1xf32>
    %138 = vector.broadcast %137 : vector<16x1xf32> to vector<16x16xf32>
    %139 = arith.mulf %134, %138 : vector<16x16xf32>
    %140 = arith.truncf %139 : vector<16x16xf32> to vector<16x16xbf16>
    %cst_47 = arith.constant dense<0.000000e+00> : vector<16x32xf32>
    %141 = tpu.matmul %140, %122, %cst_47 {dimension_numbers = #tpu.dot_dimension_numbers<[1], [0], [0], [1], [0, 0, 1, 1], [], []>} : vector<16x16xbf16>, vector<16x32xbf16>, vector<16x32xf32> -> vector<16x32xf32>
    %142 = tpu.concatenate %66, %91, %116, %141 in 1 : vector<16x32xf32>, vector<16x32xf32>, vector<16x32xf32>, vector<16x32xf32> -> vector<16x128xf32>
    %143 = arith.truncf %142 : vector<16x128xf32> to vector<16x128xbf16>
    %c0_48 = arith.constant 0 : index
    %c0_49 = arith.constant 0 : index
    %144 = vector.load %arg10[%c0_48, %c0_49] : memref<128x128xbf16, #tpu.memory_space<vmem>>, vector<128x128xbf16>
    %cst_50 = arith.constant dense<0.000000e+00> : vector<16x128xf32>
    %145 = tpu.matmul %143, %144, %cst_50 {dimension_numbers = #tpu.dot_dimension_numbers<[1], [0], [0], [1], [0, 0, 1, 1], [], []>} : vector<16x128xbf16>, vector<128x128xbf16>, vector<16x128xf32> -> vector<16x128xf32>
    %c0_51 = arith.constant 0 : index
    %c0_52 = arith.constant 0 : index
    %146 = vector.load %arg11[%c0_51, %c0_52] : memref<1x128xf32, #tpu.memory_space<vmem>>, vector<1x128xf32>
    %147 = vector.broadcast %146 : vector<1x128xf32> to vector<16x128xf32>
    %148 = arith.addf %145, %147 : vector<16x128xf32>
    %149 = arith.addf %0, %148 : vector<16x128xf32>
    %c0_53 = arith.constant 0 : index
    %c0_54 = arith.constant 0 : index
    %150 = vector.load %arg12[%c0_53, %c0_54] : memref<16x128xf32, #tpu.memory_space<vmem>>, vector<16x128xf32>
    tpu.vector_store %arg12[%c0_53, %c0_54], %149 {strides = array<i32>} : memref<16x128xf32, #tpu.memory_space<vmem>>, vector<16x128xf32>,
    return
  }
  func.func @transform_0(%arg0: i32) -> (i32, i32) {
    %c0_i32 = arith.constant 0 : i32
    %c0_i32_0 = arith.constant 0 : i32
    return %arg0, %c0_i32 : i32, i32
  }
  func.func @transform_1(%arg0: i32) -> (i32, i32) {
    %c0_i32 = arith.constant 0 : i32
    %c0_i32_0 = arith.constant 0 : i32
    return %arg0, %c0_i32 : i32, i32
  }
  func.func @transform_2(%arg0: i32) -> (i32, i32, i32) {
    %c0_i32 = arith.constant 0 : i32
    %c0_i32_0 = arith.constant 0 : i32
    %c0_i32_1 = arith.constant 0 : i32
    return %arg0, %c0_i32, %c0_i32_0 : i32, i32, i32
  }
  func.func @transform_3(%arg0: i32) -> (i32, i32) {
    %c0_i32 = arith.constant 0 : i32
    %c0_i32_0 = arith.constant 0 : i32
    %c0_i32_1 = arith.constant 0 : i32
    return %c0_i32, %c0_i32_0 : i32, i32
  }
  func.func @transform_4(%arg0: i32) -> (i32, i32) {
    %c0_i32 = arith.constant 0 : i32
    %c0_i32_0 = arith.constant 0 : i32
    %c0_i32_1 = arith.constant 0 : i32
    return %c0_i32, %c0_i32_0 : i32, i32
  }
  func.func @transform_5(%arg0: i32) -> (i32, i32) {
    %c0_i32 = arith.constant 0 : i32
    %c0_i32_0 = arith.constant 0 : i32
    %c0_i32_1 = arith.constant 0 : i32
    return %c0_i32, %c0_i32_0 : i32, i32
  }
  func.func @transform_6(%arg0: i32) -> (i32, i32) {
    %c0_i32 = arith.constant 0 : i32
    %c0_i32_0 = arith.constant 0 : i32
    %c0_i32_1 = arith.constant 0 : i32
    return %c0_i32, %c0_i32_0 : i32, i32
  }
  func.func @transform_7(%arg0: i32) -> (i32, i32) {
    %c0_i32 = arith.constant 0 : i32
    %c0_i32_0 = arith.constant 0 : i32
    %c0_i32_1 = arith.constant 0 : i32
    return %c0_i32, %c0_i32_0 : i32, i32
  }
  func.func @transform_8(%arg0: i32) -> (i32, i32) {
    %c0_i32 = arith.constant 0 : i32
    %c0_i32_0 = arith.constant 0 : i32
    %c0_i32_1 = arith.constant 0 : i32
    return %c0_i32, %c0_i32_0 : i32, i32
  }
  func.func @transform_9(%arg0: i32) -> (i32, i32) {
    %c0_i32 = arith.constant 0 : i32
    %c0_i32_0 = arith.constant 0 : i32
    %c0_i32_1 = arith.constant 0 : i32
    return %c0_i32, %c0_i32_0 : i32, i32
  }
  func.func @transform_10(%arg0: i32) -> (i32, i32) {
    %c0_i32 = arith.constant 0 : i32
    %c0_i32_0 = arith.constant 0 : i32
    %c0_i32_1 = arith.constant 0 : i32
    return %c0_i32, %c0_i32_0 : i32, i32
  }
  func.func @transform_11(%arg0: i32) -> (i32, i32) {
    %c0_i32 = arith.constant 0 : i32
    %c0_i32_0 = arith.constant 0 : i32
    return %arg0, %c0_i32 : i32, i32
  }
}

</mosaic_0001>

<llo_original>
// kernel: decoder_layer_forward.5
$region0: #{decoder_layer_forward.5}
  #allocation0 [shape = 'u32[]', space=smem, size = 0x4, offset = 0x4, fixed_abs, tag = 'smem constant byte address 0x4 - core index']
  #allocation1 [shape = 'u32[144,128]{1,0:T(1,128)}', space=vmem, size = 0x12000, scoped, tag = 'internal scratch']
  %s0 = inlined_call_operand.vmem [shape: f32[32,128], index: 0, kind: input, shape index: {}]
  %s1 = inlined_call_operand.vmem [shape: f32[1,128], index: 1, kind: input, shape index: {}]
  %s2 = inlined_call_operand.vmem [shape: f32[1,128], index: 2, kind: input, shape index: {}]
  %s3 = inlined_call_operand.vmem [shape: bf16[128,256], index: 3, kind: input, shape index: {}]
  %s4 = inlined_call_operand.vmem [shape: f32[1,256], index: 4, kind: input, shape index: {}]
  %s5 = inlined_call_operand.vmem [shape: bf16[256,128], index: 5, kind: input, shape index: {}]
  %s6 = inlined_call_operand.vmem [shape: f32[1,128], index: 6, kind: input, shape index: {}]
  %s7 = inlined_call_operand.hbm [shape: f32[32,128], index: 7, kind: output, shape index: {}]
  %s8 = sld [smem:[#allocation0]]
  $region61: #{decoder_layer_forward.5} parent=0
    _
  %s10 = ssub.s32 1, %s8
  %s11 = scalar_select 0, %s10, %s8
  $region1: #{decoder_layer_forward.5} parent=0
    #allocation2 [shape = 'u8[16384]{0}', space=vmem, size = 0x4000, scoped, tag = 'output window, operand 0']
    #allocation3 [shape = 's32[2]{0}', space=sflag, size = 0x8, scoped, tag = 'scoped memory for decoder_layer_forward.5']
    %12 = vsyncpa [#allocation3], 0
    %s13 = scalar_lea.sflag [#allocation3], 1
    %14 = vsyncpa %s13, 0
    loop: start=0, step=1, limit=4
    $region2: #{decoder_layer_forward.5} parent=1 // loop_pre_header
      _
    $region3: #{decoder_layer_forward.5} parent=1 // loop_header
      %s16 = sphi 0, %s20
      %p17 = scmp.ge.s32.totalorder %s16, 4
      %s26 = sphi 0, %s28
      %s29 = sphi 0, %s26
      %s30 = sphi 0, %s29
      %s46 = sphi 0, %s30
      %s50 = sphi 0, %s50
      %s52 = sphi 0, %s50
      %s53 = sphi 0, %s52
      %s67 = sphi 0, %s53
      %s71 = sphi 0, %s71
      %s73 = sphi 0, %s71
      %s74 = sphi 0, %s73
      %s88 = sphi 0, %s74
      %s92 = sphi 0, %s92
      %s94 = sphi 0, %s92
      %s95 = sphi 0, %s94
      %s109 = sphi 0, %s95
      %s113 = sphi 0, %s113
      %s115 = sphi 0, %s113
      %s116 = sphi 0, %s115
      %s130 = sphi 0, %s116
      %s134 = sphi 0, %s134
      %s136 = sphi 0, %s134
      %s137 = sphi 0, %s136
      %s151 = sphi 0, %s137
      %s155 = sphi 0, %s155
      %s157 = sphi 0, %s155
      %s158 = sphi 0, %s157
      %s172 = sphi 0, %s158
      %s178 = sphi 0, %s180
      %s181 = sphi 0, %s178
      %s182 = sphi 0, %s181
      %s198 = sphi 0, %s182
    $region4: #{decoder_layer_forward.5} parent=1 // loop_header_branch
      %19 = sbr.rel (%p17) target = $region8
    $region5: #{decoder_layer_forward.5} parent=1 // loop_body
      %s21 = ssub.s32 %s16, 1
      %s22 = ssub.s32 %s16, 2
      %s23 = sadd.s32 %s16, 1
      %s24 = ssub.s32 %s16, %s23
      %p25 = scmp.eq.s32.totalorder %s24, 0
      %s27 = sadd.s32 %s26, 1
      %s28 = scalar_select %p25, %s26, %s27
      %p31 = pneg %p25
      %p32 = scmp.eq.s32.totalorder %s16, 1
      %p33 = por %p31, %p32
      %p34 = scmp.ne.s32.totalorder %s26, %s29
      %p35 = scmp.eq.s32.totalorder %s16, 0
      %p36 = por %p34, %p35
      %p37 = scmp.ne.s32.totalorder %s26, %s29
      %p38 = scmp.eq.s32.totalorder %s21, 1
      %p39 = por %p37, %p38
      %p40 = scmp.ne.s32.totalorder %s29, %s30
      %p41 = scmp.eq.s32.totalorder %s21, 0
      %p42 = por %p40, %p41
      %p43 = scmp.ne.s32.totalorder %s29, %s30
      %p44 = scmp.eq.s32.totalorder %s22, 1
      %p45 = por %p43, %p44
      %p47 = scmp.ne.s32.totalorder %s30, %s46
      %p48 = scmp.eq.s32.totalorder %s22, 0
      %p49 = por %p47, %p48
      %s51 = sadd.s32 %s50, 1
      %p54 = scmp.eq.s32.totalorder %s16, 1
      %p55 = scmp.ne.s32.totalorder %s50, %s52
      %p56 = scmp.eq.s32.totalorder %s16, 0
      %p57 = por %p55, %p56
      %p58 = scmp.ne.s32.totalorder %s50, %s52
      %p59 = scmp.eq.s32.totalorder %s21, 1
      %p60 = por %p58, %p59
      %p61 = scmp.ne.s32.totalorder %s52, %s53
      %p62 = scmp.eq.s32.totalorder %s21, 0
      %p63 = por %p61, %p62
      %p64 = scmp.ne.s32.totalorder %s52, %s53
      %p65 = scmp.eq.s32.totalorder %s22, 1
      %p66 = por %p64, %p65
      %p68 = scmp.ne.s32.totalorder %s53, %s67
      %p69 = scmp.eq.s32.totalorder %s22, 0
      %p70 = por %p68, %p69
      %s72 = sadd.s32 %s71, 1
      %p75 = scmp.eq.s32.totalorder %s16, 1
      %p76 = scmp.ne.s32.totalorder %s71, %s73
      %p77 = scmp.eq.s32.totalorder %s16, 0
      %p78 = por %p76, %p77
      %p79 = scmp.ne.s32.totalorder %s71, %s73
      %p80 = scmp.eq.s32.totalorder %s21, 1
      %p81 = por %p79, %p80
      %p82 = scmp.ne.s32.totalorder %s73, %s74
      %p83 = scmp.eq.s32.totalorder %s21, 0
      %p84 = por %p82, %p83
      %p85 = scmp.ne.s32.totalorder %s73, %s74
      %p86 = scmp.eq.s32.totalorder %s22, 1
      %p87 = por %p85, %p86
      %p89 = scmp.ne.s32.totalorder %s74, %s88
      %p90 = scmp.eq.s32.totalorder %s22, 0
      %p91 = por %p89, %p90
      %s93 = sadd.s32 %s92, 1
      %p96 = scmp.eq.s32.totalorder %s16, 1
      %p97 = scmp.ne.s32.totalorder %s92, %s94
      %p98 = scmp.eq.s32.totalorder %s16, 0
      %p99 = por %p97, %p98
      %p100 = scmp.ne.s32.totalorder %s92, %s94
      %p101 = scmp.eq.s32.totalorder %s21, 1
      %p102 = por %p100, %p101
      %p103 = scmp.ne.s32.totalorder %s94, %s95
      %p104 = scmp.eq.s32.totalorder %s21, 0
      %p105 = por %p103, %p104
      %p106 = scmp.ne.s32.totalorder %s94, %s95
      %p107 = scmp.eq.s32.totalorder %s22, 1
      %p108 = por %p106, %p107
      %p110 = scmp.ne.s32.totalorder %s95, %s109
      %p111 = scmp.eq.s32.totalorder %s22, 0
      %p112 = por %p110, %p111
      %s114 = sadd.s32 %s113, 1
      %p117 = scmp.eq.s32.totalorder %s16, 1
      %p118 = scmp.ne.s32.totalorder %s113, %s115
      %p119 = scmp.eq.s32.totalorder %s16, 0
      %p120 = por %p118, %p119
      %p121 = scmp.ne.s32.totalorder %s113, %s115
      %p122 = scmp.eq.s32.totalorder %s21, 1
      %p123 = por %p121, %p122
      %p124 = scmp.ne.s32.totalorder %s115, %s116
      %p125 = scmp.eq.s32.totalorder %s21, 0
      %p126 = por %p124, %p125
      %p127 = scmp.ne.s32.totalorder %s115, %s116
      %p128 = scmp.eq.s32.totalorder %s22, 1
      %p129 = por %p127, %p128
      %p131 = scmp.ne.s32.totalorder %s116, %s130
      %p132 = scmp.eq.s32.totalorder %s22, 0
      %p133 = por %p131, %p132
      %s135 = sadd.s32 %s134, 1
      %p138 = scmp.eq.s32.totalorder %s16, 1
      %p139 = scmp.ne.s32.totalorder %s134, %s136
      %p140 = scmp.eq.s32.totalorder %s16, 0
      %p141 = por %p139, %p140
      %p142 = scmp.ne.s32.totalorder %s134, %s136
      %p143 = scmp.eq.s32.totalorder %s21, 1
      %p144 = por %p142, %p143
      %p145 = scmp.ne.s32.totalorder %s136, %s137
      %p146 = scmp.eq.s32.totalorder %s21, 0
      %p147 = por %p145, %p146
      %p148 = scmp.ne.s32.totalorder %s136, %s137
      %p149 = scmp.eq.s32.totalorder %s22, 1
      %p150 = por %p148, %p149
      %p152 = scmp.ne.s32.totalorder %s137, %s151
      %p153 = scmp.eq.s32.totalorder %s22, 0
      %p154 = por %p152, %p153
      %s156 = sadd.s32 %s155, 1
      %p159 = scmp.eq.s32.totalorder %s16, 1
      %p160 = scmp.ne.s32.totalorder %s155, %s157
      %p161 = scmp.eq.s32.totalorder %s16, 0
      %p162 = por %p160, %p161
      %p163 = scmp.ne.s32.totalorder %s155, %s157
      %p164 = scmp.eq.s32.totalorder %s21, 1
      %p165 = por %p163, %p164
      %p166 = scmp.ne.s32.totalorder %s157, %s158
      %p167 = scmp.eq.s32.totalorder %s21, 0
      %p168 = por %p166, %p167
      %p169 = scmp.ne.s32.totalorder %s157, %s158
      %p170 = scmp.eq.s32.totalorder %s22, 1
      %p171 = por %p169, %p170
      %p173 = scmp.ne.s32.totalorder %s158, %s172
      %p174 = scmp.eq.s32.totalorder %s22, 0
      %p175 = por %p173, %p174
      %s176 = ssub.s32 %s16, %s23
      %p177 = scmp.eq.s32.totalorder %s176, 0
      %s179 = sadd.s32 %s178, 1
      %s180 = scalar_select %p177, %s178, %s179
      %p183 = pneg %p177
      %p184 = scmp.eq.s32.totalorder %s16, 1
      %p185 = por %p183, %p184
      %p186 = scmp.ne.s32.totalorder %s178, %s181
      %p187 = scmp.eq.s32.totalorder %s16, 0
      %p188 = por %p186, %p187
      %p189 = scmp.ne.s32.totalorder %s178, %s181
      %p190 = scmp.eq.s32.totalorder %s21, 1
      %p191 = por %p189, %p190
      %p192 = scmp.ne.s32.totalorder %s181, %s182
      %p193 = scmp.eq.s32.totalorder %s21, 0
      %p194 = por %p192, %p193
      %p195 = scmp.ne.s32.totalorder %s181, %s182
      %p196 = scmp.eq.s32.totalorder %s22, 1
      %p197 = por %p195, %p196
      %p199 = scmp.ne.s32.totalorder %s182, %s198
      %p200 = scmp.eq.s32.totalorder %s22, 0
      %p201 = por %p199, %p200
      %p202 = scmp.le.s32.totalorder 1, %s16
      %p203 = scmp.lt.s32.totalorder %s16, 3
      %p204 = pnand %p202, %p203
      %p205 = pneg %p204
      // Predicated region
      $region9: #{decoder_layer_forward.5} parent=5 // pred_check
        _
      $region10: #{decoder_layer_forward.5} parent=5 // pred_check_branch
        %207 = sbr.rel (%p204) target = $region12
      $region11: #{decoder_layer_forward.5} parent=5 // pred_region
        %s208 = ssub.s32 %s16, 1
        // Predicated region
        $region13: #{decoder_layer_forward.5} parent=11 // pred_check
          %p209 = pneg %p63
        $region14: #{decoder_layer_forward.5} parent=11 // pred_check_branch
          %211 = sbr.rel (%p209) target = $region16
        $region15: #{decoder_layer_forward.5} parent=11 // pred_region
          _
        $region16: #{decoder_layer_forward.5} parent=11 // pred_fallthru
          _
        // Predicated region
        $region17: #{decoder_layer_forward.5} parent=11 // pred_check
          %p212 = pneg %p84
        $region18: #{decoder_layer_forward.5} parent=11 // pred_check_branch
          %214 = sbr.rel (%p212) target = $region20
        $region19: #{decoder_layer_forward.5} parent=11 // pred_region
          _
        $region20: #{decoder_layer_forward.5} parent=11 // pred_fallthru
          _
        // Predicated region
        $region21: #{decoder_layer_forward.5} parent=11 // pred_check
          %p215 = pneg %p105
        $region22: #{decoder_layer_forward.5} parent=11 // pred_check_branch
          %217 = sbr.rel (%p215) target = $region24
        $region23: #{decoder_layer_forward.5} parent=11 // pred_region
          _
        $region24: #{decoder_layer_forward.5} parent=11 // pred_fallthru
          _
        // Predicated region
        $region25: #{decoder_layer_forward.5} parent=11 // pred_check
          %p218 = pneg %p126
        $region26: #{decoder_layer_forward.5} parent=11 // pred_check_branch
          %220 = sbr.rel (%p218) target = $region28
        $region27: #{decoder_layer_forward.5} parent=11 // pred_region
          _
        $region28: #{decoder_layer_forward.5} parent=11 // pred_fallthru
          _
        // Predicated region
        $region29: #{decoder_layer_forward.5} parent=11 // pred_check
          %p221 = pneg %p147
        $region30: #{decoder_layer_forward.5} parent=11 // pred_check_branch
          %223 = sbr.rel (%p221) target = $region32
        $region31: #{decoder_layer_forward.5} parent=11 // pred_region
          _
        $region32: #{decoder_layer_forward.5} parent=11 // pred_fallthru
          _
        // Predicated region
        $region33: #{decoder_layer_forward.5} parent=11 // pred_check
          %p224 = pneg %p168
        $region34: #{decoder_layer_forward.5} parent=11 // pred_check_branch
          %226 = sbr.rel (%p224) target = $region36
        $region35: #{decoder_layer_forward.5} parent=11 // pred_region
          _
        $region36: #{decoder_layer_forward.5} parent=11 // pred_fallthru
          _
      $region12: #{decoder_layer_forward.5} parent=5 // pred_fallthru
        _
      %p227 = scmp.lt.s32.totalorder %s16, 2
      // Predicated region
      $region37: #{decoder_layer_forward.5} parent=5 // pred_check
        %p228 = pneg %p227
      $region38: #{decoder_layer_forward.5} parent=5 // pred_check_branch
        %230 = sbr.rel (%p228) target = $region40
      $region39: #{decoder_layer_forward.5} parent=5 // pred_region
        // Predicated region
        $region41: #{decoder_layer_forward.5} parent=39 // pred_check
          %p231 = pneg %p36
        $region42: #{decoder_layer_forward.5} parent=39 // pred_check_branch
          %233 = sbr.rel (%p231) target = $region44
        $region43: #{decoder_layer_forward.5} parent=39 // pred_region
          %s234 = smul.u32 2, %s16
          %p235 = scmp.lt.s32.totalorder %s234, 3
          %s236 = scalar_select %p235, %s234, 3
          %s237 = smul.addr %s236, 8
          %s238 = scalar_lea.vmem %s0, %s237
          %s239 = smul.u32 2, %s16
        $region44: #{decoder_layer_forward.5} parent=39 // pred_fallthru
          _
      $region40: #{decoder_layer_forward.5} parent=5 // pred_fallthru
        _
      %p240 = scmp.le.s32.totalorder 1, %s16
      %p241 = scmp.lt.s32.totalorder %s16, 3
      %p242 = pnand %p240, %p241
      %p243 = pneg %p242
      // Predicated region
      $region45: #{decoder_layer_forward.5} parent=5 // pred_check
        _
      $region46: #{decoder_layer_forward.5} parent=5 // pred_check_branch
        %245 = sbr.rel (%p242) target = $region48
      $region47: #{decoder_layer_forward.5} parent=5 // pred_region
        %s246 = ssub.s32 %s16, 1
        %s247 = smul.u32 2, %s21
        %p248 = scmp.lt.s32.totalorder %s247, 3
        %s249 = scalar_select %p248, %s247, 3
        %s250 = smul.addr %s249, 8
        %s251 = scalar_lea.vmem %s0, %s250
        %p252 = pneg %p42
        %p253 = pneg %p39
        %p254 = pneg %p63
        %p255 = pneg %p60
        %p256 = pneg %p84
        %p257 = pneg %p81
        %p258 = pneg %p105
        %p259 = pneg %p102
        %p260 = pneg %p126
        %p261 = pneg %p123
        %p262 = pneg %p147
        %p263 = pneg %p144
        %p264 = pneg %p168
        %p265 = pneg %p165
        %p266 = pneg %p194
        %p267 = pneg %p191
        %s268 = sand.u32 %s181, 1
        %s269 = scalar_lea.sflag [#allocation3], %s268
        %s270 = sand.u32 %s181, 1
        %s271 = smul.addr %s270, 16
        %s272 = scalar_lea.vmem [#allocation2], %s271
        %s273 = smul.u32 2, %s21
        %p274 = scmp.lt.s32.totalorder %s273, 3
        %s275 = scalar_select %p274, %s273, 3
        %s276 = smul.addr %s275, 8
        %s277 = scalar_lea.vmem %s0, %s276
        %s278 = smul.u32 2, %s21
        %s279 = smul.u32 2, %s21
        %v281 = vld [vmem:[%s277] sm:$0xff]
        %v282 = vld [vmem:[%s277 + $0x8] sm:$0xff]
        %v283 = vld [vmem:[%s1] sm:$0x1]
        %v284 = vld [vmem:[%s2] sm:$0x1]
        %285 = vadd.xlane.f32.xlu0 %v281
        %v286 = vpop.xlane.xlu0 %285
        %287 = vadd.xlane.f32.xlu0 %v282
        %v288 = vpop.xlane.xlu0 %287
        %v289 = vrcp.pop 128.0
        %v290 = vmul.f32 %v286, %v289
        %v291 = vmul.f32 %v288, %v289
        %v292 = vsub.f32 %v281, %v290
        %v293 = vsub.f32 %v282, %v291
        %v294 = vmul.f32 %v292, %v292
        %v295 = vmul.f32 %v293, %v293
        %296 = vadd.xlane.f32.xlu0 %v294
        %v297 = vpop.xlane.xlu0 %296
        %298 = vadd.xlane.f32.xlu0 %v295
        %v299 = vpop.xlane.xlu0 %298
        %v300 = vmul.f32 %v297, 0.007874016
        %v301 = vmul.f32 %v299, 0.007874016
        %v303 = vlaneseq
        %v304 = vshrl.u32 %v303, 7
        %v305 = vsub.s32 0, %v304
        %v306 = vrot.slane %v283, %v305
        %v308 = vmul.f32 %v306, %v292
        %v309 = vmul.f32 %v306, %v293
        %v310 = vadd.f32 %v300, 1e-06
        %v311 = vadd.f32 %v301, 1e-06
        %v312 = vrsqrt.pop %v310
        %v313 = vrsqrt.pop %v311
        %v314 = vmul.f32 %v308, %v312
        %v315 = vmul.f32 %v309, %v313
        %v317 = vlaneseq
        %v318 = vshrl.u32 %v317, 7
        %v319 = vsub.s32 0, %v318
        %v320 = vrot.slane %v284, %v319
        %v322 = vadd.f32 %v314, %v320
        %v323 = vadd.f32 %v315, %v320
        %v324 = vpack.c.bf16 %v323, %v322
        %v325 = vld [vmem:[%s3] sm:$0xff]
        %v326 = vld [vmem:[%s3 + $0x8] sm:$0xff]
        %v327 = vld [vmem:[%s3 + $0x10] sm:$0xff]
        %v328 = vld [vmem:[%s3 + $0x18] sm:$0xff]
        %v329 = vld [vmem:[%s3 + $0x20] sm:$0xff]
        %v330 = vld [vmem:[%s3 + $0x28] sm:$0xff]
        %v331 = vld [vmem:[%s3 + $0x30] sm:$0xff]
        %v332 = vld [vmem:[%s3 + $0x38] sm:$0xff]
        %v333 = vld [vmem:[%s3 + $0x40] sm:$0xff]
        %v334 = vld [vmem:[%s3 + $0x48] sm:$0xff]
        %v335 = vld [vmem:[%s3 + $0x50] sm:$0xff]
        %v336 = vld [vmem:[%s3 + $0x58] sm:$0xff]
        %v337 = vld [vmem:[%s3 + $0x60] sm:$0xff]
        %v338 = vld [vmem:[%s3 + $0x68] sm:$0xff]
        %v339 = vld [vmem:[%s3 + $0x70] sm:$0xff]
        %v340 = vld [vmem:[%s3 + $0x78] sm:$0xff]
        %v341 = vld [vmem:[%s4] sm:$0x3]
        %v343 = vlaneseq
        %v344 = vshrl.u32 %v343, 7
        %v345 = vsub.s32 0, %v344
        %v346 = vrot.slane %v341, %v345
        %v347 = vlaneseq
        %v348 = vshrl.u32 %v347, 7
        %v349 = vsub.s32 1, %v348
        %v350 = vrot.slane %v341, %v349
        %v369 = vunpack.c.l.b16 %v325
        %v370 = vunpack.c.h.b16 %v325
        %v371 = vunpack.c.l.b16 %v326
        %v372 = vunpack.c.h.b16 %v326
        %v373 = vunpack.c.l.b16 %v327
        %v374 = vunpack.c.h.b16 %v327
        %v375 = vunpack.c.l.b16 %v328
        %v376 = vunpack.c.h.b16 %v328
        %v377 = vunpack.c.l.b16 %v329
        %v378 = vunpack.c.h.b16 %v329
        %v379 = vunpack.c.l.b16 %v330
        %v380 = vunpack.c.h.b16 %v330
        %v381 = vunpack.c.l.b16 %v331
        %v382 = vunpack.c.h.b16 %v331
        %v383 = vunpack.c.l.b16 %v332
        %v384 = vunpack.c.h.b16 %v332
        %v385 = vunpack.c.l.b16 %v333
        %v386 = vunpack.c.h.b16 %v333
        %v387 = vunpack.c.l.b16 %v334
        %v388 = vunpack.c.h.b16 %v334
        %v389 = vunpack.c.l.b16 %v335
        %v390 = vunpack.c.h.b16 %v335
        %v391 = vunpack.c.l.b16 %v336
        %v392 = vunpack.c.h.b16 %v336
        %v393 = vunpack.c.l.b16 %v337
        %v394 = vunpack.c.h.b16 %v337
        %v395 = vunpack.c.l.b16 %v338
        %v396 = vunpack.c.h.b16 %v338
        %v397 = vunpack.c.l.b16 %v339
        %v398 = vunpack.c.h.b16 %v339
        %v399 = vunpack.c.l.b16 %v340
        %v400 = vunpack.c.h.b16 %v340
        %v401 = vpack.c.b16 %v371, %v369
        %v402 = vpack.c.b16 %v372, %v370
        %v403 = vpack.c.b16 %v375, %v373
        %v404 = vpack.c.b16 %v376, %v374
        %v405 = vpack.c.b16 %v379, %v377
        %v406 = vpack.c.b16 %v380, %v378
        %v407 = vpack.c.b16 %v383, %v381
        %v408 = vpack.c.b16 %v384, %v382
        %v409 = vpack.c.b16 %v387, %v385
        %v410 = vpack.c.b16 %v388, %v386
        %v411 = vpack.c.b16 %v391, %v389
        %v412 = vpack.c.b16 %v392, %v390
        %v413 = vpack.c.b16 %v395, %v393
        %v414 = vpack.c.b16 %v396, %v394
        %v415 = vpack.c.b16 %v399, %v397
        %v416 = vpack.c.b16 %v400, %v398
        %433 = vmatprep.subr.bf16.mxu0 %v416
        %434 = vmatpush1.bf16.msra.mxu0 %v415
        %435 = vmatprep.subr.bf16.mxu0 %v414
        %436 = vmatpush1.bf16.msra.mxu0 %v413
        %437 = vmatprep.subr.bf16.mxu0 %v412
        %438 = vmatpush1.bf16.msra.mxu0 %v411
        %439 = vmatprep.subr.bf16.mxu0 %v410
        %440 = vmatpush1.bf16.msra.mxu0 %v409
        %441 = vmatprep.subr.bf16.mxu0 %v408
        %442 = vmatpush1.bf16.msra.mxu0 %v407
        %443 = vmatprep.subr.bf16.mxu0 %v406
        %444 = vmatpush1.bf16.msra.mxu0 %v405
        %445 = vmatprep.subr.bf16.mxu0 %v404
        %446 = vmatpush1.bf16.msra.mxu0 %v403
        %447 = vmatprep.subr.bf16.mxu0 %v402
        %448 = vmatpush1.bf16.msra.mxu0 %v401
        %449 = vmatprep.subr.bf16.mxu0 0
        %450 = vmatpush2.bf16.msra.mxu0 0
        %451 = vmatprep.subr.bf16.mxu0 0
        %452 = vmatpush2.bf16.msra.mxu0 0
        %453 = vmatprep.subr.bf16.mxu0 0
        %454 = vmatpush2.bf16.msra.mxu0 0
        %455 = vmatprep.subr.bf16.mxu0 0
        %456 = vmatpush2.bf16.msra.mxu0 0
        %457 = vmatprep.subr.bf16.mxu0 0
        %458 = vmatpush2.bf16.msra.mxu0 0
        %459 = vmatprep.subr.bf16.mxu0 0
        %460 = vmatpush2.bf16.msra.mxu0 0
        %461 = vmatprep.subr.bf16.mxu0 0
        %462 = vmatpush2.bf16.msra.mxu0 0
        %463 = vmatprep.subr.bf16.mxu0 0
        %464 = vmatpush2.bf16.msra.mxu0 0
        %465 = vmatprep.mubr.bf16.mxu0 0
        %466 = vmatmul.mubr.bf16.gmra.mxu0 %v324
        %v467 = vpop.f32.mrf.mxu0
        %v468 = vadd.f32 %v346, %v467
        %v469 = vpop.f32.mrf.mxu0
        %v470 = vadd.f32 %v350, %v469
        %v471 = vpop.f32.mrf.mxu0
        %v472 = vadd.f32 %v346, %v471
        %v473 = vpop.f32.mrf.mxu0
        %v474 = vadd.f32 %v350, %v473
        %475 = vdwg.mxu0
        %v476 = vmax.f32 %v468, 0.0
        %v477 = vmax.f32 %v470, 0.0
        %v478 = vmax.f32 %v472, 0.0
        %v479 = vmax.f32 %v474, 0.0
        %v480 = vpack.c.bf16 %v478, %v476
        %v481 = vpack.c.bf16 %v479, %v477
        %v482 = vld [vmem:[%s5] sm:$0xf]
        %v483 = vld [vmem:[%s5 + $0x4] sm:$0xf]
        %v484 = vld [vmem:[%s5 + $0x8] sm:$0xf]
        %v485 = vld [vmem:[%s5 + $0xc] sm:$0xf]
        %v486 = vld [vmem:[%s5 + $0x10] sm:$0xf]
        %v487 = vld [vmem:[%s5 + $0x14] sm:$0xf]
        %v488 = vld [vmem:[%s5 + $0x18] sm:$0xf]
        %v489 = vld [vmem:[%s5 + $0x1c] sm:$0xf]
        %v490 = vld [vmem:[%s5 + $0x20] sm:$0xf]
        %v491 = vld [vmem:[%s5 + $0x24] sm:$0xf]
        %v492 = vld [vmem:[%s5 + $0x28] sm:$0xf]
        %v493 = vld [vmem:[%s5 + $0x2c] sm:$0xf]
        %v494 = vld [vmem:[%s5 + $0x30] sm:$0xf]
        %v495 = vld [vmem:[%s5 + $0x34] sm:$0xf]
        %v496 = vld [vmem:[%s5 + $0x38] sm:$0xf]
        %v497 = vld [vmem:[%s5 + $0x3c] sm:$0xf]
        %v498 = vld [vmem:[%s5 + $0x40] sm:$0xf]
        %v499 = vld [vmem:[%s5 + $0x44] sm:$0xf]
        %v500 = vld [vmem:[%s5 + $0x48] sm:$0xf]
        %v501 = vld [vmem:[%s5 + $0x4c] sm:$0xf]
        %v502 = vld [vmem:[%s5 + $0x50] sm:$0xf]
        %v503 = vld [vmem:[%s5 + $0x54] sm:$0xf]
        %v504 = vld [vmem:[%s5 + $0x58] sm:$0xf]
        %v505 = vld [vmem:[%s5 + $0x5c] sm:$0xf]
        %v506 = vld [vmem:[%s5 + $0x60] sm:$0xf]
        %v507 = vld [vmem:[%s5 + $0x64] sm:$0xf]
        %v508 = vld [vmem:[%s5 + $0x68] sm:$0xf]
        %v509 = vld [vmem:[%s5 + $0x6c] sm:$0xf]
        %v510 = vld [vmem:[%s5 + $0x70] sm:$0xf]
        %v511 = vld [vmem:[%s5 + $0x74] sm:$0xf]
        %v512 = vld [vmem:[%s5 + $0x78] sm:$0xf]
        %v513 = vld [vmem:[%s5 + $0x7c] sm:$0xf]
        %v514 = vld [vmem:[%s6] sm:$0x1]
        %v516 = vlaneseq
        %v517 = vshrl.u32 %v516, 7
        %v518 = vsub.s32 0, %v517
        %v519 = vrot.slane %v514, %v518
        %v553 = vunpack.c.l.b16 %v482
        %v554 = vunpack.c.l.b16 %v483
        %v555 = vunpack.c.l.b16 %v484
        %v556 = vunpack.c.l.b16 %v485
        %v557 = vunpack.c.l.b16 %v486
        %v558 = vunpack.c.l.b16 %v487
        %v559 = vunpack.c.l.b16 %v488
        %v560 = vunpack.c.l.b16 %v489
        %v561 = vunpack.c.l.b16 %v490
        %v562 = vunpack.c.l.b16 %v491
        %v563 = vunpack.c.l.b16 %v492
        %v564 = vunpack.c.l.b16 %v493
        %v565 = vunpack.c.l.b16 %v494
        %v566 = vunpack.c.l.b16 %v495
        %v567 = vunpack.c.l.b16 %v496
        %v568 = vunpack.c.l.b16 %v497
        %v569 = vunpack.c.l.b16 %v498
        %v570 = vunpack.c.l.b16 %v499
        %v571 = vunpack.c.l.b16 %v500
        %v572 = vunpack.c.l.b16 %v501
        %v573 = vunpack.c.l.b16 %v502
        %v574 = vunpack.c.l.b16 %v503
        %v575 = vunpack.c.l.b16 %v504
        %v576 = vunpack.c.l.b16 %v505
        %v577 = vunpack.c.l.b16 %v506
        %v578 = vunpack.c.l.b16 %v507
        %v579 = vunpack.c.l.b16 %v508
        %v580 = vunpack.c.l.b16 %v509
        %v581 = vunpack.c.l.b16 %v510
        %v582 = vunpack.c.l.b16 %v511
        %v583 = vunpack.c.l.b16 %v512
        %v584 = vunpack.c.l.b16 %v513
        %v585 = vpack.c.b16 %v554, %v553
        %v586 = vpack.c.b16 %v556, %v555
        %v587 = vpack.c.b16 %v558, %v557
        %v588 = vpack.c.b16 %v560, %v559
        %v589 = vpack.c.b16 %v562, %v561
        %v590 = vpack.c.b16 %v564, %v563
        %v591 = vpack.c.b16 %v566, %v565
        %v592 = vpack.c.b16 %v568, %v567
        %v593 = vpack.c.b16 %v570, %v569
        %v594 = vpack.c.b16 %v572, %v571
        %v595 = vpack.c.b16 %v574, %v573
        %v596 = vpack.c.b16 %v576, %v575
        %v597 = vpack.c.b16 %v578, %v577
        %v598 = vpack.c.b16 %v580, %v579
        %v599 = vpack.c.b16 %v582, %v581
        %v600 = vpack.c.b16 %v584, %v583
        %617 = vmatprep.subr.bf16.mxu0 0
        %618 = vmatpush1.bf16.msra.mxu0 %v592
        %619 = vmatprep.subr.bf16.mxu0 0
        %620 = vmatpush1.bf16.msra.mxu0 %v591
        %621 = vmatprep.subr.bf16.mxu0 0
        %622 = vmatpush1.bf16.msra.mxu0 %v590
        %623 = vmatprep.subr.bf16.mxu0 0
        %624 = vmatpush1.bf16.msra.mxu0 %v589
        %625 = vmatprep.subr.bf16.mxu0 0
        %626 = vmatpush1.bf16.msra.mxu0 %v588
        %627 = vmatprep.subr.bf16.mxu0 0
        %628 = vmatpush1.bf16.msra.mxu0 %v587
        %629 = vmatprep.subr.bf16.mxu0 0
        %630 = vmatpush1.bf16.msra.mxu0 %v586
        %631 = vmatprep.subr.bf16.mxu0 0
        %632 = vmatpush1.bf16.msra.mxu0 %v585
        %633 = vmatprep.subr.bf16.mxu0 0
        %634 = vmatpush2.bf16.msra.mxu0 %v600
        %635 = vmatprep.subr.bf16.mxu0 0
        %636 = vmatpush2.bf16.msra.mxu0 %v599
        %637 = vmatprep.subr.bf16.mxu0 0
        %638 = vmatpush2.bf16.msra.mxu0 %v598
        %639 = vmatprep.subr.bf16.mxu0 0
        %640 = vmatpush2.bf16.msra.mxu0 %v597
        %641 = vmatprep.subr.bf16.mxu0 0
        %642 = vmatpush2.bf16.msra.mxu0 %v596
        %643 = vmatprep.subr.bf16.mxu0 0
        %644 = vmatpush2.bf16.msra.mxu0 %v595
        %645 = vmatprep.subr.bf16.mxu0 0
        %646 = vmatpush2.bf16.msra.mxu0 %v594
        %647 = vmatprep.subr.bf16.mxu0 0
        %648 = vmatpush2.bf16.msra.mxu0 %v593
        %649 = vmatprep.mubr.bf16.mxu0 %v481
        %650 = vmatmul.mubr.bf16.gmra.mxu0 %v480
        %v651 = vpop.f32.mrf.mxu0
        %v652 = vadd.f32 %v519, %v651
        %v653 = vpop.f32.mrf.mxu0
        %v654 = vpop.f32.mrf.mxu0
        %v655 = vadd.f32 %v519, %v654
        %v656 = vpop.f32.mrf.mxu0
        %657 = vdwg.mxu0
        %v658 = vadd.f32 %v281, %v652
        %v659 = vadd.f32 %v282, %v655
        %660 = vst [vmem:[%s272] sm:$0xff] %v658
        %661 = vst [vmem:[%s272 + $0x8] sm:$0xff] %v659
        %s662 = sand.u32 %s181, 1
        %s663 = scalar_lea.sflag [#allocation3], %s662
        %s664 = sand.u32 %s181, 1
        %s665 = smul.addr %s664, 16
        %s666 = scalar_lea.vmem [#allocation2], %s665
        // Predicated region
        $region49: #{decoder_layer_forward.5} parent=47 // pred_check
          %p667 = pneg %p191
        $region50: #{decoder_layer_forward.5} parent=47 // pred_check_branch
          %669 = sbr.rel (%p667) target = $region52
        $region51: #{decoder_layer_forward.5} parent=47 // pred_region
          %s670 = smul.u32 2, %s21
          %s672 = ssub.s32 256, 256
          %673 = vsyncadd %s663, %s672
          %s674 = smul.addr %s670, 128
          %s675 = scalar_lea.hbm %s7, %s674
          %s676 = sshll.u32 %s666, 4
          %s677 = int_to_ptr.vmem [resolvable:$true] %s676
          %682 = dma.vmem_to_hbm [thread:$0]  %s677, 256, %s675, %s663, 128, 128, 8
        $region52: #{decoder_layer_forward.5} parent=47 // pred_fallthru
          _
      $region48: #{decoder_layer_forward.5} parent=5 // pred_fallthru
        _
      %p683 = scmp.le.s32.totalorder 2, %s16
      // Predicated region
      $region53: #{decoder_layer_forward.5} parent=5 // pred_check
        %p684 = pneg %p683
      $region54: #{decoder_layer_forward.5} parent=5 // pred_check_branch
        %686 = sbr.rel (%p684) target = $region56
      $region55: #{decoder_layer_forward.5} parent=5 // pred_region
        %s687 = ssub.s32 %s16, 2
        // Predicated region
        $region57: #{decoder_layer_forward.5} parent=55 // pred_check
          %p688 = pneg %p197
        $region58: #{decoder_layer_forward.5} parent=55 // pred_check_branch
          %690 = sbr.rel (%p688) target = $region60
        $region59: #{decoder_layer_forward.5} parent=55 // pred_region
          %s691 = sand.u32 %s182, 1
          %s692 = scalar_lea.sflag [#allocation3], %s691
          %s693 = sand.u32 %s182, 1
          %s694 = smul.addr %s693, 16
          %s695 = scalar_lea.vmem [#allocation2], %s694
          %696 = dma.done %s692, 256
        $region60: #{decoder_layer_forward.5} parent=55 // pred_fallthru
          _
      $region56: #{decoder_layer_forward.5} parent=5 // pred_fallthru
        _
    $region6: #{decoder_layer_forward.5} parent=1 // loop_footer
      %s20 = sadd.s32 1, %s16
    $region7: #{decoder_layer_forward.5} parent=1 // loop_footer_branch
      %15 = sbr.rel target = $region3
    $region8: #{decoder_layer_forward.5} parent=1 // loop_exit
      _
    %697 = vsyncpa [#allocation3], 1
    %s698 = scalar_lea.sflag [#allocation3], 1
    %699 = vsyncpa %s698, 1

// kernel: decoder_layer_forward.4
$region0: #{decoder_layer_forward.4}
  #allocation0 [shape = 'u32[]', space=smem, size = 0x4, offset = 0x4, fixed_abs, tag = 'smem constant byte address 0x4 - core index']
  #allocation1 [shape = 'u32[144,128]{1,0:T(1,128)}', space=vmem, size = 0x12000, scoped, tag = 'internal scratch']
  %s0 = inlined_call_operand.vmem [shape: f32[32,128], index: 0, kind: input, shape index: {}]
  %s1 = inlined_call_operand.vmem [shape: f32[32,128], index: 1, kind: input, shape index: {}]
  %s2 = inlined_call_operand.vmem [shape: s32[2,1,16], index: 2, kind: input, shape index: {}]
  %s3 = inlined_call_operand.vmem [shape: f32[1,128], index: 3, kind: input, shape index: {}]
  %s4 = inlined_call_operand.vmem [shape: f32[1,128], index: 4, kind: input, shape index: {}]
  %s5 = inlined_call_operand.vmem [shape: bf16[128,128], index: 5, kind: input, shape index: {}]
  %s6 = inlined_call_operand.vmem [shape: f32[1,128], index: 6, kind: input, shape index: {}]
  %s7 = inlined_call_operand.vmem [shape: bf16[128,256], index: 7, kind: input, shape index: {}]
  %s8 = inlined_call_operand.vmem [shape: f32[1,256], index: 8, kind: input, shape index: {}]
  %s9 = inlined_call_operand.vmem [shape: bf16[128,128], index: 9, kind: input, shape index: {}]
  %s10 = inlined_call_operand.vmem [shape: f32[1,128], index: 10, kind: input, shape index: {}]
  %s11 = inlined_call_operand.vmem [shape: f32[32,128], index: 11, kind: output, shape index: {}]
  %s12 = sld [smem:[#allocation0]]
  $region77: #{decoder_layer_forward.4} parent=0
    _
  %s14 = ssub.s32 1, %s12
  %s15 = scalar_select 0, %s14, %s12
  loop: start=0, step=1, limit=4
  $region2: #{decoder_layer_forward.4} parent=0 // loop_pre_header
    _
  $region3: #{decoder_layer_forward.4} parent=0 // loop_header
    %s17 = sphi 0, %s21
    %p18 = scmp.ge.s32.totalorder %s17, 4
    %s27 = sphi 0, %s29
    %s30 = sphi 0, %s27
    %s31 = sphi 0, %s30
    %s47 = sphi 0, %s31
    %s53 = sphi 0, %s55
    %s56 = sphi 0, %s53
    %s57 = sphi 0, %s56
    %s73 = sphi 0, %s57
    %s79 = sphi 0, %s81
    %s82 = sphi 0, %s79
    %s83 = sphi 0, %s82
    %s99 = sphi 0, %s83
    %s103 = sphi 0, %s103
    %s105 = sphi 0, %s103
    %s106 = sphi 0, %s105
    %s120 = sphi 0, %s106
    %s124 = sphi 0, %s124
    %s126 = sphi 0, %s124
    %s127 = sphi 0, %s126
    %s141 = sphi 0, %s127
    %s145 = sphi 0, %s145
    %s147 = sphi 0, %s145
    %s148 = sphi 0, %s147
    %s162 = sphi 0, %s148
    %s166 = sphi 0, %s166
    %s168 = sphi 0, %s166
    %s169 = sphi 0, %s168
    %s183 = sphi 0, %s169
    %s187 = sphi 0, %s187
    %s189 = sphi 0, %s187
    %s190 = sphi 0, %s189
    %s204 = sphi 0, %s190
    %s208 = sphi 0, %s208
    %s210 = sphi 0, %s208
    %s211 = sphi 0, %s210
    %s225 = sphi 0, %s211
    %s229 = sphi 0, %s229
    %s231 = sphi 0, %s229
    %s232 = sphi 0, %s231
    %s246 = sphi 0, %s232
    %s250 = sphi 0, %s250
    %s252 = sphi 0, %s250
    %s253 = sphi 0, %s252
    %s267 = sphi 0, %s253
    %s273 = sphi 0, %s275
    %s276 = sphi 0, %s273
    %s277 = sphi 0, %s276
    %s293 = sphi 0, %s277
  $region4: #{decoder_layer_forward.4} parent=0 // loop_header_branch
    %20 = sbr.rel (%p18) target = $region8
  $region5: #{decoder_layer_forward.4} parent=0 // loop_body
    %s22 = ssub.s32 %s17, 1
    %s23 = ssub.s32 %s17, 2
    %s24 = sadd.s32 %s17, 1
    %s25 = ssub.s32 %s17, %s24
    %p26 = scmp.eq.s32.totalorder %s25, 0
    %s28 = sadd.s32 %s27, 1
    %s29 = scalar_select %p26, %s27, %s28
    %p32 = pneg %p26
    %p33 = scmp.eq.s32.totalorder %s17, 1
    %p34 = por %p32, %p33
    %p35 = scmp.ne.s32.totalorder %s27, %s30
    %p36 = scmp.eq.s32.totalorder %s17, 0
    %p37 = por %p35, %p36
    %p38 = scmp.ne.s32.totalorder %s27, %s30
    %p39 = scmp.eq.s32.totalorder %s22, 1
    %p40 = por %p38, %p39
    %p41 = scmp.ne.s32.totalorder %s30, %s31
    %p42 = scmp.eq.s32.totalorder %s22, 0
    %p43 = por %p41, %p42
    %p44 = scmp.ne.s32.totalorder %s30, %s31
    %p45 = scmp.eq.s32.totalorder %s23, 1
    %p46 = por %p44, %p45
    %p48 = scmp.ne.s32.totalorder %s31, %s47
    %p49 = scmp.eq.s32.totalorder %s23, 0
    %p50 = por %p48, %p49
    %s51 = ssub.s32 %s17, %s24
    %p52 = scmp.eq.s32.totalorder %s51, 0
    %s54 = sadd.s32 %s53, 1
    %s55 = scalar_select %p52, %s53, %s54
    %p58 = pneg %p52
    %p59 = scmp.eq.s32.totalorder %s17, 1
    %p60 = por %p58, %p59
    %p61 = scmp.ne.s32.totalorder %s53, %s56
    %p62 = scmp.eq.s32.totalorder %s17, 0
    %p63 = por %p61, %p62
    %p64 = scmp.ne.s32.totalorder %s53, %s56
    %p65 = scmp.eq.s32.totalorder %s22, 1
    %p66 = por %p64, %p65
    %p67 = scmp.ne.s32.totalorder %s56, %s57
    %p68 = scmp.eq.s32.totalorder %s22, 0
    %p69 = por %p67, %p68
    %p70 = scmp.ne.s32.totalorder %s56, %s57
    %p71 = scmp.eq.s32.totalorder %s23, 1
    %p72 = por %p70, %p71
    %p74 = scmp.ne.s32.totalorder %s57, %s73
    %p75 = scmp.eq.s32.totalorder %s23, 0
    %p76 = por %p74, %p75
    %s77 = ssub.s32 %s17, %s24
    %p78 = scmp.eq.s32.totalorder %s77, 0
    %s80 = sadd.s32 %s79, 1
    %s81 = scalar_select %p78, %s79, %s80
    %p84 = pneg %p78
    %p85 = scmp.eq.s32.totalorder %s17, 1
    %p86 = por %p84, %p85
    %p87 = scmp.ne.s32.totalorder %s79, %s82
    %p88 = scmp.eq.s32.totalorder %s17, 0
    %p89 = por %p87, %p88
    %p90 = scmp.ne.s32.totalorder %s79, %s82
    %p91 = scmp.eq.s32.totalorder %s22, 1
    %p92 = por %p90, %p91
    %p93 = scmp.ne.s32.totalorder %s82, %s83
    %p94 = scmp.eq.s32.totalorder %s22, 0
    %p95 = por %p93, %p94
    %p96 = scmp.ne.s32.totalorder %s82, %s83
    %p97 = scmp.eq.s32.totalorder %s23, 1
    %p98 = por %p96, %p97
    %p100 = scmp.ne.s32.totalorder %s83, %s99
    %p101 = scmp.eq.s32.totalorder %s23, 0
    %p102 = por %p100, %p101
    %s104 = sadd.s32 %s103, 1
    %p107 = scmp.eq.s32.totalorder %s17, 1
    %p108 = scmp.ne.s32.totalorder %s103, %s105
    %p109 = scmp.eq.s32.totalorder %s17, 0
    %p110 = por %p108, %p109
    %p111 = scmp.ne.s32.totalorder %s103, %s105
    %p112 = scmp.eq.s32.totalorder %s22, 1
    %p113 = por %p111, %p112
    %p114 = scmp.ne.s32.totalorder %s105, %s106
    %p115 = scmp.eq.s32.totalorder %s22, 0
    %p116 = por %p114, %p115
    %p117 = scmp.ne.s32.totalorder %s105, %s106
    %p118 = scmp.eq.s32.totalorder %s23, 1
    %p119 = por %p117, %p118
    %p121 = scmp.ne.s32.totalorder %s106, %s120
    %p122 = scmp.eq.s32.totalorder %s23, 0
    %p123 = por %p121, %p122
    %s125 = sadd.s32 %s124, 1
    %p128 = scmp.eq.s32.totalorder %s17, 1
    %p129 = scmp.ne.s32.totalorder %s124, %s126
    %p130 = scmp.eq.s32.totalorder %s17, 0
    %p131 = por %p129, %p130
    %p132 = scmp.ne.s32.totalorder %s124, %s126
    %p133 = scmp.eq.s32.totalorder %s22, 1
    %p134 = por %p132, %p133
    %p135 = scmp.ne.s32.totalorder %s126, %s127
    %p136 = scmp.eq.s32.totalorder %s22, 0
    %p137 = por %p135, %p136
    %p138 = scmp.ne.s32.totalorder %s126, %s127
    %p139 = scmp.eq.s32.totalorder %s23, 1
    %p140 = por %p138, %p139
    %p142 = scmp.ne.s32.totalorder %s127, %s141
    %p143 = scmp.eq.s32.totalorder %s23, 0
    %p144 = por %p142, %p143
    %s146 = sadd.s32 %s145, 1
    %p149 = scmp.eq.s32.totalorder %s17, 1
    %p150 = scmp.ne.s32.totalorder %s145, %s147
    %p151 = scmp.eq.s32.totalorder %s17, 0
    %p152 = por %p150, %p151
    %p153 = scmp.ne.s32.totalorder %s145, %s147
    %p154 = scmp.eq.s32.totalorder %s22, 1
    %p155 = por %p153, %p154
    %p156 = scmp.ne.s32.totalorder %s147, %s148
    %p157 = scmp.eq.s32.totalorder %s22, 0
    %p158 = por %p156, %p157
    %p159 = scmp.ne.s32.totalorder %s147, %s148
    %p160 = scmp.eq.s32.totalorder %s23, 1
    %p161 = por %p159, %p160
    %p163 = scmp.ne.s32.totalorder %s148, %s162
    %p164 = scmp.eq.s32.totalorder %s23, 0
    %p165 = por %p163, %p164
    %s167 = sadd.s32 %s166, 1
    %p170 = scmp.eq.s32.totalorder %s17, 1
    %p171 = scmp.ne.s32.totalorder %s166, %s168
    %p172 = scmp.eq.s32.totalorder %s17, 0
    %p173 = por %p171, %p172
    %p174 = scmp.ne.s32.totalorder %s166, %s168
    %p175 = scmp.eq.s32.totalorder %s22, 1
    %p176 = por %p174, %p175
    %p177 = scmp.ne.s32.totalorder %s168, %s169
    %p178 = scmp.eq.s32.totalorder %s22, 0
    %p179 = por %p177, %p178
    %p180 = scmp.ne.s32.totalorder %s168, %s169
    %p181 = scmp.eq.s32.totalorder %s23, 1
    %p182 = por %p180, %p181
    %p184 = scmp.ne.s32.totalorder %s169, %s183
    %p185 = scmp.eq.s32.totalorder %s23, 0
    %p186 = por %p184, %p185
    %s188 = sadd.s32 %s187, 1
    %p191 = scmp.eq.s32.totalorder %s17, 1
    %p192 = scmp.ne.s32.totalorder %s187, %s189
    %p193 = scmp.eq.s32.totalorder %s17, 0
    %p194 = por %p192, %p193
    %p195 = scmp.ne.s32.totalorder %s187, %s189
    %p196 = scmp.eq.s32.totalorder %s22, 1
    %p197 = por %p195, %p196
    %p198 = scmp.ne.s32.totalorder %s189, %s190
    %p199 = scmp.eq.s32.totalorder %s22, 0
    %p200 = por %p198, %p199
    %p201 = scmp.ne.s32.totalorder %s189, %s190
    %p202 = scmp.eq.s32.totalorder %s23, 1
    %p203 = por %p201, %p202
    %p205 = scmp.ne.s32.totalorder %s190, %s204
    %p206 = scmp.eq.s32.totalorder %s23, 0
    %p207 = por %p205, %p206
    %s209 = sadd.s32 %s208, 1
    %p212 = scmp.eq.s32.totalorder %s17, 1
    %p213 = scmp.ne.s32.totalorder %s208, %s210
    %p214 = scmp.eq.s32.totalorder %s17, 0
    %p215 = por %p213, %p214
    %p216 = scmp.ne.s32.totalorder %s208, %s210
    %p217 = scmp.eq.s32.totalorder %s22, 1
    %p218 = por %p216, %p217
    %p219 = scmp.ne.s32.totalorder %s210, %s211
    %p220 = scmp.eq.s32.totalorder %s22, 0
    %p221 = por %p219, %p220
    %p222 = scmp.ne.s32.totalorder %s210, %s211
    %p223 = scmp.eq.s32.totalorder %s23, 1
    %p224 = por %p222, %p223
    %p226 = scmp.ne.s32.totalorder %s211, %s225
    %p227 = scmp.eq.s32.totalorder %s23, 0
    %p228 = por %p226, %p227
    %s230 = sadd.s32 %s229, 1
    %p233 = scmp.eq.s32.totalorder %s17, 1
    %p234 = scmp.ne.s32.totalorder %s229, %s231
    %p235 = scmp.eq.s32.totalorder %s17, 0
    %p236 = por %p234, %p235
    %p237 = scmp.ne.s32.totalorder %s229, %s231
    %p238 = scmp.eq.s32.totalorder %s22, 1
    %p239 = por %p237, %p238
    %p240 = scmp.ne.s32.totalorder %s231, %s232
    %p241 = scmp.eq.s32.totalorder %s22, 0
    %p242 = por %p240, %p241
    %p243 = scmp.ne.s32.totalorder %s231, %s232
    %p244 = scmp.eq.s32.totalorder %s23, 1
    %p245 = por %p243, %p244
    %p247 = scmp.ne.s32.totalorder %s232, %s246
    %p248 = scmp.eq.s32.totalorder %s23, 0
    %p249 = por %p247, %p248
    %s251 = sadd.s32 %s250, 1
    %p254 = scmp.eq.s32.totalorder %s17, 1
    %p255 = scmp.ne.s32.totalorder %s250, %s252
    %p256 = scmp.eq.s32.totalorder %s17, 0
    %p257 = por %p255, %p256
    %p258 = scmp.ne.s32.totalorder %s250, %s252
    %p259 = scmp.eq.s32.totalorder %s22, 1
    %p260 = por %p258, %p259
    %p261 = scmp.ne.s32.totalorder %s252, %s253
    %p262 = scmp.eq.s32.totalorder %s22, 0
    %p263 = por %p261, %p262
    %p264 = scmp.ne.s32.totalorder %s252, %s253
    %p265 = scmp.eq.s32.totalorder %s23, 1
    %p266 = por %p264, %p265
    %p268 = scmp.ne.s32.totalorder %s253, %s267
    %p269 = scmp.eq.s32.totalorder %s23, 0
    %p270 = por %p268, %p269
    %s271 = ssub.s32 %s17, %s24
    %p272 = scmp.eq.s32.totalorder %s271, 0
    %s274 = sadd.s32 %s273, 1
    %s275 = scalar_select %p272, %s273, %s274
    %p278 = pneg %p272
    %p279 = scmp.eq.s32.totalorder %s17, 1
    %p280 = por %p278, %p279
    %p281 = scmp.ne.s32.totalorder %s273, %s276
    %p282 = scmp.eq.s32.totalorder %s17, 0
    %p283 = por %p281, %p282
    %p284 = scmp.ne.s32.totalorder %s273, %s276
    %p285 = scmp.eq.s32.totalorder %s22, 1
    %p286 = por %p284, %p285
    %p287 = scmp.ne.s32.totalorder %s276, %s277
    %p288 = scmp.eq.s32.totalorder %s22, 0
    %p289 = por %p287, %p288
    %p290 = scmp.ne.s32.totalorder %s276, %s277
    %p291 = scmp.eq.s32.totalorder %s23, 1
    %p292 = por %p290, %p291
    %p294 = scmp.ne.s32.totalorder %s277, %s293
    %p295 = scmp.eq.s32.totalorder %s23, 0
    %p296 = por %p294, %p295
    %p297 = scmp.le.s32.totalorder 1, %s17
    %p298 = scmp.lt.s32.totalorder %s17, 3
    %p299 = pnand %p297, %p298
    %p300 = pneg %p299
    // Predicated region
    $region9: #{decoder_layer_forward.4} parent=5 // pred_check
      _
    $region10: #{decoder_layer_forward.4} parent=5 // pred_check_branch
      %302 = sbr.rel (%p299) target = $region12
    $region11: #{decoder_layer_forward.4} parent=5 // pred_region
      %s303 = ssub.s32 %s17, 1
      // Predicated region
      $region13: #{decoder_layer_forward.4} parent=11 // pred_check
        %p304 = pneg %p116
      $region14: #{decoder_layer_forward.4} parent=11 // pred_check_branch
        %306 = sbr.rel (%p304) target = $region16
      $region15: #{decoder_layer_forward.4} parent=11 // pred_region
        _
      $region16: #{decoder_layer_forward.4} parent=11 // pred_fallthru
        _
      // Predicated region
      $region17: #{decoder_layer_forward.4} parent=11 // pred_check
        %p307 = pneg %p137
      $region18: #{decoder_layer_forward.4} parent=11 // pred_check_branch
        %309 = sbr.rel (%p307) target = $region20
      $region19: #{decoder_layer_forward.4} parent=11 // pred_region
        _
      $region20: #{decoder_layer_forward.4} parent=11 // pred_fallthru
        _
      // Predicated region
      $region21: #{decoder_layer_forward.4} parent=11 // pred_check
        %p310 = pneg %p158
      $region22: #{decoder_layer_forward.4} parent=11 // pred_check_branch
        %312 = sbr.rel (%p310) target = $region24
      $region23: #{decoder_layer_forward.4} parent=11 // pred_region
        _
      $region24: #{decoder_layer_forward.4} parent=11 // pred_fallthru
        _
      // Predicated region
      $region25: #{decoder_layer_forward.4} parent=11 // pred_check
        %p313 = pneg %p179
      $region26: #{decoder_layer_forward.4} parent=11 // pred_check_branch
        %315 = sbr.rel (%p313) target = $region28
      $region27: #{decoder_layer_forward.4} parent=11 // pred_region
        _
      $region28: #{decoder_layer_forward.4} parent=11 // pred_fallthru
        _
      // Predicated region
      $region29: #{decoder_layer_forward.4} parent=11 // pred_check
        %p316 = pneg %p200
      $region30: #{decoder_layer_forward.4} parent=11 // pred_check_branch
        %318 = sbr.rel (%p316) target = $region32
      $region31: #{decoder_layer_forward.4} parent=11 // pred_region
        _
      $region32: #{decoder_layer_forward.4} parent=11 // pred_fallthru
        _
      // Predicated region
      $region33: #{decoder_layer_forward.4} parent=11 // pred_check
        %p319 = pneg %p221
      $region34: #{decoder_layer_forward.4} parent=11 // pred_check_branch
        %321 = sbr.rel (%p319) target = $region36
      $region35: #{decoder_layer_forward.4} parent=11 // pred_region
        _
      $region36: #{decoder_layer_forward.4} parent=11 // pred_fallthru
        _
      // Predicated region
      $region37: #{decoder_layer_forward.4} parent=11 // pred_check
        %p322 = pneg %p242
      $region38: #{decoder_layer_forward.4} parent=11 // pred_check_branch
        %324 = sbr.rel (%p322) target = $region40
      $region39: #{decoder_layer_forward.4} parent=11 // pred_region
        _
      $region40: #{decoder_layer_forward.4} parent=11 // pred_fallthru
        _
      // Predicated region
      $region41: #{decoder_layer_forward.4} parent=11 // pred_check
        %p325 = pneg %p263
      $region42: #{decoder_layer_forward.4} parent=11 // pred_check_branch
        %327 = sbr.rel (%p325) target = $region44
      $region43: #{decoder_layer_forward.4} parent=11 // pred_region
        _
      $region44: #{decoder_layer_forward.4} parent=11 // pred_fallthru
        _
    $region12: #{decoder_layer_forward.4} parent=5 // pred_fallthru
      _
    %p328 = scmp.lt.s32.totalorder %s17, 2
    // Predicated region
    $region45: #{decoder_layer_forward.4} parent=5 // pred_check
      %p329 = pneg %p328
    $region46: #{decoder_layer_forward.4} parent=5 // pred_check_branch
      %331 = sbr.rel (%p329) target = $region48
    $region47: #{decoder_layer_forward.4} parent=5 // pred_region
      // Predicated region
      $region49: #{decoder_layer_forward.4} parent=47 // pred_check
        %p332 = pneg %p37
      $region50: #{decoder_layer_forward.4} parent=47 // pred_check_branch
        %334 = sbr.rel (%p332) target = $region52
      $region51: #{decoder_layer_forward.4} parent=47 // pred_region
        %s335 = smul.u32 2, %s17
        %p336 = scmp.lt.s32.totalorder %s335, 3
        %s337 = scalar_select %p336, %s335, 3
        %s338 = smul.addr %s337, 8
        %s339 = scalar_lea.vmem %s0, %s338
        %s340 = smul.u32 2, %s17
      $region52: #{decoder_layer_forward.4} parent=47 // pred_fallthru
        _
      // Predicated region
      $region53: #{decoder_layer_forward.4} parent=47 // pred_check
        %p341 = pneg %p63
      $region54: #{decoder_layer_forward.4} parent=47 // pred_check_branch
        %343 = sbr.rel (%p341) target = $region56
      $region55: #{decoder_layer_forward.4} parent=47 // pred_region
        %s344 = smul.u32 2, %s17
        %p345 = scmp.lt.s32.totalorder %s344, 3
        %s346 = scalar_select %p345, %s344, 3
        %s347 = smul.addr %s346, 8
        %s348 = scalar_lea.vmem %s1, %s347
        %s349 = smul.u32 2, %s17
      $region56: #{decoder_layer_forward.4} parent=47 // pred_fallthru
        _
      // Predicated region
      $region57: #{decoder_layer_forward.4} parent=47 // pred_check
        %p350 = pneg %p89
      $region58: #{decoder_layer_forward.4} parent=47 // pred_check_branch
        %352 = sbr.rel (%p350) target = $region60
      $region59: #{decoder_layer_forward.4} parent=47 // pred_region
        %p353 = scmp.lt.s32.totalorder %s17, 1
        %s354 = scalar_select %p353, %s17, 1
        %s355 = scalar_lea.vmem %s2, %s354
      $region60: #{decoder_layer_forward.4} parent=47 // pred_fallthru
        _
    $region48: #{decoder_layer_forward.4} parent=5 // pred_fallthru
      _
    %p356 = scmp.le.s32.totalorder 1, %s17
    %p357 = scmp.lt.s32.totalorder %s17, 3
    %p358 = pnand %p356, %p357
    %p359 = pneg %p358
    // Predicated region
    $region61: #{decoder_layer_forward.4} parent=5 // pred_check
      _
    $region62: #{decoder_layer_forward.4} parent=5 // pred_check_branch
      %361 = sbr.rel (%p358) target = $region64
    $region63: #{decoder_layer_forward.4} parent=5 // pred_region
      %s362 = ssub.s32 %s17, 1
      %s363 = smul.u32 2, %s22
      %p364 = scmp.lt.s32.totalorder %s363, 3
      %s365 = scalar_select %p364, %s363, 3
      %s366 = smul.addr %s365, 8
      %s367 = scalar_lea.vmem %s0, %s366
      %p368 = pneg %p43
      %p369 = pneg %p40
      %s370 = smul.u32 2, %s22
      %p371 = scmp.lt.s32.totalorder %s370, 3
      %s372 = scalar_select %p371, %s370, 3
      %s373 = smul.addr %s372, 8
      %s374 = scalar_lea.vmem %s1, %s373
      %p375 = pneg %p69
      %p376 = pneg %p66
      %p377 = scmp.lt.s32.totalorder %s22, 1
      %s378 = scalar_select %p377, %s22, 1
      %s379 = scalar_lea.vmem %s2, %s378
      %p380 = pneg %p95
      %p381 = pneg %p92
      %p382 = pneg %p116
      %p383 = pneg %p113
      %p384 = pneg %p137
      %p385 = pneg %p134
      %p386 = pneg %p158
      %p387 = pneg %p155
      %p388 = pneg %p179
      %p389 = pneg %p176
      %p390 = pneg %p200
      %p391 = pneg %p197
      %p392 = pneg %p221
      %p393 = pneg %p218
      %p394 = pneg %p242
      %p395 = pneg %p239
      %p396 = pneg %p263
      %p397 = pneg %p260
      %p398 = pneg %p289
      %p399 = pneg %p286
      %s400 = smul.u32 2, %s22
      %p401 = scmp.lt.s32.totalorder %s400, 3
      %s402 = scalar_select %p401, %s400, 3
      %s403 = smul.addr %s402, 8
      %s404 = scalar_lea.vmem %s11, %s403
      %s405 = smul.u32 2, %s22
      %p406 = scmp.lt.s32.totalorder %s405, 3
      %s407 = scalar_select %p406, %s405, 3
      %s408 = smul.addr %s407, 8
      %s409 = scalar_lea.vmem %s0, %s408
      %s410 = smul.u32 2, %s22
      %s411 = smul.u32 2, %s22
      %p412 = scmp.lt.s32.totalorder %s411, 3
      %s413 = scalar_select %p412, %s411, 3
      %s414 = smul.addr %s413, 8
      %s415 = scalar_lea.vmem %s1, %s414
      %s416 = smul.u32 2, %s22
      %p417 = scmp.lt.s32.totalorder %s22, 1
      %s418 = scalar_select %p417, %s22, 1
      %s419 = scalar_lea.vmem %s2, %s418
      %s420 = smul.u32 2, %s22
      %p421 = scmp.lt.s32.totalorder %s420, 3
      %s422 = scalar_select %p421, %s420, 3
      %s423 = smul.addr %s422, 8
      %s424 = scalar_lea.vmem %s11, %s423
      %s425 = smul.u32 2, %s22
      %v427 = vld [vmem:[%s409] sm:$0xff]
      %v428 = vld [vmem:[%s409 + $0x8] sm:$0xff]
      %v429 = vld [vmem:[%s3] sm:$0x1]
      %v430 = vld [vmem:[%s4] sm:$0x1]
      %431 = vadd.xlane.f32.xlu0 %v427
      %v432 = vpop.xlane.xlu0 %431
      %433 = vadd.xlane.f32.xlu0 %v428
      %v434 = vpop.xlane.xlu0 %433
      %v435 = vrcp.pop 128.0
      %v436 = vmul.f32 %v432, %v435
      %v437 = vmul.f32 %v434, %v435
      %v438 = vsub.f32 %v427, %v436
      %v439 = vsub.f32 %v428, %v437
      %v440 = vmul.f32 %v438, %v438
      %v441 = vmul.f32 %v439, %v439
      %442 = vadd.xlane.f32.xlu0 %v440
      %v443 = vpop.xlane.xlu0 %442
      %444 = vadd.xlane.f32.xlu0 %v441
      %v445 = vpop.xlane.xlu0 %444
      %v446 = vmul.f32 %v443, 0.007874016
      %v447 = vmul.f32 %v445, 0.007874016
      %v449 = vlaneseq
      %v450 = vshrl.u32 %v449, 7
      %v451 = vsub.s32 0, %v450
      %v452 = vrot.slane %v429, %v451
      %v454 = vmul.f32 %v452, %v438
      %v455 = vmul.f32 %v452, %v439
      %v456 = vadd.f32 %v446, 1e-06
      %v457 = vadd.f32 %v447, 1e-06
      %v458 = vrsqrt.pop %v456
      %v459 = vrsqrt.pop %v457
      %v460 = vmul.f32 %v454, %v458
      %v461 = vmul.f32 %v455, %v459
      %v463 = vlaneseq
      %v464 = vshrl.u32 %v463, 7
      %v465 = vsub.s32 0, %v464
      %v466 = vrot.slane %v430, %v465
      %v468 = vadd.f32 %v460, %v466
      %v469 = vadd.f32 %v461, %v466
      %v470 = vpack.c.bf16 %v469, %v468
      %v471 = vld [vmem:[%s5] sm:$0xf]
      %v472 = vld [vmem:[%s5 + $0x4] sm:$0xf]
      %v473 = vld [vmem:[%s5 + $0x8] sm:$0xf]
      %v474 = vld [vmem:[%s5 + $0xc] sm:$0xf]
      %v475 = vld [vmem:[%s5 + $0x10] sm:$0xf]
      %v476 = vld [vmem:[%s5 + $0x14] sm:$0xf]
      %v477 = vld [vmem:[%s5 + $0x18] sm:$0xf]
      %v478 = vld [vmem:[%s5 + $0x1c] sm:$0xf]
      %v479 = vld [vmem:[%s5 + $0x20] sm:$0xf]
      %v480 = vld [vmem:[%s5 + $0x24] sm:$0xf]
      %v481 = vld [vmem:[%s5 + $0x28] sm:$0xf]
      %v482 = vld [vmem:[%s5 + $0x2c] sm:$0xf]
      %v483 = vld [vmem:[%s5 + $0x30] sm:$0xf]
      %v484 = vld [vmem:[%s5 + $0x34] sm:$0xf]
      %v485 = vld [vmem:[%s5 + $0x38] sm:$0xf]
      %v486 = vld [vmem:[%s5 + $0x3c] sm:$0xf]
      %v487 = vld [vmem:[%s6] sm:$0x1]
      %v489 = vlaneseq
      %v490 = vshrl.u32 %v489, 7
      %v491 = vsub.s32 0, %v490
      %v492 = vrot.slane %v487, %v491
      %v510 = vunpack.c.l.b16 %v471
      %v511 = vunpack.c.l.b16 %v472
      %v512 = vunpack.c.l.b16 %v473
      %v513 = vunpack.c.l.b16 %v474
      %v514 = vunpack.c.l.b16 %v475
      %v515 = vunpack.c.l.b16 %v476
      %v516 = vunpack.c.l.b16 %v477
      %v517 = vunpack.c.l.b16 %v478
      %v518 = vunpack.c.l.b16 %v479
      %v519 = vunpack.c.l.b16 %v480
      %v520 = vunpack.c.l.b16 %v481
      %v521 = vunpack.c.l.b16 %v482
      %v522 = vunpack.c.l.b16 %v483
      %v523 = vunpack.c.l.b16 %v484
      %v524 = vunpack.c.l.b16 %v485
      %v525 = vunpack.c.l.b16 %v486
      %v526 = vpack.c.b16 %v511, %v510
      %v527 = vpack.c.b16 %v513, %v512
      %v528 = vpack.c.b16 %v515, %v514
      %v529 = vpack.c.b16 %v517, %v516
      %v530 = vpack.c.b16 %v519, %v518
      %v531 = vpack.c.b16 %v521, %v520
      %v532 = vpack.c.b16 %v523, %v522
      %v533 = vpack.c.b16 %v525, %v524
      %542 = vmatprep.subr.bf16.mxu0 0
      %543 = vmatpush1.bf16.msra.mxu0 %v533
      %544 = vmatprep.subr.bf16.mxu0 0
      %545 = vmatpush1.bf16.msra.mxu0 %v532
      %546 = vmatprep.subr.bf16.mxu0 0
      %547 = vmatpush1.bf16.msra.mxu0 %v531
      %548 = vmatprep.subr.bf16.mxu0 0
      %549 = vmatpush1.bf16.msra.mxu0 %v530
      %550 = vmatprep.subr.bf16.mxu0 0
      %551 = vmatpush1.bf16.msra.mxu0 %v529
      %552 = vmatprep.subr.bf16.mxu0 0
      %553 = vmatpush1.bf16.msra.mxu0 %v528
      %554 = vmatprep.subr.bf16.mxu0 0
      %555 = vmatpush1.bf16.msra.mxu0 %v527
      %556 = vmatprep.subr.bf16.mxu0 0
      %557 = vmatpush1.bf16.msra.mxu0 %v526
      %558 = vmatprep.subr.bf16.mxu0 0
      %559 = vmatpush2.bf16.msra.mxu0 0
      %560 = vmatprep.subr.bf16.mxu0 0
      %561 = vmatpush2.bf16.msra.mxu0 0
      %562 = vmatprep.subr.bf16.mxu0 0
      %563 = vmatpush2.bf16.msra.mxu0 0
      %564 = vmatprep.subr.bf16.mxu0 0
      %565 = vmatpush2.bf16.msra.mxu0 0
      %566 = vmatprep.subr.bf16.mxu0 0
      %567 = vmatpush2.bf16.msra.mxu0 0
      %568 = vmatprep.subr.bf16.mxu0 0
      %569 = vmatpush2.bf16.msra.mxu0 0
      %570 = vmatprep.subr.bf16.mxu0 0
      %571 = vmatpush2.bf16.msra.mxu0 0
      %572 = vmatprep.subr.bf16.mxu0 0
      %573 = vmatpush2.bf16.msra.mxu0 0
      %574 = vmatprep.mubr.bf16.mxu0 0
      %575 = vmatmul.mubr.bf16.gmra.mxu0 %v470
      %v576 = vpop.f32.mrf.mxu0
      %v577 = vadd.f32 %v492, %v576
      %v578 = vpop.f32.mrf.mxu0
      %v579 = vpop.f32.mrf.mxu0
      %v580 = vadd.f32 %v492, %v579
      %v581 = vpop.f32.mrf.mxu0
      %582 = vdwg.mxu0
      %v583 = vld [vmem:[%s415] sm:$0xff]
      %v584 = vld [vmem:[%s415 + $0x8] sm:$0xff]
      %v585 = vpack.c.bf16 %v584, %v583
      %v586 = vld [vmem:[%s7] sm:$0xff]
      %v587 = vld [vmem:[%s7 + $0x8] sm:$0xff]
      %v588 = vld [vmem:[%s7 + $0x10] sm:$0xff]
      %v589 = vld [vmem:[%s7 + $0x18] sm:$0xff]
      %v590 = vld [vmem:[%s7 + $0x20] sm:$0xff]
      %v591 = vld [vmem:[%s7 + $0x28] sm:$0xff]
      %v592 = vld [vmem:[%s7 + $0x30] sm:$0xff]
      %v593 = vld [vmem:[%s7 + $0x38] sm:$0xff]
      %v594 = vld [vmem:[%s7 + $0x40] sm:$0xff]
      %v595 = vld [vmem:[%s7 + $0x48] sm:$0xff]
      %v596 = vld [vmem:[%s7 + $0x50] sm:$0xff]
      %v597 = vld [vmem:[%s7 + $0x58] sm:$0xff]
      %v598 = vld [vmem:[%s7 + $0x60] sm:$0xff]
      %v599 = vld [vmem:[%s7 + $0x68] sm:$0xff]
      %v600 = vld [vmem:[%s7 + $0x70] sm:$0xff]
      %v601 = vld [vmem:[%s7 + $0x78] sm:$0xff]
      %v602 = vld [vmem:[%s8] sm:$0x3]
      %v604 = vlaneseq
      %v605 = vshrl.u32 %v604, 7
      %v606 = vsub.s32 0, %v605
      %v607 = vrot.slane %v602, %v606
      %v608 = vlaneseq
      %v609 = vshrl.u32 %v608, 7
      %v610 = vsub.s32 1, %v609
      %v611 = vrot.slane %v602, %v610
      %v630 = vunpack.c.l.b16 %v586
      %v631 = vunpack.c.h.b16 %v586
      %v632 = vunpack.c.l.b16 %v587
      %v633 = vunpack.c.h.b16 %v587
      %v634 = vunpack.c.l.b16 %v588
      %v635 = vunpack.c.h.b16 %v588
      %v636 = vunpack.c.l.b16 %v589
      %v637 = vunpack.c.h.b16 %v589
      %v638 = vunpack.c.l.b16 %v590
      %v639 = vunpack.c.h.b16 %v590
      %v640 = vunpack.c.l.b16 %v591
      %v641 = vunpack.c.h.b16 %v591
      %v642 = vunpack.c.l.b16 %v592
      %v643 = vunpack.c.h.b16 %v592
      %v644 = vunpack.c.l.b16 %v593
      %v645 = vunpack.c.h.b16 %v593
      %v646 = vunpack.c.l.b16 %v594
      %v647 = vunpack.c.h.b16 %v594
      %v648 = vunpack.c.l.b16 %v595
      %v649 = vunpack.c.h.b16 %v595
      %v650 = vunpack.c.l.b16 %v596
      %v651 = vunpack.c.h.b16 %v596
      %v652 = vunpack.c.l.b16 %v597
      %v653 = vunpack.c.h.b16 %v597
      %v654 = vunpack.c.l.b16 %v598
      %v655 = vunpack.c.h.b16 %v598
      %v656 = vunpack.c.l.b16 %v599
      %v657 = vunpack.c.h.b16 %v599
      %v658 = vunpack.c.l.b16 %v600
      %v659 = vunpack.c.h.b16 %v600
      %v660 = vunpack.c.l.b16 %v601
      %v661 = vunpack.c.h.b16 %v601
      %v662 = vpack.c.b16 %v632, %v630
      %v663 = vpack.c.b16 %v633, %v631
      %v664 = vpack.c.b16 %v636, %v634
      %v665 = vpack.c.b16 %v637, %v635
      %v666 = vpack.c.b16 %v640, %v638
      %v667 = vpack.c.b16 %v641, %v639
      %v668 = vpack.c.b16 %v644, %v642
      %v669 = vpack.c.b16 %v645, %v643
      %v670 = vpack.c.b16 %v648, %v646
      %v671 = vpack.c.b16 %v649, %v647
      %v672 = vpack.c.b16 %v652, %v650
      %v673 = vpack.c.b16 %v653, %v651
      %v674 = vpack.c.b16 %v656, %v654
      %v675 = vpack.c.b16 %v657, %v655
      %v676 = vpack.c.b16 %v660, %v658
      %v677 = vpack.c.b16 %v661, %v659
      %694 = vmatprep.subr.bf16.mxu0 %v677
      %695 = vmatpush1.bf16.msra.mxu0 %v676
      %696 = vmatprep.subr.bf16.mxu0 %v675
      %697 = vmatpush1.bf16.msra.mxu0 %v674
      %698 = vmatprep.subr.bf16.mxu0 %v673
      %699 = vmatpush1.bf16.msra.mxu0 %v672
      %700 = vmatprep.subr.bf16.mxu0 %v671
      %701 = vmatpush1.bf16.msra.mxu0 %v670
      %702 = vmatprep.subr.bf16.mxu0 %v669
      %703 = vmatpush1.bf16.msra.mxu0 %v668
      %704 = vmatprep.subr.bf16.mxu0 %v667
      %705 = vmatpush1.bf16.msra.mxu0 %v666
      %706 = vmatprep.subr.bf16.mxu0 %v665
      %707 = vmatpush1.bf16.msra.mxu0 %v664
      %708 = vmatprep.subr.bf16.mxu0 %v663
      %709 = vmatpush1.bf16.msra.mxu0 %v662
      %710 = vmatprep.subr.bf16.mxu0 0
      %711 = vmatpush2.bf16.msra.mxu0 0
      %712 = vmatprep.subr.bf16.mxu0 0
      %713 = vmatpush2.bf16.msra.mxu0 0
      %714 = vmatprep.subr.bf16.mxu0 0
      %715 = vmatpush2.bf16.msra.mxu0 0
      %716 = vmatprep.subr.bf16.mxu0 0
      %717 = vmatpush2.bf16.msra.mxu0 0
      %718 = vmatprep.subr.bf16.mxu0 0
      %719 = vmatpush2.bf16.msra.mxu0 0
      %720 = vmatprep.subr.bf16.mxu0 0
      %721 = vmatpush2.bf16.msra.mxu0 0
      %722 = vmatprep.subr.bf16.mxu0 0
      %723 = vmatpush2.bf16.msra.mxu0 0
      %724 = vmatprep.subr.bf16.mxu0 0
      %725 = vmatpush2.bf16.msra.mxu0 0
      %726 = vmatprep.mubr.bf16.mxu0 0
      %727 = vmatmul.mubr.bf16.gmra.mxu0 %v585
      %v728 = vpop.f32.mrf.mxu0
      %v729 = vadd.f32 %v607, %v728
      %v730 = vpop.f32.mrf.mxu0
      %v731 = vadd.f32 %v611, %v730
      %v732 = vpop.f32.mrf.mxu0
      %v733 = vadd.f32 %v607, %v732
      %v734 = vpop.f32.mrf.mxu0
      %v735 = vadd.f32 %v611, %v734
      %736 = vdwg.mxu0
      %v737 = vld [vmem:[%s419] sm:$0x1]
      %vm738 = vcmp.eq.s32.totalorder %v737, 0
      %v739 = vpack.c.bf16 %v580, %v577
      %v740 = vpack.c.bf16 %v733, %v729
      %v741 = vpack.c.bf16 %v735, %v731
      %vm742 = vcmask 261120
      %v744 = vsel %vm742, %v739, 0
      %v747 = vsel %vm742, %v740, 0
      %749 = vmatprep.subr.bf16.mxu0 0
      %750 = vmatpush1.bf16.xpose.msra.mxu0 0
      %751 = vmatprep.subr.bf16.mxu0 0
      %752 = vmatpush1.bf16.xpose.msra.mxu0 0
      %753 = vmatprep.subr.bf16.mxu0 0
      %754 = vmatpush1.bf16.xpose.msra.mxu0 0
      %755 = vmatprep.subr.bf16.mxu0 0
      %756 = vmatpush1.bf16.xpose.msra.mxu0 0
      %757 = vmatprep.subr.bf16.mxu0 0
      %758 = vmatpush1.bf16.xpose.msra.mxu0 0
      %759 = vmatprep.subr.bf16.mxu0 0
      %760 = vmatpush1.bf16.xpose.msra.mxu0 0
      %761 = vmatprep.subr.bf16.mxu0 0
      %762 = vmatpush1.bf16.xpose.msra.mxu0 0
      %763 = vmatprep.subr.bf16.mxu0 0
      %764 = vmatpush1.bf16.xpose.msra.mxu0 %v747
      %765 = vmatprep.subr.bf16.mxu0 0
      %766 = vmatpush2.bf16.xpose.msra.mxu0 0
      %767 = vmatprep.subr.bf16.mxu0 0
      %768 = vmatpush2.bf16.xpose.msra.mxu0 0
      %769 = vmatprep.subr.bf16.mxu0 0
      %770 = vmatpush2.bf16.xpose.msra.mxu0 0
      %771 = vmatprep.subr.bf16.mxu0 0
      %772 = vmatpush2.bf16.xpose.msra.mxu0 0
      %773 = vmatprep.subr.bf16.mxu0 0
      %774 = vmatpush2.bf16.xpose.msra.mxu0 0
      %775 = vmatprep.subr.bf16.mxu0 0
      %776 = vmatpush2.bf16.xpose.msra.mxu0 0
      %777 = vmatprep.subr.bf16.mxu0 0
      %778 = vmatpush2.bf16.xpose.msra.mxu0 0
      %779 = vmatprep.subr.bf16.mxu0 0
      %780 = vmatpush2.bf16.xpose.msra.mxu0 0
      %781 = vmatprep.mubr.bf16.mxu0 0
      %782 = vmatmul.mubr.bf16.gmra.mxu0 %v744
      %v783 = vpop.f32.mrf.mxu0
      %v784 = vadd.f32 0.0, %v783
      %v785 = vpop.f32.mrf.mxu0
      %v786 = vpop.f32.mrf.mxu0
      %v787 = vadd.f32 0.0, %v786
      %v788 = vpop.f32.mrf.mxu0
      %789 = vdwg.mxu0
      %v790 = vmul.f32 %v784, 0.17677669
      %v791 = vmul.f32 %v787, 0.17677669
      %v792 = vsel %vm738, 1, 0
      %v793 = vlaneseq
      %v794 = vshrl.u32 %v793, 7
      %v795 = vsub.s32 0, %v794
      %v796 = vrot.slane %v792, %v795
      %vm797 = vcmp.eq.s32.totalorder %v796, 1
      %v798 = vsel %vm797, -1e+09, %v790
      %v799 = vsel %vm797, -1e+09, %v791
      %vm800 = vcmask 130048
      %v801 = vsel %vm800, %v798, -inf
      %802 = vmax.xlane.f32.xlu0 %v801
      %v803 = vpop.xlane.xlu0 %802
      %v804 = vsel %vm800, %v799, -inf
      %805 = vmax.xlane.f32.xlu0 %v804
      %v806 = vpop.xlane.xlu0 %805
      %v807 = vsub.f32 %v798, %v803
      %v808 = vsub.f32 %v799, %v806
      %v809 = vmul.f32 %v807, 1.442695
      %v810 = vpow.pop %v809
      %v811 = vmul.f32 %v808, 1.442695
      %v812 = vpow.pop %v811
      %v813 = vsel %vm800, %v810, 0.0
      %814 = vadd.xlane.f32.xlu0 %v813
      %v815 = vpop.xlane.xlu0 %814
      %v816 = vsel %vm800, %v812, 0.0
      %817 = vadd.xlane.f32.xlu0 %v816
      %v818 = vpop.xlane.xlu0 %817
      %v819 = vrcp.pop %v815
      %v820 = vrcp.pop %v818
      %v821 = vmul.f32 %v810, %v819
      %v822 = vmul.f32 %v812, %v820
      %v823 = vpack.c.bf16 %v822, %v821
      %v825 = vsel %vm800, %v823, 0
      %827 = vmatprep.subr.bf16.mxu0 0
      %828 = vmatpush1.bf16.msra.mxu0 0
      %829 = vmatprep.subr.bf16.mxu0 0
      %830 = vmatpush1.bf16.msra.mxu0 0
      %831 = vmatprep.subr.bf16.mxu0 0
      %832 = vmatpush1.bf16.msra.mxu0 0
      %833 = vmatprep.subr.bf16.mxu0 0
      %834 = vmatpush1.bf16.msra.mxu0 0
      %835 = vmatprep.subr.bf16.mxu0 0
      %836 = vmatpush1.bf16.msra.mxu0 0
      %837 = vmatprep.subr.bf16.mxu0 0
      %838 = vmatpush1.bf16.msra.mxu0 0
      %839 = vmatprep.subr.bf16.mxu0 0
      %840 = vmatpush1.bf16.msra.mxu0 0
      %841 = vmatprep.subr.bf16.mxu0 0
      %842 = vmatpush1.bf16.msra.mxu0 %v741
      %843 = vmatprep.subr.bf16.mxu0 0
      %844 = vmatpush2.bf16.msra.mxu0 0
      %845 = vmatprep.subr.bf16.mxu0 0
      %846 = vmatpush2.bf16.msra.mxu0 0
      %847 = vmatprep.subr.bf16.mxu0 0
      %848 = vmatpush2.bf16.msra.mxu0 0
      %849 = vmatprep.subr.bf16.mxu0 0
      %850 = vmatpush2.bf16.msra.mxu0 0
      %851 = vmatprep.subr.bf16.mxu0 0
      %852 = vmatpush2.bf16.msra.mxu0 0
      %853 = vmatprep.subr.bf16.mxu0 0
      %854 = vmatpush2.bf16.msra.mxu0 0
      %855 = vmatprep.subr.bf16.mxu0 0
      %856 = vmatpush2.bf16.msra.mxu0 0
      %857 = vmatprep.subr.bf16.mxu0 0
      %858 = vmatpush2.bf16.msra.mxu0 0
      %859 = vmatprep.mubr.bf16.mxu0 0
      %860 = vmatmul.mubr.bf16.gmra.mxu0 %v825
      %v861 = vpop.f32.mrf.mxu0
      %v862 = vadd.f32 0.0, %v861
      %v863 = vpop.f32.mrf.mxu0
      %v864 = vpop.f32.mrf.mxu0
      %v865 = vadd.f32 0.0, %v864
      %v866 = vpop.f32.mrf.mxu0
      %867 = vdwg.mxu0
      %869 = vrot.lane.b32.xlu0 %v739, 96
      %v870 = vpop.permute.xlu0 %869
      %872 = vrot.lane.b32.xlu0 %v740, 96
      %v873 = vpop.permute.xlu0 %872
      %v875 = vsel %vm742, %v870, 0
      %v878 = vsel %vm742, %v873, 0
      %880 = vmatprep.subr.bf16.mxu0 0
      %881 = vmatpush1.bf16.xpose.msra.mxu0 0
      %882 = vmatprep.subr.bf16.mxu0 0
      %883 = vmatpush1.bf16.xpose.msra.mxu0 0
      %884 = vmatprep.subr.bf16.mxu0 0
      %885 = vmatpush1.bf16.xpose.msra.mxu0 0
      %886 = vmatprep.subr.bf16.mxu0 0
      %887 = vmatpush1.bf16.xpose.msra.mxu0 0
      %888 = vmatprep.subr.bf16.mxu0 0
      %889 = vmatpush1.bf16.xpose.msra.mxu0 0
      %890 = vmatprep.subr.bf16.mxu0 0
      %891 = vmatpush1.bf16.xpose.msra.mxu0 0
      %892 = vmatprep.subr.bf16.mxu0 0
      %893 = vmatpush1.bf16.xpose.msra.mxu0 0
      %894 = vmatprep.subr.bf16.mxu0 0
      %895 = vmatpush1.bf16.xpose.msra.mxu0 %v878
      %896 = vmatprep.subr.bf16.mxu0 0
      %897 = vmatpush2.bf16.xpose.msra.mxu0 0
      %898 = vmatprep.subr.bf16.mxu0 0
      %899 = vmatpush2.bf16.xpose.msra.mxu0 0
      %900 = vmatprep.subr.bf16.mxu0 0
      %901 = vmatpush2.bf16.xpose.msra.mxu0 0
      %902 = vmatprep.subr.bf16.mxu0 0
      %903 = vmatpush2.bf16.xpose.msra.mxu0 0
      %904 = vmatprep.subr.bf16.mxu0 0
      %905 = vmatpush2.bf16.xpose.msra.mxu0 0
      %906 = vmatprep.subr.bf16.mxu0 0
      %907 = vmatpush2.bf16.xpose.msra.mxu0 0
      %908 = vmatprep.subr.bf16.mxu0 0
      %909 = vmatpush2.bf16.xpose.msra.mxu0 0
      %910 = vmatprep.subr.bf16.mxu0 0
      %911 = vmatpush2.bf16.xpose.msra.mxu0 0
      %912 = vmatprep.mubr.bf16.mxu0 0
      %913 = vmatmul.mubr.bf16.gmra.mxu0 %v875
      %v914 = vpop.f32.mrf.mxu0
      %v915 = vadd.f32 0.0, %v914
      %v916 = vpop.f32.mrf.mxu0
      %v917 = vpop.f32.mrf.mxu0
      %v918 = vadd.f32 0.0, %v917
      %v919 = vpop.f32.mrf.mxu0
      %920 = vdwg.mxu0
      %v921 = vmul.f32 %v915, 0.17677669
      %v922 = vmul.f32 %v918, 0.17677669
      %v923 = vsel %vm797, -1e+09, %v921
      %v924 = vsel %vm797, -1e+09, %v922
      %v925 = vsel %vm800, %v923, -inf
      %926 = vmax.xlane.f32.xlu0 %v925
      %v927 = vpop.xlane.xlu0 %926
      %v928 = vsel %vm800, %v924, -inf
      %929 = vmax.xlane.f32.xlu0 %v928
      %v930 = vpop.xlane.xlu0 %929
      %v931 = vsub.f32 %v923, %v927
      %v932 = vsub.f32 %v924, %v930
      %v933 = vmul.f32 %v931, 1.442695
      %v934 = vpow.pop %v933
      %v935 = vmul.f32 %v932, 1.442695
      %v936 = vpow.pop %v935
      %v937 = vsel %vm800, %v934, 0.0
      %938 = vadd.xlane.f32.xlu0 %v937
      %v939 = vpop.xlane.xlu0 %938
      %v940 = vsel %vm800, %v936, 0.0
      %941 = vadd.xlane.f32.xlu0 %v940
      %v942 = vpop.xlane.xlu0 %941
      %v943 = vrcp.pop %v939
      %v944 = vrcp.pop %v942
      %v945 = vmul.f32 %v934, %v943
      %v946 = vmul.f32 %v936, %v944
      %v947 = vpack.c.bf16 %v946, %v945
      %949 = vrot.lane.b32.xlu0 %v741, 96
      %v950 = vpop.permute.xlu0 %949
      %v953 = vsel %vm800, %v947, 0
      %955 = vmatprep.subr.bf16.mxu0 0
      %956 = vmatpush1.bf16.msra.mxu0 0
      %957 = vmatprep.subr.bf16.mxu0 0
      %958 = vmatpush1.bf16.msra.mxu0 0
      %959 = vmatprep.subr.bf16.mxu0 0
      %960 = vmatpush1.bf16.msra.mxu0 0
      %961 = vmatprep.subr.bf16.mxu0 0
      %962 = vmatpush1.bf16.msra.mxu0 0
      %963 = vmatprep.subr.bf16.mxu0 0
      %964 = vmatpush1.bf16.msra.mxu0 0
      %965 = vmatprep.subr.bf16.mxu0 0
      %966 = vmatpush1.bf16.msra.mxu0 0
      %967 = vmatprep.subr.bf16.mxu0 0
      %968 = vmatpush1.bf16.msra.mxu0 0
      %969 = vmatprep.subr.bf16.mxu0 0
      %970 = vmatpush1.bf16.msra.mxu0 %v950
      %971 = vmatprep.subr.bf16.mxu0 0
      %972 = vmatpush2.bf16.msra.mxu0 0
      %973 = vmatprep.subr.bf16.mxu0 0
      %974 = vmatpush2.bf16.msra.mxu0 0
      %975 = vmatprep.subr.bf16.mxu0 0
      %976 = vmatpush2.bf16.msra.mxu0 0
      %977 = vmatprep.subr.bf16.mxu0 0
      %978 = vmatpush2.bf16.msra.mxu0 0
      %979 = vmatprep.subr.bf16.mxu0 0
      %980 = vmatpush2.bf16.msra.mxu0 0
      %981 = vmatprep.subr.bf16.mxu0 0
      %982 = vmatpush2.bf16.msra.mxu0 0
      %983 = vmatprep.subr.bf16.mxu0 0
      %984 = vmatpush2.bf16.msra.mxu0 0
      %985 = vmatprep.subr.bf16.mxu0 0
      %986 = vmatpush2.bf16.msra.mxu0 0
      %987 = vmatprep.mubr.bf16.mxu0 0
      %988 = vmatmul.mubr.bf16.gmra.mxu0 %v953
      %v989 = vpop.f32.mrf.mxu0
      %v990 = vadd.f32 0.0, %v989
      %v991 = vpop.f32.mrf.mxu0
      %v992 = vpop.f32.mrf.mxu0
      %v993 = vadd.f32 0.0, %v992
      %v994 = vpop.f32.mrf.mxu0
      %995 = vdwg.mxu0
      %996 = vrot.lane.b32.xlu0 %v739, 64
      %v997 = vpop.permute.xlu0 %996
      %998 = vrot.lane.b32.xlu0 %v740, 64
      %v999 = vpop.permute.xlu0 %998
      %v1001 = vsel %vm742, %v997, 0
      %v1004 = vsel %vm742, %v999, 0
      %1006 = vmatprep.subr.bf16.mxu0 0
      %1007 = vmatpush1.bf16.xpose.msra.mxu0 0
      %1008 = vmatprep.subr.bf16.mxu0 0
      %1009 = vmatpush1.bf16.xpose.msra.mxu0 0
      %1010 = vmatprep.subr.bf16.mxu0 0
      %1011 = vmatpush1.bf16.xpose.msra.mxu0 0
      %1012 = vmatprep.subr.bf16.mxu0 0
      %1013 = vmatpush1.bf16.xpose.msra.mxu0 0
      %1014 = vmatprep.subr.bf16.mxu0 0
      %1015 = vmatpush1.bf16.xpose.msra.mxu0 0
      %1016 = vmatprep.subr.bf16.mxu0 0
      %1017 = vmatpush1.bf16.xpose.msra.mxu0 0
      %1018 = vmatprep.subr.bf16.mxu0 0
      %1019 = vmatpush1.bf16.xpose.msra.mxu0 0
      %1020 = vmatprep.subr.bf16.mxu0 0
      %1021 = vmatpush1.bf16.xpose.msra.mxu0 %v1004
      %1022 = vmatprep.subr.bf16.mxu0 0
      %1023 = vmatpush2.bf16.xpose.msra.mxu0 0
      %1024 = vmatprep.subr.bf16.mxu0 0
      %1025 = vmatpush2.bf16.xpose.msra.mxu0 0
      %1026 = vmatprep.subr.bf16.mxu0 0
      %1027 = vmatpush2.bf16.xpose.msra.mxu0 0
      %1028 = vmatprep.subr.bf16.mxu0 0
      %1029 = vmatpush2.bf16.xpose.msra.mxu0 0
      %1030 = vmatprep.subr.bf16.mxu0 0
      %1031 = vmatpush2.bf16.xpose.msra.mxu0 0
      %1032 = vmatprep.subr.bf16.mxu0 0
      %1033 = vmatpush2.bf16.xpose.msra.mxu0 0
      %1034 = vmatprep.subr.bf16.mxu0 0
      %1035 = vmatpush2.bf16.xpose.msra.mxu0 0
      %1036 = vmatprep.subr.bf16.mxu0 0
      %1037 = vmatpush2.bf16.xpose.msra.mxu0 0
      %1038 = vmatprep.mubr.bf16.mxu0 0
      %1039 = vmatmul.mubr.bf16.gmra.mxu0 %v1001
      %v1040 = vpop.f32.mrf.mxu0
      %v1041 = vadd.f32 0.0, %v1040
      %v1042 = vpop.f32.mrf.mxu0
      %v1043 = vpop.f32.mrf.mxu0
      %v1044 = vadd.f32 0.0, %v1043
      %v1045 = vpop.f32.mrf.mxu0
      %1046 = vdwg.mxu0
      %v1047 = vmul.f32 %v1041, 0.17677669
      %v1048 = vmul.f32 %v1044, 0.17677669
      %v1049 = vsel %vm797, -1e+09, %v1047
      %v1050 = vsel %vm797, -1e+09, %v1048
      %v1051 = vsel %vm800, %v1049, -inf
      %1052 = vmax.xlane.f32.xlu0 %v1051
      %v1053 = vpop.xlane.xlu0 %1052
      %v1054 = vsel %vm800, %v1050, -inf
      %1055 = vmax.xlane.f32.xlu0 %v1054
      %v1056 = vpop.xlane.xlu0 %1055
      %v1057 = vsub.f32 %v1049, %v1053
      %v1058 = vsub.f32 %v1050, %v1056
      %v1059 = vmul.f32 %v1057, 1.442695
      %v1060 = vpow.pop %v1059
      %v1061 = vmul.f32 %v1058, 1.442695
      %v1062 = vpow.pop %v1061
      %v1063 = vsel %vm800, %v1060, 0.0
      %1064 = vadd.xlane.f32.xlu0 %v1063
      %v1065 = vpop.xlane.xlu0 %1064
      %v1066 = vsel %vm800, %v1062, 0.0
      %1067 = vadd.xlane.f32.xlu0 %v1066
      %v1068 = vpop.xlane.xlu0 %1067
      %v1069 = vrcp.pop %v1065
      %v1070 = vrcp.pop %v1068
      %v1071 = vmul.f32 %v1060, %v1069
      %v1072 = vmul.f32 %v1062, %v1070
      %v1073 = vpack.c.bf16 %v1072, %v1071
      %1074 = vrot.lane.b32.xlu0 %v741, 64
      %v1075 = vpop.permute.xlu0 %1074
      %v1078 = vsel %vm800, %v1073, 0
      %1080 = vmatprep.subr.bf16.mxu0 0
      %1081 = vmatpush1.bf16.msra.mxu0 0
      %1082 = vmatprep.subr.bf16.mxu0 0
      %1083 = vmatpush1.bf16.msra.mxu0 0
      %1084 = vmatprep.subr.bf16.mxu0 0
      %1085 = vmatpush1.bf16.msra.mxu0 0
      %1086 = vmatprep.subr.bf16.mxu0 0
      %1087 = vmatpush1.bf16.msra.mxu0 0
      %1088 = vmatprep.subr.bf16.mxu0 0
      %1089 = vmatpush1.bf16.msra.mxu0 0
      %1090 = vmatprep.subr.bf16.mxu0 0
      %1091 = vmatpush1.bf16.msra.mxu0 0
      %1092 = vmatprep.subr.bf16.mxu0 0
      %1093 = vmatpush1.bf16.msra.mxu0 0
      %1094 = vmatprep.subr.bf16.mxu0 0
      %1095 = vmatpush1.bf16.msra.mxu0 %v1075
      %1096 = vmatprep.subr.bf16.mxu0 0
      %1097 = vmatpush2.bf16.msra.mxu0 0
      %1098 = vmatprep.subr.bf16.mxu0 0
      %1099 = vmatpush2.bf16.msra.mxu0 0
      %1100 = vmatprep.subr.bf16.mxu0 0
      %1101 = vmatpush2.bf16.msra.mxu0 0
      %1102 = vmatprep.subr.bf16.mxu0 0
      %1103 = vmatpush2.bf16.msra.mxu0 0
      %1104 = vmatprep.subr.bf16.mxu0 0
      %1105 = vmatpush2.bf16.msra.mxu0 0
      %1106 = vmatprep.subr.bf16.mxu0 0
      %1107 = vmatpush2.bf16.msra.mxu0 0
      %1108 = vmatprep.subr.bf16.mxu0 0
      %1109 = vmatpush2.bf16.msra.mxu0 0
      %1110 = vmatprep.subr.bf16.mxu0 0
      %1111 = vmatpush2.bf16.msra.mxu0 0
      %1112 = vmatprep.mubr.bf16.mxu0 0
      %1113 = vmatmul.mubr.bf16.gmra.mxu0 %v1078
      %v1114 = vpop.f32.mrf.mxu0
      %v1115 = vadd.f32 0.0, %v1114
      %v1116 = vpop.f32.mrf.mxu0
      %v1117 = vpop.f32.mrf.mxu0
      %v1118 = vadd.f32 0.0, %v1117
      %v1119 = vpop.f32.mrf.mxu0
      %1120 = vdwg.mxu0
      %1121 = vrot.lane.b32.xlu0 %v739, 32
      %v1122 = vpop.permute.xlu0 %1121
      %1123 = vrot.lane.b32.xlu0 %v740, 32
      %v1124 = vpop.permute.xlu0 %1123
      %v1126 = vsel %vm742, %v1122, 0
      %v1129 = vsel %vm742, %v1124, 0
      %1131 = vmatprep.subr.bf16.mxu0 0
      %1132 = vmatpush1.bf16.xpose.msra.mxu0 0
      %1133 = vmatprep.subr.bf16.mxu0 0
      %1134 = vmatpush1.bf16.xpose.msra.mxu0 0
      %1135 = vmatprep.subr.bf16.mxu0 0
      %1136 = vmatpush1.bf16.xpose.msra.mxu0 0
      %1137 = vmatprep.subr.bf16.mxu0 0
      %1138 = vmatpush1.bf16.xpose.msra.mxu0 0
      %1139 = vmatprep.subr.bf16.mxu0 0
      %1140 = vmatpush1.bf16.xpose.msra.mxu0 0
      %1141 = vmatprep.subr.bf16.mxu0 0
      %1142 = vmatpush1.bf16.xpose.msra.mxu0 0
      %1143 = vmatprep.subr.bf16.mxu0 0
      %1144 = vmatpush1.bf16.xpose.msra.mxu0 0
      %1145 = vmatprep.subr.bf16.mxu0 0
      %1146 = vmatpush1.bf16.xpose.msra.mxu0 %v1129
      %1147 = vmatprep.subr.bf16.mxu0 0
      %1148 = vmatpush2.bf16.xpose.msra.mxu0 0
      %1149 = vmatprep.subr.bf16.mxu0 0
      %1150 = vmatpush2.bf16.xpose.msra.mxu0 0
      %1151 = vmatprep.subr.bf16.mxu0 0
      %1152 = vmatpush2.bf16.xpose.msra.mxu0 0
      %1153 = vmatprep.subr.bf16.mxu0 0
      %1154 = vmatpush2.bf16.xpose.msra.mxu0 0
      %1155 = vmatprep.subr.bf16.mxu0 0
      %1156 = vmatpush2.bf16.xpose.msra.mxu0 0
      %1157 = vmatprep.subr.bf16.mxu0 0
      %1158 = vmatpush2.bf16.xpose.msra.mxu0 0
      %1159 = vmatprep.subr.bf16.mxu0 0
      %1160 = vmatpush2.bf16.xpose.msra.mxu0 0
      %1161 = vmatprep.subr.bf16.mxu0 0
      %1162 = vmatpush2.bf16.xpose.msra.mxu0 0
      %1163 = vmatprep.mubr.bf16.mxu0 0
      %1164 = vmatmul.mubr.bf16.gmra.mxu0 %v1126
      %v1165 = vpop.f32.mrf.mxu0
      %v1166 = vadd.f32 0.0, %v1165
      %v1167 = vpop.f32.mrf.mxu0
      %v1168 = vpop.f32.mrf.mxu0
      %v1169 = vadd.f32 0.0, %v1168
      %v1170 = vpop.f32.mrf.mxu0
      %1171 = vdwg.mxu0
      %v1172 = vmul.f32 %v1166, 0.17677669
      %v1173 = vmul.f32 %v1169, 0.17677669
      %v1174 = vsel %vm797, -1e+09, %v1172
      %v1175 = vsel %vm797, -1e+09, %v1173
      %v1176 = vsel %vm800, %v1174, -inf
      %1177 = vmax.xlane.f32.xlu0 %v1176
      %v1178 = vpop.xlane.xlu0 %1177
      %v1179 = vsel %vm800, %v1175, -inf
      %1180 = vmax.xlane.f32.xlu0 %v1179
      %v1181 = vpop.xlane.xlu0 %1180
      %v1182 = vsub.f32 %v1174, %v1178
      %v1183 = vsub.f32 %v1175, %v1181
      %v1184 = vmul.f32 %v1182, 1.442695
      %v1185 = vpow.pop %v1184
      %v1186 = vmul.f32 %v1183, 1.442695
      %v1187 = vpow.pop %v1186
      %v1188 = vsel %vm800, %v1185, 0.0
      %1189 = vadd.xlane.f32.xlu0 %v1188
      %v1190 = vpop.xlane.xlu0 %1189
      %v1191 = vsel %vm800, %v1187, 0.0
      %1192 = vadd.xlane.f32.xlu0 %v1191
      %v1193 = vpop.xlane.xlu0 %1192
      %v1194 = vrcp.pop %v1190
      %v1195 = vrcp.pop %v1193
      %v1196 = vmul.f32 %v1185, %v1194
      %v1197 = vmul.f32 %v1187, %v1195
      %v1198 = vpack.c.bf16 %v1197, %v1196
      %1199 = vrot.lane.b32.xlu0 %v741, 32
      %v1200 = vpop.permute.xlu0 %1199
      %v1203 = vsel %vm800, %v1198, 0
      %1205 = vmatprep.subr.bf16.mxu0 0
      %1206 = vmatpush1.bf16.msra.mxu0 0
      %1207 = vmatprep.subr.bf16.mxu0 0
      %1208 = vmatpush1.bf16.msra.mxu0 0
      %1209 = vmatprep.subr.bf16.mxu0 0
      %1210 = vmatpush1.bf16.msra.mxu0 0
      %1211 = vmatprep.subr.bf16.mxu0 0
      %1212 = vmatpush1.bf16.msra.mxu0 0
      %1213 = vmatprep.subr.bf16.mxu0 0
      %1214 = vmatpush1.bf16.msra.mxu0 0
      %1215 = vmatprep.subr.bf16.mxu0 0
      %1216 = vmatpush1.bf16.msra.mxu0 0
      %1217 = vmatprep.subr.bf16.mxu0 0
      %1218 = vmatpush1.bf16.msra.mxu0 0
      %1219 = vmatprep.subr.bf16.mxu0 0
      %1220 = vmatpush1.bf16.msra.mxu0 %v1200
      %1221 = vmatprep.subr.bf16.mxu0 0
      %1222 = vmatpush2.bf16.msra.mxu0 0
      %1223 = vmatprep.subr.bf16.mxu0 0
      %1224 = vmatpush2.bf16.msra.mxu0 0
      %1225 = vmatprep.subr.bf16.mxu0 0
      %1226 = vmatpush2.bf16.msra.mxu0 0
      %1227 = vmatprep.subr.bf16.mxu0 0
      %1228 = vmatpush2.bf16.msra.mxu0 0
      %1229 = vmatprep.subr.bf16.mxu0 0
      %1230 = vmatpush2.bf16.msra.mxu0 0
      %1231 = vmatprep.subr.bf16.mxu0 0
      %1232 = vmatpush2.bf16.msra.mxu0 0
      %1233 = vmatprep.subr.bf16.mxu0 0
      %1234 = vmatpush2.bf16.msra.mxu0 0
      %1235 = vmatprep.subr.bf16.mxu0 0
      %1236 = vmatpush2.bf16.msra.mxu0 0
      %1237 = vmatprep.mubr.bf16.mxu0 0
      %1238 = vmatmul.mubr.bf16.gmra.mxu0 %v1203
      %v1239 = vpop.f32.mrf.mxu0
      %v1240 = vadd.f32 0.0, %v1239
      %v1241 = vpop.f32.mrf.mxu0
      %v1242 = vpop.f32.mrf.mxu0
      %v1243 = vadd.f32 0.0, %v1242
      %v1244 = vpop.f32.mrf.mxu0
      %1245 = vdwg.mxu0
      %1248 = vrot.lane.b32.xlu0 %v990, 32
      %v1249 = vpop.permute.xlu0 %1248
      %1250 = vrot.lane.b32.xlu0 %v993, 32
      %v1251 = vpop.permute.xlu0 %1250
      %1256 = vrot.lane.b32.xlu0 %v1115, 64
      %v1257 = vpop.permute.xlu0 %1256
      %1258 = vrot.lane.b32.xlu0 %v1118, 64
      %v1259 = vpop.permute.xlu0 %1258
      %1264 = vrot.lane.b32.xlu0 %v1240, 96
      %v1265 = vpop.permute.xlu0 %1264
      %1266 = vrot.lane.b32.xlu0 %v1243, 96
      %v1267 = vpop.permute.xlu0 %1266
      %v1270 = vsel %vm742, %v862, %v1249
      %v1271 = vsel %vm742, %v865, %v1251
      %vm1272 = vcmask 523264
      %v1273 = vsel %vm1272, %v1270, %v1257
      %v1274 = vsel %vm1272, %v1271, %v1259
      %vm1275 = vcmask 785408
      %v1276 = vsel %vm1275, %v1273, %v1265
      %v1277 = vsel %vm1275, %v1274, %v1267
      %v1278 = vpack.c.bf16 %v1277, %v1276
      %v1279 = vld [vmem:[%s9] sm:$0xf]
      %v1280 = vld [vmem:[%s9 + $0x4] sm:$0xf]
      %v1281 = vld [vmem:[%s9 + $0x8] sm:$0xf]
      %v1282 = vld [vmem:[%s9 + $0xc] sm:$0xf]
      %v1283 = vld [vmem:[%s9 + $0x10] sm:$0xf]
      %v1284 = vld [vmem:[%s9 + $0x14] sm:$0xf]
      %v1285 = vld [vmem:[%s9 + $0x18] sm:$0xf]
      %v1286 = vld [vmem:[%s9 + $0x1c] sm:$0xf]
      %v1287 = vld [vmem:[%s9 + $0x20] sm:$0xf]
      %v1288 = vld [vmem:[%s9 + $0x24] sm:$0xf]
      %v1289 = vld [vmem:[%s9 + $0x28] sm:$0xf]
      %v1290 = vld [vmem:[%s9 + $0x2c] sm:$0xf]
      %v1291 = vld [vmem:[%s9 + $0x30] sm:$0xf]
      %v1292 = vld [vmem:[%s9 + $0x34] sm:$0xf]
      %v1293 = vld [vmem:[%s9 + $0x38] sm:$0xf]
      %v1294 = vld [vmem:[%s9 + $0x3c] sm:$0xf]
      %v1295 = vld [vmem:[%s10] sm:$0x1]
      %v1297 = vlaneseq
      %v1298 = vshrl.u32 %v1297, 7
      %v1299 = vsub.s32 0, %v1298
      %v1300 = vrot.slane %v1295, %v1299
      %v1318 = vunpack.c.l.b16 %v1279
      %v1319 = vunpack.c.l.b16 %v1280
      %v1320 = vunpack.c.l.b16 %v1281
      %v1321 = vunpack.c.l.b16 %v1282
      %v1322 = vunpack.c.l.b16 %v1283
      %v1323 = vunpack.c.l.b16 %v1284
      %v1324 = vunpack.c.l.b16 %v1285
      %v1325 = vunpack.c.l.b16 %v1286
      %v1326 = vunpack.c.l.b16 %v1287
      %v1327 = vunpack.c.l.b16 %v1288
      %v1328 = vunpack.c.l.b16 %v1289
      %v1329 = vunpack.c.l.b16 %v1290
      %v1330 = vunpack.c.l.b16 %v1291
      %v1331 = vunpack.c.l.b16 %v1292
      %v1332 = vunpack.c.l.b16 %v1293
      %v1333 = vunpack.c.l.b16 %v1294
      %v1334 = vpack.c.b16 %v1319, %v1318
      %v1335 = vpack.c.b16 %v1321, %v1320
      %v1336 = vpack.c.b16 %v1323, %v1322
      %v1337 = vpack.c.b16 %v1325, %v1324
      %v1338 = vpack.c.b16 %v1327, %v1326
      %v1339 = vpack.c.b16 %v1329, %v1328
      %v1340 = vpack.c.b16 %v1331, %v1330
      %v1341 = vpack.c.b16 %v1333, %v1332
      %1350 = vmatprep.subr.bf16.mxu0 0
      %1351 = vmatpush1.bf16.msra.mxu0 %v1341
      %1352 = vmatprep.subr.bf16.mxu0 0
      %1353 = vmatpush1.bf16.msra.mxu0 %v1340
      %1354 = vmatprep.subr.bf16.mxu0 0
      %1355 = vmatpush1.bf16.msra.mxu0 %v1339
      %1356 = vmatprep.subr.bf16.mxu0 0
      %1357 = vmatpush1.bf16.msra.mxu0 %v1338
      %1358 = vmatprep.subr.bf16.mxu0 0
      %1359 = vmatpush1.bf16.msra.mxu0 %v1337
      %1360 = vmatprep.subr.bf16.mxu0 0
      %1361 = vmatpush1.bf16.msra.mxu0 %v1336
      %1362 = vmatprep.subr.bf16.mxu0 0
      %1363 = vmatpush1.bf16.msra.mxu0 %v1335
      %1364 = vmatprep.subr.bf16.mxu0 0
      %1365 = vmatpush1.bf16.msra.mxu0 %v1334
      %1366 = vmatprep.subr.bf16.mxu0 0
      %1367 = vmatpush2.bf16.msra.mxu0 0
      %1368 = vmatprep.subr.bf16.mxu0 0
      %1369 = vmatpush2.bf16.msra.mxu0 0
      %1370 = vmatprep.subr.bf16.mxu0 0
      %1371 = vmatpush2.bf16.msra.mxu0 0
      %1372 = vmatprep.subr.bf16.mxu0 0
      %1373 = vmatpush2.bf16.msra.mxu0 0
      %1374 = vmatprep.subr.bf16.mxu0 0
      %1375 = vmatpush2.bf16.msra.mxu0 0
      %1376 = vmatprep.subr.bf16.mxu0 0
      %1377 = vmatpush2.bf16.msra.mxu0 0
      %1378 = vmatprep.subr.bf16.mxu0 0
      %1379 = vmatpush2.bf16.msra.mxu0 0
      %1380 = vmatprep.subr.bf16.mxu0 0
      %1381 = vmatpush2.bf16.msra.mxu0 0
      %1382 = vmatprep.mubr.bf16.mxu0 0
      %1383 = vmatmul.mubr.bf16.gmra.mxu0 %v1278
      %v1384 = vpop.f32.mrf.mxu0
      %v1385 = vadd.f32 %v1300, %v1384
      %v1386 = vpop.f32.mrf.mxu0
      %v1387 = vpop.f32.mrf.mxu0
      %v1388 = vadd.f32 %v1300, %v1387
      %v1389 = vpop.f32.mrf.mxu0
      %1390 = vdwg.mxu0
      %v1391 = vadd.f32 %v427, %v1385
      %v1392 = vadd.f32 %v428, %v1388
      %1393 = vst [vmem:[%s424] sm:$0xff] %v1391
      %1394 = vst [vmem:[%s424 + $0x8] sm:$0xff] %v1392
      %s1395 = smul.u32 2, %s22
      %p1396 = scmp.lt.s32.totalorder %s1395, 3
      %s1397 = scalar_select %p1396, %s1395, 3
      %s1398 = smul.addr %s1397, 8
      %s1399 = scalar_lea.vmem %s11, %s1398
      // Predicated region
      $region65: #{decoder_layer_forward.4} parent=63 // pred_check
        %p1400 = pneg %p286
      $region66: #{decoder_layer_forward.4} parent=63 // pred_check_branch
        %1402 = sbr.rel (%p1400) target = $region68
      $region67: #{decoder_layer_forward.4} parent=63 // pred_region
        %s1403 = smul.u32 2, %s22
      $region68: #{decoder_layer_forward.4} parent=63 // pred_fallthru
        _
    $region64: #{decoder_layer_forward.4} parent=5 // pred_fallthru
      _
    %p1404 = scmp.le.s32.totalorder 2, %s17
    // Predicated region
    $region69: #{decoder_layer_forward.4} parent=5 // pred_check
      %p1405 = pneg %p1404
    $region70: #{decoder_layer_forward.4} parent=5 // pred_check_branch
      %1407 = sbr.rel (%p1405) target = $region72
    $region71: #{decoder_layer_forward.4} parent=5 // pred_region
      %s1408 = ssub.s32 %s17, 2
      // Predicated region
      $region73: #{decoder_layer_forward.4} parent=71 // pred_check
        %p1409 = pneg %p292
      $region74: #{decoder_layer_forward.4} parent=71 // pred_check_branch
        %1411 = sbr.rel (%p1409) target = $region76
      $region75: #{decoder_layer_forward.4} parent=71 // pred_region
        %s1412 = smul.u32 2, %s23
        %p1413 = scmp.lt.s32.totalorder %s1412, 3
        %s1414 = scalar_select %p1413, %s1412, 3
        %s1415 = smul.addr %s1414, 8
        %s1416 = scalar_lea.vmem %s11, %s1415
      $region76: #{decoder_layer_forward.4} parent=71 // pred_fallthru
        _
    $region72: #{decoder_layer_forward.4} parent=5 // pred_fallthru
      _
  $region6: #{decoder_layer_forward.4} parent=0 // loop_footer
    %s21 = sadd.s32 1, %s17
  $region7: #{decoder_layer_forward.4} parent=0 // loop_footer_branch
    %16 = sbr.rel target = $region3
  $region8: #{decoder_layer_forward.4} parent=0 // loop_exit
    _

// kernel: decoder_layer_forward.3
$region0: #{decoder_layer_forward.3}
  #allocation0 [shape = 'u32[]', space=smem, size = 0x4, offset = 0x4, fixed_abs, tag = 'smem constant byte address 0x4 - core index']
  #allocation1 [shape = 'u32[144,128]{1,0:T(1,128)}', space=vmem, size = 0x12000, scoped, tag = 'internal scratch']
  %s0 = inlined_call_operand.vmem [shape: f32[32,128], index: 0, kind: input, shape index: {}]
  %s1 = inlined_call_operand.hbm [shape: s32[2,16,16], index: 1, kind: input, shape index: {}]
  %s2 = inlined_call_operand.vmem [shape: f32[1,128], index: 2, kind: input, shape index: {}]
  %s3 = inlined_call_operand.vmem [shape: f32[1,128], index: 3, kind: input, shape index: {}]
  %s4 = inlined_call_operand.hbm [shape: bf16[128,384], index: 4, kind: input, shape index: {}]
  %s5 = inlined_call_operand.vmem [shape: f32[1,384], index: 5, kind: input, shape index: {}]
  %s6 = inlined_call_operand.hbm [shape: bf16[128,128], index: 6, kind: input, shape index: {}]
  %s7 = inlined_call_operand.vmem [shape: f32[1,128], index: 7, kind: input, shape index: {}]
  %s8 = inlined_call_operand.vmem [shape: f32[32,128], index: 8, kind: output, shape index: {}]
  %s9 = sld [smem:[#allocation0]]
  $region77: #{decoder_layer_forward.3} parent=0
    _
  %s11 = ssub.s32 1, %s9
  %s12 = scalar_select 0, %s11, %s9
  $region1: #{decoder_layer_forward.3} parent=0
    #allocation2 [shape = 'u8[16384]{0}', space=vmem, size = 0x4000, scoped, tag = 'input window, operand 1']
    #allocation3 [shape = 's32[2]{0}', space=sflag, size = 0x8, scoped, tag = 'scoped memory for decoder_layer_forward.3']
    #allocation4 [shape = 'u8[98304]{0}', space=vmem, size = 0x18000, scoped, tag = 'input window, operand 4, single buffered']
    #allocation5 [shape = 's32[1]{0}', space=sflag, size = 0x4, scoped, tag = 'scoped memory for decoder_layer_forward.3']
    #allocation6 [shape = 'u8[32768]{0}', space=vmem, size = 0x8000, scoped, tag = 'input window, operand 6, single buffered']
    %13 = vsyncpa [#allocation3], 0
    %s14 = scalar_lea.sflag [#allocation3], 1
    %15 = vsyncpa %s14, 0
    %16 = vsyncpa [#allocation5], 0
    loop: start=0, step=1, limit=4
    $region2: #{decoder_layer_forward.3} parent=1 // loop_pre_header
      _
    $region3: #{decoder_layer_forward.3} parent=1 // loop_header
      %s18 = sphi 0, %s22
      %p19 = scmp.ge.s32.totalorder %s18, 4
      %s28 = sphi 0, %s30
      %s31 = sphi 0, %s28
      %s32 = sphi 0, %s31
      %s48 = sphi 0, %s32
      %s54 = sphi 0, %s56
      %s57 = sphi 0, %s54
      %s58 = sphi 0, %s57
      %s74 = sphi 0, %s58
      %s78 = sphi 0, %s78
      %s80 = sphi 0, %s78
      %s81 = sphi 0, %s80
      %s95 = sphi 0, %s81
      %s99 = sphi 0, %s99
      %s101 = sphi 0, %s99
      %s102 = sphi 0, %s101
      %s116 = sphi 0, %s102
      %s120 = sphi 0, %s120
      %s122 = sphi 0, %s120
      %s123 = sphi 0, %s122
      %s137 = sphi 0, %s123
      %s141 = sphi 0, %s141
      %s143 = sphi 0, %s141
      %s144 = sphi 0, %s143
      %s158 = sphi 0, %s144
      %s162 = sphi 0, %s162
      %s164 = sphi 0, %s162
      %s165 = sphi 0, %s164
      %s179 = sphi 0, %s165
      %s183 = sphi 0, %s183
      %s185 = sphi 0, %s183
      %s186 = sphi 0, %s185
      %s200 = sphi 0, %s186
      %s206 = sphi 0, %s208
      %s209 = sphi 0, %s206
      %s210 = sphi 0, %s209
      %s226 = sphi 0, %s210
    $region4: #{decoder_layer_forward.3} parent=1 // loop_header_branch
      %21 = sbr.rel (%p19) target = $region8
    $region5: #{decoder_layer_forward.3} parent=1 // loop_body
      %s23 = ssub.s32 %s18, 1
      %s24 = ssub.s32 %s18, 2
      %s25 = sadd.s32 %s18, 1
      %s26 = ssub.s32 %s18, %s25
      %p27 = scmp.eq.s32.totalorder %s26, 0
      %s29 = sadd.s32 %s28, 1
      %s30 = scalar_select %p27, %s28, %s29
      %p33 = pneg %p27
      %p34 = scmp.eq.s32.totalorder %s18, 1
      %p35 = por %p33, %p34
      %p36 = scmp.ne.s32.totalorder %s28, %s31
      %p37 = scmp.eq.s32.totalorder %s18, 0
      %p38 = por %p36, %p37
      %p39 = scmp.ne.s32.totalorder %s28, %s31
      %p40 = scmp.eq.s32.totalorder %s23, 1
      %p41 = por %p39, %p40
      %p42 = scmp.ne.s32.totalorder %s31, %s32
      %p43 = scmp.eq.s32.totalorder %s23, 0
      %p44 = por %p42, %p43
      %p45 = scmp.ne.s32.totalorder %s31, %s32
      %p46 = scmp.eq.s32.totalorder %s24, 1
      %p47 = por %p45, %p46
      %p49 = scmp.ne.s32.totalorder %s32, %s48
      %p50 = scmp.eq.s32.totalorder %s24, 0
      %p51 = por %p49, %p50
      %s52 = ssub.s32 %s18, %s25
      %p53 = scmp.eq.s32.totalorder %s52, 0
      %s55 = sadd.s32 %s54, 1
      %s56 = scalar_select %p53, %s54, %s55
      %p59 = pneg %p53
      %p60 = scmp.eq.s32.totalorder %s18, 1
      %p61 = por %p59, %p60
      %p62 = scmp.ne.s32.totalorder %s54, %s57
      %p63 = scmp.eq.s32.totalorder %s18, 0
      %p64 = por %p62, %p63
      %p65 = scmp.ne.s32.totalorder %s54, %s57
      %p66 = scmp.eq.s32.totalorder %s23, 1
      %p67 = por %p65, %p66
      %p68 = scmp.ne.s32.totalorder %s57, %s58
      %p69 = scmp.eq.s32.totalorder %s23, 0
      %p70 = por %p68, %p69
      %p71 = scmp.ne.s32.totalorder %s57, %s58
      %p72 = scmp.eq.s32.totalorder %s24, 1
      %p73 = por %p71, %p72
      %p75 = scmp.ne.s32.totalorder %s58, %s74
      %p76 = scmp.eq.s32.totalorder %s24, 0
      %p77 = por %p75, %p76
      %s79 = sadd.s32 %s78, 1
      %p82 = scmp.eq.s32.totalorder %s18, 1
      %p83 = scmp.ne.s32.totalorder %s78, %s80
      %p84 = scmp.eq.s32.totalorder %s18, 0
      %p85 = por %p83, %p84
      %p86 = scmp.ne.s32.totalorder %s78, %s80
      %p87 = scmp.eq.s32.totalorder %s23, 1
      %p88 = por %p86, %p87
      %p89 = scmp.ne.s32.totalorder %s80, %s81
      %p90 = scmp.eq.s32.totalorder %s23, 0
      %p91 = por %p89, %p90
      %p92 = scmp.ne.s32.totalorder %s80, %s81
      %p93 = scmp.eq.s32.totalorder %s24, 1
      %p94 = por %p92, %p93
      %p96 = scmp.ne.s32.totalorder %s81, %s95
      %p97 = scmp.eq.s32.totalorder %s24, 0
      %p98 = por %p96, %p97
      %s100 = sadd.s32 %s99, 1
      %p103 = scmp.eq.s32.totalorder %s18, 1
      %p104 = scmp.ne.s32.totalorder %s99, %s101
      %p105 = scmp.eq.s32.totalorder %s18, 0
      %p106 = por %p104, %p105
      %p107 = scmp.ne.s32.totalorder %s99, %s101
      %p108 = scmp.eq.s32.totalorder %s23, 1
      %p109 = por %p107, %p108
      %p110 = scmp.ne.s32.totalorder %s101, %s102
      %p111 = scmp.eq.s32.totalorder %s23, 0
      %p112 = por %p110, %p111
      %p113 = scmp.ne.s32.totalorder %s101, %s102
      %p114 = scmp.eq.s32.totalorder %s24, 1
      %p115 = por %p113, %p114
      %p117 = scmp.ne.s32.totalorder %s102, %s116
      %p118 = scmp.eq.s32.totalorder %s24, 0
      %p119 = por %p117, %p118
      %s121 = sadd.s32 %s120, 1
      %p124 = scmp.eq.s32.totalorder %s18, 1
      %p125 = scmp.ne.s32.totalorder %s120, %s122
      %p126 = scmp.eq.s32.totalorder %s18, 0
      %p127 = por %p125, %p126
      %p128 = scmp.ne.s32.totalorder %s120, %s122
      %p129 = scmp.eq.s32.totalorder %s23, 1
      %p130 = por %p128, %p129
      %p131 = scmp.ne.s32.totalorder %s122, %s123
      %p132 = scmp.eq.s32.totalorder %s23, 0
      %p133 = por %p131, %p132
      %p134 = scmp.ne.s32.totalorder %s122, %s123
      %p135 = scmp.eq.s32.totalorder %s24, 1
      %p136 = por %p134, %p135
      %p138 = scmp.ne.s32.totalorder %s123, %s137
      %p139 = scmp.eq.s32.totalorder %s24, 0
      %p140 = por %p138, %p139
      %s142 = sadd.s32 %s141, 1
      %p145 = scmp.eq.s32.totalorder %s18, 1
      %p146 = scmp.ne.s32.totalorder %s141, %s143
      %p147 = scmp.eq.s32.totalorder %s18, 0
      %p148 = por %p146, %p147
      %p149 = scmp.ne.s32.totalorder %s141, %s143
      %p150 = scmp.eq.s32.totalorder %s23, 1
      %p151 = por %p149, %p150
      %p152 = scmp.ne.s32.totalorder %s143, %s144
      %p153 = scmp.eq.s32.totalorder %s23, 0
      %p154 = por %p152, %p153
      %p155 = scmp.ne.s32.totalorder %s143, %s144
      %p156 = scmp.eq.s32.totalorder %s24, 1
      %p157 = por %p155, %p156
      %p159 = scmp.ne.s32.totalorder %s144, %s158
      %p160 = scmp.eq.s32.totalorder %s24, 0
      %p161 = por %p159, %p160
      %s163 = sadd.s32 %s162, 1
      %p166 = scmp.eq.s32.totalorder %s18, 1
      %p167 = scmp.ne.s32.totalorder %s162, %s164
      %p168 = scmp.eq.s32.totalorder %s18, 0
      %p169 = por %p167, %p168
      %p170 = scmp.ne.s32.totalorder %s162, %s164
      %p171 = scmp.eq.s32.totalorder %s23, 1
      %p172 = por %p170, %p171
      %p173 = scmp.ne.s32.totalorder %s164, %s165
      %p174 = scmp.eq.s32.totalorder %s23, 0
      %p175 = por %p173, %p174
      %p176 = scmp.ne.s32.totalorder %s164, %s165
      %p177 = scmp.eq.s32.totalorder %s24, 1
      %p178 = por %p176, %p177
      %p180 = scmp.ne.s32.totalorder %s165, %s179
      %p181 = scmp.eq.s32.totalorder %s24, 0
      %p182 = por %p180, %p181
      %s184 = sadd.s32 %s183, 1
      %p187 = scmp.eq.s32.totalorder %s18, 1
      %p188 = scmp.ne.s32.totalorder %s183, %s185
      %p189 = scmp.eq.s32.totalorder %s18, 0
      %p190 = por %p188, %p189
      %p191 = scmp.ne.s32.totalorder %s183, %s185
      %p192 = scmp.eq.s32.totalorder %s23, 1
      %p193 = por %p191, %p192
      %p194 = scmp.ne.s32.totalorder %s185, %s186
      %p195 = scmp.eq.s32.totalorder %s23, 0
      %p196 = por %p194, %p195
      %p197 = scmp.ne.s32.totalorder %s185, %s186
      %p198 = scmp.eq.s32.totalorder %s24, 1
      %p199 = por %p197, %p198
      %p201 = scmp.ne.s32.totalorder %s186, %s200
      %p202 = scmp.eq.s32.totalorder %s24, 0
      %p203 = por %p201, %p202
      %s204 = ssub.s32 %s18, %s25
      %p205 = scmp.eq.s32.totalorder %s204, 0
      %s207 = sadd.s32 %s206, 1
      %s208 = scalar_select %p205, %s206, %s207
      %p211 = pneg %p205
      %p212 = scmp.eq.s32.totalorder %s18, 1
      %p213 = por %p211, %p212
      %p214 = scmp.ne.s32.totalorder %s206, %s209
      %p215 = scmp.eq.s32.totalorder %s18, 0
      %p216 = por %p214, %p215
      %p217 = scmp.ne.s32.totalorder %s206, %s209
      %p218 = scmp.eq.s32.totalorder %s23, 1
      %p219 = por %p217, %p218
      %p220 = scmp.ne.s32.totalorder %s209, %s210
      %p221 = scmp.eq.s32.totalorder %s23, 0
      %p222 = por %p220, %p221
      %p223 = scmp.ne.s32.totalorder %s209, %s210
      %p224 = scmp.eq.s32.totalorder %s24, 1
      %p225 = por %p223, %p224
      %p227 = scmp.ne.s32.totalorder %s210, %s226
      %p228 = scmp.eq.s32.totalorder %s24, 0
      %p229 = por %p227, %p228
      %p230 = scmp.le.s32.totalorder 1, %s18
      %p231 = scmp.lt.s32.totalorder %s18, 3
      %p232 = pnand %p230, %p231
      %p233 = pneg %p232
      // Predicated region
      $region9: #{decoder_layer_forward.3} parent=5 // pred_check
        _
      $region10: #{decoder_layer_forward.3} parent=5 // pred_check_branch
        %235 = sbr.rel (%p232) target = $region12
      $region11: #{decoder_layer_forward.3} parent=5 // pred_region
        %s236 = ssub.s32 %s18, 1
        // Predicated region
        $region13: #{decoder_layer_forward.3} parent=11 // pred_check
          %p237 = pneg %p91
        $region14: #{decoder_layer_forward.3} parent=11 // pred_check_branch
          %239 = sbr.rel (%p237) target = $region16
        $region15: #{decoder_layer_forward.3} parent=11 // pred_region
          _
        $region16: #{decoder_layer_forward.3} parent=11 // pred_fallthru
          _
        // Predicated region
        $region17: #{decoder_layer_forward.3} parent=11 // pred_check
          %p240 = pneg %p112
        $region18: #{decoder_layer_forward.3} parent=11 // pred_check_branch
          %242 = sbr.rel (%p240) target = $region20
        $region19: #{decoder_layer_forward.3} parent=11 // pred_region
          _
        $region20: #{decoder_layer_forward.3} parent=11 // pred_fallthru
          _
        // Predicated region
        $region21: #{decoder_layer_forward.3} parent=11 // pred_check
          %p243 = pneg %p133
        $region22: #{decoder_layer_forward.3} parent=11 // pred_check_branch
          %245 = sbr.rel (%p243) target = $region24
        $region23: #{decoder_layer_forward.3} parent=11 // pred_region
          %s247 = ssub.s32 3072, 3072
          %248 = vsyncadd [#allocation5], %s247
          %s249 = sshll.u32 [#allocation4], 4
          %s250 = int_to_ptr.vmem [resolvable:$true] %s249
          %255 = dma.hbm_to_vmem [thread:$0]  %s4, 3072, %s250, [#allocation5], 192, 192, 12
        $region24: #{decoder_layer_forward.3} parent=11 // pred_fallthru
          _
        // Predicated region
        $region25: #{decoder_layer_forward.3} parent=11 // pred_check
          %p256 = pneg %p154
        $region26: #{decoder_layer_forward.3} parent=11 // pred_check_branch
          %258 = sbr.rel (%p256) target = $region28
        $region27: #{decoder_layer_forward.3} parent=11 // pred_region
          _
        $region28: #{decoder_layer_forward.3} parent=11 // pred_fallthru
          _
        // Predicated region
        $region29: #{decoder_layer_forward.3} parent=11 // pred_check
          %p259 = pneg %p175
        $region30: #{decoder_layer_forward.3} parent=11 // pred_check_branch
          %261 = sbr.rel (%p259) target = $region32
        $region31: #{decoder_layer_forward.3} parent=11 // pred_region
          %s263 = ssub.s32 1024, 1024
          %264 = vsyncadd [#allocation5], %s263
          %s265 = sshll.u32 [#allocation6], 4
          %s266 = int_to_ptr.vmem [resolvable:$true] %s265
          %271 = dma.hbm_to_vmem [thread:$0]  %s6, 1024, %s266, [#allocation5], 64, 64, 4
        $region32: #{decoder_layer_forward.3} parent=11 // pred_fallthru
          _
        // Predicated region
        $region33: #{decoder_layer_forward.3} parent=11 // pred_check
          %p272 = pneg %p196
        $region34: #{decoder_layer_forward.3} parent=11 // pred_check_branch
          %274 = sbr.rel (%p272) target = $region36
        $region35: #{decoder_layer_forward.3} parent=11 // pred_region
          _
        $region36: #{decoder_layer_forward.3} parent=11 // pred_fallthru
          _
      $region12: #{decoder_layer_forward.3} parent=5 // pred_fallthru
        _
      %p275 = scmp.lt.s32.totalorder %s18, 2
      // Predicated region
      $region37: #{decoder_layer_forward.3} parent=5 // pred_check
        %p276 = pneg %p275
      $region38: #{decoder_layer_forward.3} parent=5 // pred_check_branch
        %278 = sbr.rel (%p276) target = $region40
      $region39: #{decoder_layer_forward.3} parent=5 // pred_region
        // Predicated region
        $region41: #{decoder_layer_forward.3} parent=39 // pred_check
          %p279 = pneg %p38
        $region42: #{decoder_layer_forward.3} parent=39 // pred_check_branch
          %281 = sbr.rel (%p279) target = $region44
        $region43: #{decoder_layer_forward.3} parent=39 // pred_region
          %s282 = smul.u32 2, %s18
          %p283 = scmp.lt.s32.totalorder %s282, 3
          %s284 = scalar_select %p283, %s282, 3
          %s285 = smul.addr %s284, 8
          %s286 = scalar_lea.vmem %s0, %s285
          %s287 = smul.u32 2, %s18
        $region44: #{decoder_layer_forward.3} parent=39 // pred_fallthru
          _
        // Predicated region
        $region45: #{decoder_layer_forward.3} parent=39 // pred_check
          %p288 = pneg %p64
        $region46: #{decoder_layer_forward.3} parent=39 // pred_check_branch
          %290 = sbr.rel (%p288) target = $region48
        $region47: #{decoder_layer_forward.3} parent=39 // pred_region
          %s291 = sand.u32 %s54, 1
          %s292 = scalar_lea.sflag [#allocation3], %s291
          %s293 = sand.u32 %s54, 1
          %s294 = smul.addr %s293, 16
          %s295 = scalar_lea.vmem [#allocation2], %s294
          %s297 = ssub.s32 256, 256
          %298 = vsyncadd %s292, %s297
          %s299 = smul.addr %s18, 2
          %s300 = smul.addr %s299, 128
          %s301 = scalar_lea.hbm %s1, %s300
          %s302 = sshll.u32 %s295, 4
          %s303 = int_to_ptr.vmem [resolvable:$true] %s302
          %308 = dma.hbm_to_vmem [thread:$0]  %s301, 256, %s303, %s292, 128, 128, 8
        $region48: #{decoder_layer_forward.3} parent=39 // pred_fallthru
          _
      $region40: #{decoder_layer_forward.3} parent=5 // pred_fallthru
        _
      %p309 = scmp.le.s32.totalorder 1, %s18
      %p310 = scmp.lt.s32.totalorder %s18, 3
      %p311 = pnand %p309, %p310
      %p312 = pneg %p311
      // Predicated region
      $region49: #{decoder_layer_forward.3} parent=5 // pred_check
        _
      $region50: #{decoder_layer_forward.3} parent=5 // pred_check_branch
        %314 = sbr.rel (%p311) target = $region52
      $region51: #{decoder_layer_forward.3} parent=5 // pred_region
        %s315 = ssub.s32 %s18, 1
        %s316 = sand.u32 %s57, 1
        %s317 = scalar_lea.sflag [#allocation3], %s316
        %s318 = sand.u32 %s57, 1
        %s319 = smul.addr %s318, 16
        %s320 = scalar_lea.vmem [#allocation2], %s319
        // Predicated region
        $region53: #{decoder_layer_forward.3} parent=51 // pred_check
          %p321 = pneg %p70
        $region54: #{decoder_layer_forward.3} parent=51 // pred_check_branch
          %323 = sbr.rel (%p321) target = $region56
        $region55: #{decoder_layer_forward.3} parent=51 // pred_region
          %324 = dma.done %s317, 256
        $region56: #{decoder_layer_forward.3} parent=51 // pred_fallthru
          _
        // Predicated region
        $region57: #{decoder_layer_forward.3} parent=51 // pred_check
          %p325 = pneg %p133
        $region58: #{decoder_layer_forward.3} parent=51 // pred_check_branch
          %327 = sbr.rel (%p325) target = $region60
        $region59: #{decoder_layer_forward.3} parent=51 // pred_region
          %328 = dma.done [#allocation5], 3072
        $region60: #{decoder_layer_forward.3} parent=51 // pred_fallthru
          _
        // Predicated region
        $region61: #{decoder_layer_forward.3} parent=51 // pred_check
          %p329 = pneg %p175
        $region62: #{decoder_layer_forward.3} parent=51 // pred_check_branch
          %331 = sbr.rel (%p329) target = $region64
        $region63: #{decoder_layer_forward.3} parent=51 // pred_region
          %332 = dma.done [#allocation5], 1024
        $region64: #{decoder_layer_forward.3} parent=51 // pred_fallthru
          _
        %s333 = smul.u32 2, %s23
        %p334 = scmp.lt.s32.totalorder %s333, 3
        %s335 = scalar_select %p334, %s333, 3
        %s336 = smul.addr %s335, 8
        %s337 = scalar_lea.vmem %s0, %s336
        %p338 = pneg %p44
        %p339 = pneg %p41
        %s340 = sand.u32 %s57, 1
        %s341 = scalar_lea.sflag [#allocation3], %s340
        %s342 = sand.u32 %s57, 1
        %s343 = smul.addr %s342, 16
        %s344 = scalar_lea.vmem [#allocation2], %s343
        %p345 = pneg %p70
        %p346 = pneg %p67
        %p347 = pneg %p91
        %p348 = pneg %p88
        %p349 = pneg %p112
        %p350 = pneg %p109
        %p351 = pneg %p133
        %p352 = pneg %p130
        %p353 = pneg %p154
        %p354 = pneg %p151
        %p355 = pneg %p175
        %p356 = pneg %p172
        %p357 = pneg %p196
        %p358 = pneg %p193
        %p359 = pneg %p222
        %p360 = pneg %p219
        %s361 = smul.u32 2, %s23
        %p362 = scmp.lt.s32.totalorder %s361, 3
        %s363 = scalar_select %p362, %s361, 3
        %s364 = smul.addr %s363, 8
        %s365 = scalar_lea.vmem %s8, %s364
        %s366 = smul.u32 2, %s23
        %p367 = scmp.lt.s32.totalorder %s366, 3
        %s368 = scalar_select %p367, %s366, 3
        %s369 = smul.addr %s368, 8
        %s370 = scalar_lea.vmem %s0, %s369
        %s371 = smul.u32 2, %s23
        %s372 = smul.u32 2, %s23
        %p373 = scmp.lt.s32.totalorder %s372, 3
        %s374 = scalar_select %p373, %s372, 3
        %s375 = smul.addr %s374, 8
        %s376 = scalar_lea.vmem %s8, %s375
        %s377 = smul.u32 2, %s23
        %v379 = vld [vmem:[%s370] sm:$0xff]
        %v380 = vld [vmem:[%s370 + $0x8] sm:$0xff]
        %v381 = vld [vmem:[%s2] sm:$0x1]
        %v382 = vld [vmem:[%s3] sm:$0x1]
        %383 = vadd.xlane.f32.xlu0 %v379
        %v384 = vpop.xlane.xlu0 %383
        %385 = vadd.xlane.f32.xlu0 %v380
        %v386 = vpop.xlane.xlu0 %385
        %v387 = vrcp.pop 128.0
        %v388 = vmul.f32 %v384, %v387
        %v389 = vmul.f32 %v386, %v387
        %v390 = vsub.f32 %v379, %v388
        %v391 = vsub.f32 %v380, %v389
        %v392 = vmul.f32 %v390, %v390
        %v393 = vmul.f32 %v391, %v391
        %394 = vadd.xlane.f32.xlu0 %v392
        %v395 = vpop.xlane.xlu0 %394
        %396 = vadd.xlane.f32.xlu0 %v393
        %v397 = vpop.xlane.xlu0 %396
        %v398 = vmul.f32 %v395, 0.007874016
        %v399 = vmul.f32 %v397, 0.007874016
        %v401 = vlaneseq
        %v402 = vshrl.u32 %v401, 7
        %v403 = vsub.s32 0, %v402
        %v404 = vrot.slane %v381, %v403
        %v406 = vmul.f32 %v404, %v390
        %v407 = vmul.f32 %v404, %v391
        %v408 = vadd.f32 %v398, 1e-06
        %v409 = vadd.f32 %v399, 1e-06
        %v410 = vrsqrt.pop %v408
        %v411 = vrsqrt.pop %v409
        %v412 = vmul.f32 %v406, %v410
        %v413 = vmul.f32 %v407, %v411
        %v415 = vlaneseq
        %v416 = vshrl.u32 %v415, 7
        %v417 = vsub.s32 0, %v416
        %v418 = vrot.slane %v382, %v417
        %v420 = vadd.f32 %v412, %v418
        %v421 = vadd.f32 %v413, %v418
        %v422 = vpack.c.bf16 %v421, %v420
        %v423 = vld [vmem:[#allocation4] sm:$0xff]
        %v424 = vld [vmem:[#allocation4 + $0x8] sm:$0xf]
        %v425 = vld [vmem:[#allocation4 + $0xc] sm:$0xff]
        %v426 = vld [vmem:[#allocation4 + $0x14] sm:$0xf]
        %v427 = vld [vmem:[#allocation4 + $0x18] sm:$0xff]
        %v428 = vld [vmem:[#allocation4 + $0x20] sm:$0xf]
        %v429 = vld [vmem:[#allocation4 + $0x24] sm:$0xff]
        %v430 = vld [vmem:[#allocation4 + $0x2c] sm:$0xf]
        %v431 = vld [vmem:[#allocation4 + $0x30] sm:$0xff]
        %v432 = vld [vmem:[#allocation4 + $0x38] sm:$0xf]
        %v433 = vld [vmem:[#allocation4 + $0x3c] sm:$0xff]
        %v434 = vld [vmem:[#allocation4 + $0x44] sm:$0xf]
        %v435 = vld [vmem:[#allocation4 + $0x48] sm:$0xff]
        %v436 = vld [vmem:[#allocation4 + $0x50] sm:$0xf]
        %v437 = vld [vmem:[#allocation4 + $0x54] sm:$0xff]
        %v438 = vld [vmem:[#allocation4 + $0x5c] sm:$0xf]
        %v439 = vld [vmem:[#allocation4 + $0x60] sm:$0xff]
        %v440 = vld [vmem:[#allocation4 + $0x68] sm:$0xf]
        %v441 = vld [vmem:[#allocation4 + $0x6c] sm:$0xff]
        %v442 = vld [vmem:[#allocation4 + $0x74] sm:$0xf]
        %v443 = vld [vmem:[#allocation4 + $0x78] sm:$0xff]
        %v444 = vld [vmem:[#allocation4 + $0x80] sm:$0xf]
        %v445 = vld [vmem:[#allocation4 + $0x84] sm:$0xff]
        %v446 = vld [vmem:[#allocation4 + $0x8c] sm:$0xf]
        %v447 = vld [vmem:[#allocation4 + $0x90] sm:$0xff]
        %v448 = vld [vmem:[#allocation4 + $0x98] sm:$0xf]
        %v449 = vld [vmem:[#allocation4 + $0x9c] sm:$0xff]
        %v450 = vld [vmem:[#allocation4 + $0xa4] sm:$0xf]
        %v451 = vld [vmem:[#allocation4 + $0xa8] sm:$0xff]
        %v452 = vld [vmem:[#allocation4 + $0xb0] sm:$0xf]
        %v453 = vld [vmem:[#allocation4 + $0xb4] sm:$0xff]
        %v454 = vld [vmem:[#allocation4 + $0xbc] sm:$0xf]
        %v455 = vld [vmem:[%s5] sm:$0x7]
        %v457 = vlaneseq
        %v458 = vshrl.u32 %v457, 7
        %v459 = vsub.s32 0, %v458
        %v460 = vrot.slane %v455, %v459
        %v461 = vlaneseq
        %v462 = vshrl.u32 %v461, 7
        %v463 = vsub.s32 1, %v462
        %v464 = vrot.slane %v455, %v463
        %v465 = vlaneseq
        %v466 = vshrl.u32 %v465, 7
        %v467 = vsub.s32 2, %v466
        %v468 = vrot.slane %v455, %v467
        %v504 = vunpack.c.l.b16 %v423
        %v505 = vunpack.c.h.b16 %v423
        %v506 = vunpack.c.l.b16 %v424
        %v507 = vunpack.c.l.b16 %v425
        %v508 = vunpack.c.h.b16 %v425
        %v509 = vunpack.c.l.b16 %v426
        %v510 = vunpack.c.l.b16 %v427
        %v511 = vunpack.c.h.b16 %v427
        %v512 = vunpack.c.l.b16 %v428
        %v513 = vunpack.c.l.b16 %v429
        %v514 = vunpack.c.h.b16 %v429
        %v515 = vunpack.c.l.b16 %v430
        %v516 = vunpack.c.l.b16 %v431
        %v517 = vunpack.c.h.b16 %v431
        %v518 = vunpack.c.l.b16 %v432
        %v519 = vunpack.c.l.b16 %v433
        %v520 = vunpack.c.h.b16 %v433
        %v521 = vunpack.c.l.b16 %v434
        %v522 = vunpack.c.l.b16 %v435
        %v523 = vunpack.c.h.b16 %v435
        %v524 = vunpack.c.l.b16 %v436
        %v525 = vunpack.c.l.b16 %v437
        %v526 = vunpack.c.h.b16 %v437
        %v527 = vunpack.c.l.b16 %v438
        %v528 = vunpack.c.l.b16 %v439
        %v529 = vunpack.c.h.b16 %v439
        %v530 = vunpack.c.l.b16 %v440
        %v531 = vunpack.c.l.b16 %v441
        %v532 = vunpack.c.h.b16 %v441
        %v533 = vunpack.c.l.b16 %v442
        %v534 = vunpack.c.l.b16 %v443
        %v535 = vunpack.c.h.b16 %v443
        %v536 = vunpack.c.l.b16 %v444
        %v537 = vunpack.c.l.b16 %v445
        %v538 = vunpack.c.h.b16 %v445
        %v539 = vunpack.c.l.b16 %v446
        %v540 = vunpack.c.l.b16 %v447
        %v541 = vunpack.c.h.b16 %v447
        %v542 = vunpack.c.l.b16 %v448
        %v543 = vunpack.c.l.b16 %v449
        %v544 = vunpack.c.h.b16 %v449
        %v545 = vunpack.c.l.b16 %v450
        %v546 = vunpack.c.l.b16 %v451
        %v547 = vunpack.c.h.b16 %v451
        %v548 = vunpack.c.l.b16 %v452
        %v549 = vunpack.c.l.b16 %v453
        %v550 = vunpack.c.h.b16 %v453
        %v551 = vunpack.c.l.b16 %v454
        %v552 = vpack.c.b16 %v507, %v504
        %v553 = vpack.c.b16 %v508, %v505
        %v554 = vpack.c.b16 %v509, %v506
        %v555 = vpack.c.b16 %v513, %v510
        %v556 = vpack.c.b16 %v514, %v511
        %v557 = vpack.c.b16 %v515, %v512
        %v558 = vpack.c.b16 %v519, %v516
        %v559 = vpack.c.b16 %v520, %v517
        %v560 = vpack.c.b16 %v521, %v518
        %v561 = vpack.c.b16 %v525, %v522
        %v562 = vpack.c.b16 %v526, %v523
        %v563 = vpack.c.b16 %v527, %v524
        %v564 = vpack.c.b16 %v531, %v528
        %v565 = vpack.c.b16 %v532, %v529
        %v566 = vpack.c.b16 %v533, %v530
        %v567 = vpack.c.b16 %v537, %v534
        %v568 = vpack.c.b16 %v538, %v535
        %v569 = vpack.c.b16 %v539, %v536
        %v570 = vpack.c.b16 %v543, %v540
        %v571 = vpack.c.b16 %v544, %v541
        %v572 = vpack.c.b16 %v545, %v542
        %v573 = vpack.c.b16 %v549, %v546
        %v574 = vpack.c.b16 %v550, %v547
        %v575 = vpack.c.b16 %v551, %v548
        %600 = vmatprep.subr.bf16.mxu0 %v574
        %601 = vmatpush1.bf16.msra.mxu0 %v573
        %602 = vmatprep.subr.bf16.mxu0 %v571
        %603 = vmatpush1.bf16.msra.mxu0 %v570
        %604 = vmatprep.subr.bf16.mxu0 %v568
        %605 = vmatpush1.bf16.msra.mxu0 %v567
        %606 = vmatprep.subr.bf16.mxu0 %v565
        %607 = vmatpush1.bf16.msra.mxu0 %v564
        %608 = vmatprep.subr.bf16.mxu0 %v562
        %609 = vmatpush1.bf16.msra.mxu0 %v561
        %610 = vmatprep.subr.bf16.mxu0 %v559
        %611 = vmatpush1.bf16.msra.mxu0 %v558
        %612 = vmatprep.subr.bf16.mxu0 %v556
        %613 = vmatpush1.bf16.msra.mxu0 %v555
        %614 = vmatprep.subr.bf16.mxu0 %v553
        %615 = vmatpush1.bf16.msra.mxu0 %v552
        %616 = vmatprep.subr.bf16.mxu0 0
        %617 = vmatpush2.bf16.msra.mxu0 0
        %618 = vmatprep.subr.bf16.mxu0 0
        %619 = vmatpush2.bf16.msra.mxu0 0
        %620 = vmatprep.subr.bf16.mxu0 0
        %621 = vmatpush2.bf16.msra.mxu0 0
        %622 = vmatprep.subr.bf16.mxu0 0
        %623 = vmatpush2.bf16.msra.mxu0 0
        %624 = vmatprep.subr.bf16.mxu0 0
        %625 = vmatpush2.bf16.msra.mxu0 0
        %626 = vmatprep.subr.bf16.mxu0 0
        %627 = vmatpush2.bf16.msra.mxu0 0
        %628 = vmatprep.subr.bf16.mxu0 0
        %629 = vmatpush2.bf16.msra.mxu0 0
        %630 = vmatprep.subr.bf16.mxu0 0
        %631 = vmatpush2.bf16.msra.mxu0 0
        %632 = vmatprep.mubr.bf16.mxu0 0
        %633 = vmatmul.mubr.bf16.gmra.mxu0 %v422
        %v634 = vpop.f32.mrf.mxu0
        %v635 = vadd.f32 %v460, %v634
        %v636 = vpop.f32.mrf.mxu0
        %v637 = vadd.f32 %v464, %v636
        %v638 = vpop.f32.mrf.mxu0
        %v639 = vadd.f32 %v460, %v638
        %v640 = vpop.f32.mrf.mxu0
        %v641 = vadd.f32 %v464, %v640
        %642 = vdwg.mxu0
        %643 = vmatprep.subr.bf16.mxu0 0
        %644 = vmatpush1.bf16.msra.mxu0 %v575
        %645 = vmatprep.subr.bf16.mxu0 0
        %646 = vmatpush1.bf16.msra.mxu0 %v572
        %647 = vmatprep.subr.bf16.mxu0 0
        %648 = vmatpush1.bf16.msra.mxu0 %v569
        %649 = vmatprep.subr.bf16.mxu0 0
        %650 = vmatpush1.bf16.msra.mxu0 %v566
        %651 = vmatprep.subr.bf16.mxu0 0
        %652 = vmatpush1.bf16.msra.mxu0 %v563
        %653 = vmatprep.subr.bf16.mxu0 0
        %654 = vmatpush1.bf16.msra.mxu0 %v560
        %655 = vmatprep.subr.bf16.mxu0 0
        %656 = vmatpush1.bf16.msra.mxu0 %v557
        %657 = vmatprep.subr.bf16.mxu0 0
        %658 = vmatpush1.bf16.msra.mxu0 %v554
        %659 = vmatprep.subr.bf16.mxu0 0
        %660 = vmatpush2.bf16.msra.mxu0 0
        %661 = vmatprep.subr.bf16.mxu0 0
        %662 = vmatpush2.bf16.msra.mxu0 0
        %663 = vmatprep.subr.bf16.mxu0 0
        %664 = vmatpush2.bf16.msra.mxu0 0
        %665 = vmatprep.subr.bf16.mxu0 0
        %666 = vmatpush2.bf16.msra.mxu0 0
        %667 = vmatprep.subr.bf16.mxu0 0
        %668 = vmatpush2.bf16.msra.mxu0 0
        %669 = vmatprep.subr.bf16.mxu0 0
        %670 = vmatpush2.bf16.msra.mxu0 0
        %671 = vmatprep.subr.bf16.mxu0 0
        %672 = vmatpush2.bf16.msra.mxu0 0
        %673 = vmatprep.subr.bf16.mxu0 0
        %674 = vmatpush2.bf16.msra.mxu0 0
        %675 = vmatprep.mubr.bf16.mxu0 0
        %676 = vmatmul.mubr.bf16.gmra.mxu0 %v422
        %v677 = vpop.f32.mrf.mxu0
        %v678 = vadd.f32 %v468, %v677
        %v679 = vpop.f32.mrf.mxu0
        %v680 = vpop.f32.mrf.mxu0
        %v681 = vadd.f32 %v468, %v680
        %v682 = vpop.f32.mrf.mxu0
        %683 = vdwg.mxu0
        %v684 = vld [vmem:[%s320] sm:$0xff]
        %v685 = vld [vmem:[%s320 + $0x8] sm:$0xff]
        %vm686 = vcmp.eq.s32.totalorder %v684, 0
        %vm687 = vcmp.eq.s32.totalorder %v685, 0
        %v688 = vpack.c.bf16 %v639, %v635
        %v689 = vpack.c.bf16 %v641, %v637
        %v690 = vpack.c.bf16 %v681, %v678
        %vm691 = vcmask 261120
        %v693 = vsel %vm691, %v688, 0
        %v696 = vsel %vm691, %v689, 0
        %698 = vmatprep.subr.bf16.mxu0 0
        %699 = vmatpush1.bf16.xpose.msra.mxu0 0
        %700 = vmatprep.subr.bf16.mxu0 0
        %701 = vmatpush1.bf16.xpose.msra.mxu0 0
        %702 = vmatprep.subr.bf16.mxu0 0
        %703 = vmatpush1.bf16.xpose.msra.mxu0 0
        %704 = vmatprep.subr.bf16.mxu0 0
        %705 = vmatpush1.bf16.xpose.msra.mxu0 0
        %706 = vmatprep.subr.bf16.mxu0 0
        %707 = vmatpush1.bf16.xpose.msra.mxu0 0
        %708 = vmatprep.subr.bf16.mxu0 0
        %709 = vmatpush1.bf16.xpose.msra.mxu0 0
        %710 = vmatprep.subr.bf16.mxu0 0
        %711 = vmatpush1.bf16.xpose.msra.mxu0 0
        %712 = vmatprep.subr.bf16.mxu0 0
        %713 = vmatpush1.bf16.xpose.msra.mxu0 %v696
        %714 = vmatprep.subr.bf16.mxu0 0
        %715 = vmatpush2.bf16.xpose.msra.mxu0 0
        %716 = vmatprep.subr.bf16.mxu0 0
        %717 = vmatpush2.bf16.xpose.msra.mxu0 0
        %718 = vmatprep.subr.bf16.mxu0 0
        %719 = vmatpush2.bf16.xpose.msra.mxu0 0
        %720 = vmatprep.subr.bf16.mxu0 0
        %721 = vmatpush2.bf16.xpose.msra.mxu0 0
        %722 = vmatprep.subr.bf16.mxu0 0
        %723 = vmatpush2.bf16.xpose.msra.mxu0 0
        %724 = vmatprep.subr.bf16.mxu0 0
        %725 = vmatpush2.bf16.xpose.msra.mxu0 0
        %726 = vmatprep.subr.bf16.mxu0 0
        %727 = vmatpush2.bf16.xpose.msra.mxu0 0
        %728 = vmatprep.subr.bf16.mxu0 0
        %729 = vmatpush2.bf16.xpose.msra.mxu0 0
        %730 = vmatprep.mubr.bf16.mxu0 0
        %731 = vmatmul.mubr.bf16.gmra.mxu0 %v693
        %v732 = vpop.f32.mrf.mxu0
        %v733 = vadd.f32 0.0, %v732
        %v734 = vpop.f32.mrf.mxu0
        %v735 = vpop.f32.mrf.mxu0
        %v736 = vadd.f32 0.0, %v735
        %v737 = vpop.f32.mrf.mxu0
        %738 = vdwg.mxu0
        %v739 = vmul.f32 %v733, 0.17677669
        %v740 = vmul.f32 %v736, 0.17677669
        %v741 = vsel %vm686, -1e+09, %v739
        %v742 = vsel %vm687, -1e+09, %v740
        %vm743 = vcmask 130048
        %v744 = vsel %vm743, %v741, -inf
        %745 = vmax.xlane.f32.xlu0 %v744
        %v746 = vpop.xlane.xlu0 %745
        %v747 = vsel %vm743, %v742, -inf
        %748 = vmax.xlane.f32.xlu0 %v747
        %v749 = vpop.xlane.xlu0 %748
        %v750 = vsub.f32 %v741, %v746
        %v751 = vsub.f32 %v742, %v749
        %v752 = vmul.f32 %v750, 1.442695
        %v753 = vpow.pop %v752
        %v754 = vmul.f32 %v751, 1.442695
        %v755 = vpow.pop %v754
        %v756 = vsel %vm743, %v753, 0.0
        %757 = vadd.xlane.f32.xlu0 %v756
        %v758 = vpop.xlane.xlu0 %757
        %v759 = vsel %vm743, %v755, 0.0
        %760 = vadd.xlane.f32.xlu0 %v759
        %v761 = vpop.xlane.xlu0 %760
        %v762 = vrcp.pop %v758
        %v763 = vrcp.pop %v761
        %v764 = vmul.f32 %v753, %v762
        %v765 = vmul.f32 %v755, %v763
        %v766 = vpack.c.bf16 %v765, %v764
        %v768 = vsel %vm743, %v766, 0
        %770 = vmatprep.subr.bf16.mxu0 0
        %771 = vmatpush1.bf16.msra.mxu0 0
        %772 = vmatprep.subr.bf16.mxu0 0
        %773 = vmatpush1.bf16.msra.mxu0 0
        %774 = vmatprep.subr.bf16.mxu0 0
        %775 = vmatpush1.bf16.msra.mxu0 0
        %776 = vmatprep.subr.bf16.mxu0 0
        %777 = vmatpush1.bf16.msra.mxu0 0
        %778 = vmatprep.subr.bf16.mxu0 0
        %779 = vmatpush1.bf16.msra.mxu0 0
        %780 = vmatprep.subr.bf16.mxu0 0
        %781 = vmatpush1.bf16.msra.mxu0 0
        %782 = vmatprep.subr.bf16.mxu0 0
        %783 = vmatpush1.bf16.msra.mxu0 0
        %784 = vmatprep.subr.bf16.mxu0 0
        %785 = vmatpush1.bf16.msra.mxu0 %v690
        %786 = vmatprep.subr.bf16.mxu0 0
        %787 = vmatpush2.bf16.msra.mxu0 0
        %788 = vmatprep.subr.bf16.mxu0 0
        %789 = vmatpush2.bf16.msra.mxu0 0
        %790 = vmatprep.subr.bf16.mxu0 0
        %791 = vmatpush2.bf16.msra.mxu0 0
        %792 = vmatprep.subr.bf16.mxu0 0
        %793 = vmatpush2.bf16.msra.mxu0 0
        %794 = vmatprep.subr.bf16.mxu0 0
        %795 = vmatpush2.bf16.msra.mxu0 0
        %796 = vmatprep.subr.bf16.mxu0 0
        %797 = vmatpush2.bf16.msra.mxu0 0
        %798 = vmatprep.subr.bf16.mxu0 0
        %799 = vmatpush2.bf16.msra.mxu0 0
        %800 = vmatprep.subr.bf16.mxu0 0
        %801 = vmatpush2.bf16.msra.mxu0 0
        %802 = vmatprep.mubr.bf16.mxu0 0
        %803 = vmatmul.mubr.bf16.gmra.mxu0 %v768
        %v804 = vpop.f32.mrf.mxu0
        %v805 = vadd.f32 0.0, %v804
        %v806 = vpop.f32.mrf.mxu0
        %v807 = vpop.f32.mrf.mxu0
        %v808 = vadd.f32 0.0, %v807
        %v809 = vpop.f32.mrf.mxu0
        %810 = vdwg.mxu0
        %812 = vrot.lane.b32.xlu0 %v688, 96
        %v813 = vpop.permute.xlu0 %812
        %815 = vrot.lane.b32.xlu0 %v689, 96
        %v816 = vpop.permute.xlu0 %815
        %v818 = vsel %vm691, %v813, 0
        %v821 = vsel %vm691, %v816, 0
        %823 = vmatprep.subr.bf16.mxu0 0
        %824 = vmatpush1.bf16.xpose.msra.mxu0 0
        %825 = vmatprep.subr.bf16.mxu0 0
        %826 = vmatpush1.bf16.xpose.msra.mxu0 0
        %827 = vmatprep.subr.bf16.mxu0 0
        %828 = vmatpush1.bf16.xpose.msra.mxu0 0
        %829 = vmatprep.subr.bf16.mxu0 0
        %830 = vmatpush1.bf16.xpose.msra.mxu0 0
        %831 = vmatprep.subr.bf16.mxu0 0
        %832 = vmatpush1.bf16.xpose.msra.mxu0 0
        %833 = vmatprep.subr.bf16.mxu0 0
        %834 = vmatpush1.bf16.xpose.msra.mxu0 0
        %835 = vmatprep.subr.bf16.mxu0 0
        %836 = vmatpush1.bf16.xpose.msra.mxu0 0
        %837 = vmatprep.subr.bf16.mxu0 0
        %838 = vmatpush1.bf16.xpose.msra.mxu0 %v821
        %839 = vmatprep.subr.bf16.mxu0 0
        %840 = vmatpush2.bf16.xpose.msra.mxu0 0
        %841 = vmatprep.subr.bf16.mxu0 0
        %842 = vmatpush2.bf16.xpose.msra.mxu0 0
        %843 = vmatprep.subr.bf16.mxu0 0
        %844 = vmatpush2.bf16.xpose.msra.mxu0 0
        %845 = vmatprep.subr.bf16.mxu0 0
        %846 = vmatpush2.bf16.xpose.msra.mxu0 0
        %847 = vmatprep.subr.bf16.mxu0 0
        %848 = vmatpush2.bf16.xpose.msra.mxu0 0
        %849 = vmatprep.subr.bf16.mxu0 0
        %850 = vmatpush2.bf16.xpose.msra.mxu0 0
        %851 = vmatprep.subr.bf16.mxu0 0
        %852 = vmatpush2.bf16.xpose.msra.mxu0 0
        %853 = vmatprep.subr.bf16.mxu0 0
        %854 = vmatpush2.bf16.xpose.msra.mxu0 0
        %855 = vmatprep.mubr.bf16.mxu0 0
        %856 = vmatmul.mubr.bf16.gmra.mxu0 %v818
        %v857 = vpop.f32.mrf.mxu0
        %v858 = vadd.f32 0.0, %v857
        %v859 = vpop.f32.mrf.mxu0
        %v860 = vpop.f32.mrf.mxu0
        %v861 = vadd.f32 0.0, %v860
        %v862 = vpop.f32.mrf.mxu0
        %863 = vdwg.mxu0
        %v864 = vmul.f32 %v858, 0.17677669
        %v865 = vmul.f32 %v861, 0.17677669
        %v866 = vsel %vm686, -1e+09, %v864
        %v867 = vsel %vm687, -1e+09, %v865
        %v868 = vsel %vm743, %v866, -inf
        %869 = vmax.xlane.f32.xlu0 %v868
        %v870 = vpop.xlane.xlu0 %869
        %v871 = vsel %vm743, %v867, -inf
        %872 = vmax.xlane.f32.xlu0 %v871
        %v873 = vpop.xlane.xlu0 %872
        %v874 = vsub.f32 %v866, %v870
        %v875 = vsub.f32 %v867, %v873
        %v876 = vmul.f32 %v874, 1.442695
        %v877 = vpow.pop %v876
        %v878 = vmul.f32 %v875, 1.442695
        %v879 = vpow.pop %v878
        %v880 = vsel %vm743, %v877, 0.0
        %881 = vadd.xlane.f32.xlu0 %v880
        %v882 = vpop.xlane.xlu0 %881
        %v883 = vsel %vm743, %v879, 0.0
        %884 = vadd.xlane.f32.xlu0 %v883
        %v885 = vpop.xlane.xlu0 %884
        %v886 = vrcp.pop %v882
        %v887 = vrcp.pop %v885
        %v888 = vmul.f32 %v877, %v886
        %v889 = vmul.f32 %v879, %v887
        %v890 = vpack.c.bf16 %v889, %v888
        %892 = vrot.lane.b32.xlu0 %v690, 96
        %v893 = vpop.permute.xlu0 %892
        %v896 = vsel %vm743, %v890, 0
        %898 = vmatprep.subr.bf16.mxu0 0
        %899 = vmatpush1.bf16.msra.mxu0 0
        %900 = vmatprep.subr.bf16.mxu0 0
        %901 = vmatpush1.bf16.msra.mxu0 0
        %902 = vmatprep.subr.bf16.mxu0 0
        %903 = vmatpush1.bf16.msra.mxu0 0
        %904 = vmatprep.subr.bf16.mxu0 0
        %905 = vmatpush1.bf16.msra.mxu0 0
        %906 = vmatprep.subr.bf16.mxu0 0
        %907 = vmatpush1.bf16.msra.mxu0 0
        %908 = vmatprep.subr.bf16.mxu0 0
        %909 = vmatpush1.bf16.msra.mxu0 0
        %910 = vmatprep.subr.bf16.mxu0 0
        %911 = vmatpush1.bf16.msra.mxu0 0
        %912 = vmatprep.subr.bf16.mxu0 0
        %913 = vmatpush1.bf16.msra.mxu0 %v893
        %914 = vmatprep.subr.bf16.mxu0 0
        %915 = vmatpush2.bf16.msra.mxu0 0
        %916 = vmatprep.subr.bf16.mxu0 0
        %917 = vmatpush2.bf16.msra.mxu0 0
        %918 = vmatprep.subr.bf16.mxu0 0
        %919 = vmatpush2.bf16.msra.mxu0 0
        %920 = vmatprep.subr.bf16.mxu0 0
        %921 = vmatpush2.bf16.msra.mxu0 0
        %922 = vmatprep.subr.bf16.mxu0 0
        %923 = vmatpush2.bf16.msra.mxu0 0
        %924 = vmatprep.subr.bf16.mxu0 0
        %925 = vmatpush2.bf16.msra.mxu0 0
        %926 = vmatprep.subr.bf16.mxu0 0
        %927 = vmatpush2.bf16.msra.mxu0 0
        %928 = vmatprep.subr.bf16.mxu0 0
        %929 = vmatpush2.bf16.msra.mxu0 0
        %930 = vmatprep.mubr.bf16.mxu0 0
        %931 = vmatmul.mubr.bf16.gmra.mxu0 %v896
        %v932 = vpop.f32.mrf.mxu0
        %v933 = vadd.f32 0.0, %v932
        %v934 = vpop.f32.mrf.mxu0
        %v935 = vpop.f32.mrf.mxu0
        %v936 = vadd.f32 0.0, %v935
        %v937 = vpop.f32.mrf.mxu0
        %938 = vdwg.mxu0
        %939 = vrot.lane.b32.xlu0 %v688, 64
        %v940 = vpop.permute.xlu0 %939
        %941 = vrot.lane.b32.xlu0 %v689, 64
        %v942 = vpop.permute.xlu0 %941
        %v944 = vsel %vm691, %v940, 0
        %v947 = vsel %vm691, %v942, 0
        %949 = vmatprep.subr.bf16.mxu0 0
        %950 = vmatpush1.bf16.xpose.msra.mxu0 0
        %951 = vmatprep.subr.bf16.mxu0 0
        %952 = vmatpush1.bf16.xpose.msra.mxu0 0
        %953 = vmatprep.subr.bf16.mxu0 0
        %954 = vmatpush1.bf16.xpose.msra.mxu0 0
        %955 = vmatprep.subr.bf16.mxu0 0
        %956 = vmatpush1.bf16.xpose.msra.mxu0 0
        %957 = vmatprep.subr.bf16.mxu0 0
        %958 = vmatpush1.bf16.xpose.msra.mxu0 0
        %959 = vmatprep.subr.bf16.mxu0 0
        %960 = vmatpush1.bf16.xpose.msra.mxu0 0
        %961 = vmatprep.subr.bf16.mxu0 0
        %962 = vmatpush1.bf16.xpose.msra.mxu0 0
        %963 = vmatprep.subr.bf16.mxu0 0
        %964 = vmatpush1.bf16.xpose.msra.mxu0 %v947
        %965 = vmatprep.subr.bf16.mxu0 0
        %966 = vmatpush2.bf16.xpose.msra.mxu0 0
        %967 = vmatprep.subr.bf16.mxu0 0
        %968 = vmatpush2.bf16.xpose.msra.mxu0 0
        %969 = vmatprep.subr.bf16.mxu0 0
        %970 = vmatpush2.bf16.xpose.msra.mxu0 0
        %971 = vmatprep.subr.bf16.mxu0 0
        %972 = vmatpush2.bf16.xpose.msra.mxu0 0
        %973 = vmatprep.subr.bf16.mxu0 0
        %974 = vmatpush2.bf16.xpose.msra.mxu0 0
        %975 = vmatprep.subr.bf16.mxu0 0
        %976 = vmatpush2.bf16.xpose.msra.mxu0 0
        %977 = vmatprep.subr.bf16.mxu0 0
        %978 = vmatpush2.bf16.xpose.msra.mxu0 0
        %979 = vmatprep.subr.bf16.mxu0 0
        %980 = vmatpush2.bf16.xpose.msra.mxu0 0
        %981 = vmatprep.mubr.bf16.mxu0 0
        %982 = vmatmul.mubr.bf16.gmra.mxu0 %v944
        %v983 = vpop.f32.mrf.mxu0
        %v984 = vadd.f32 0.0, %v983
        %v985 = vpop.f32.mrf.mxu0
        %v986 = vpop.f32.mrf.mxu0
        %v987 = vadd.f32 0.0, %v986
        %v988 = vpop.f32.mrf.mxu0
        %989 = vdwg.mxu0
        %v990 = vmul.f32 %v984, 0.17677669
        %v991 = vmul.f32 %v987, 0.17677669
        %v992 = vsel %vm686, -1e+09, %v990
        %v993 = vsel %vm687, -1e+09, %v991
        %v994 = vsel %vm743, %v992, -inf
        %995 = vmax.xlane.f32.xlu0 %v994
        %v996 = vpop.xlane.xlu0 %995
        %v997 = vsel %vm743, %v993, -inf
        %998 = vmax.xlane.f32.xlu0 %v997
        %v999 = vpop.xlane.xlu0 %998
        %v1000 = vsub.f32 %v992, %v996
        %v1001 = vsub.f32 %v993, %v999
        %v1002 = vmul.f32 %v1000, 1.442695
        %v1003 = vpow.pop %v1002
        %v1004 = vmul.f32 %v1001, 1.442695
        %v1005 = vpow.pop %v1004
        %v1006 = vsel %vm743, %v1003, 0.0
        %1007 = vadd.xlane.f32.xlu0 %v1006
        %v1008 = vpop.xlane.xlu0 %1007
        %v1009 = vsel %vm743, %v1005, 0.0
        %1010 = vadd.xlane.f32.xlu0 %v1009
        %v1011 = vpop.xlane.xlu0 %1010
        %v1012 = vrcp.pop %v1008
        %v1013 = vrcp.pop %v1011
        %v1014 = vmul.f32 %v1003, %v1012
        %v1015 = vmul.f32 %v1005, %v1013
        %v1016 = vpack.c.bf16 %v1015, %v1014
        %1017 = vrot.lane.b32.xlu0 %v690, 64
        %v1018 = vpop.permute.xlu0 %1017
        %v1021 = vsel %vm743, %v1016, 0
        %1023 = vmatprep.subr.bf16.mxu0 0
        %1024 = vmatpush1.bf16.msra.mxu0 0
        %1025 = vmatprep.subr.bf16.mxu0 0
        %1026 = vmatpush1.bf16.msra.mxu0 0
        %1027 = vmatprep.subr.bf16.mxu0 0
        %1028 = vmatpush1.bf16.msra.mxu0 0
        %1029 = vmatprep.subr.bf16.mxu0 0
        %1030 = vmatpush1.bf16.msra.mxu0 0
        %1031 = vmatprep.subr.bf16.mxu0 0
        %1032 = vmatpush1.bf16.msra.mxu0 0
        %1033 = vmatprep.subr.bf16.mxu0 0
        %1034 = vmatpush1.bf16.msra.mxu0 0
        %1035 = vmatprep.subr.bf16.mxu0 0
        %1036 = vmatpush1.bf16.msra.mxu0 0
        %1037 = vmatprep.subr.bf16.mxu0 0
        %1038 = vmatpush1.bf16.msra.mxu0 %v1018
        %1039 = vmatprep.subr.bf16.mxu0 0
        %1040 = vmatpush2.bf16.msra.mxu0 0
        %1041 = vmatprep.subr.bf16.mxu0 0
        %1042 = vmatpush2.bf16.msra.mxu0 0
        %1043 = vmatprep.subr.bf16.mxu0 0
        %1044 = vmatpush2.bf16.msra.mxu0 0
        %1045 = vmatprep.subr.bf16.mxu0 0
        %1046 = vmatpush2.bf16.msra.mxu0 0
        %1047 = vmatprep.subr.bf16.mxu0 0
        %1048 = vmatpush2.bf16.msra.mxu0 0
        %1049 = vmatprep.subr.bf16.mxu0 0
        %1050 = vmatpush2.bf16.msra.mxu0 0
        %1051 = vmatprep.subr.bf16.mxu0 0
        %1052 = vmatpush2.bf16.msra.mxu0 0
        %1053 = vmatprep.subr.bf16.mxu0 0
        %1054 = vmatpush2.bf16.msra.mxu0 0
        %1055 = vmatprep.mubr.bf16.mxu0 0
        %1056 = vmatmul.mubr.bf16.gmra.mxu0 %v1021
        %v1057 = vpop.f32.mrf.mxu0
        %v1058 = vadd.f32 0.0, %v1057
        %v1059 = vpop.f32.mrf.mxu0
        %v1060 = vpop.f32.mrf.mxu0
        %v1061 = vadd.f32 0.0, %v1060
        %v1062 = vpop.f32.mrf.mxu0
        %1063 = vdwg.mxu0
        %1064 = vrot.lane.b32.xlu0 %v688, 32
        %v1065 = vpop.permute.xlu0 %1064
        %1066 = vrot.lane.b32.xlu0 %v689, 32
        %v1067 = vpop.permute.xlu0 %1066
        %v1069 = vsel %vm691, %v1065, 0
        %v1072 = vsel %vm691, %v1067, 0
        %1074 = vmatprep.subr.bf16.mxu0 0
        %1075 = vmatpush1.bf16.xpose.msra.mxu0 0
        %1076 = vmatprep.subr.bf16.mxu0 0
        %1077 = vmatpush1.bf16.xpose.msra.mxu0 0
        %1078 = vmatprep.subr.bf16.mxu0 0
        %1079 = vmatpush1.bf16.xpose.msra.mxu0 0
        %1080 = vmatprep.subr.bf16.mxu0 0
        %1081 = vmatpush1.bf16.xpose.msra.mxu0 0
        %1082 = vmatprep.subr.bf16.mxu0 0
        %1083 = vmatpush1.bf16.xpose.msra.mxu0 0
        %1084 = vmatprep.subr.bf16.mxu0 0
        %1085 = vmatpush1.bf16.xpose.msra.mxu0 0
        %1086 = vmatprep.subr.bf16.mxu0 0
        %1087 = vmatpush1.bf16.xpose.msra.mxu0 0
        %1088 = vmatprep.subr.bf16.mxu0 0
        %1089 = vmatpush1.bf16.xpose.msra.mxu0 %v1072
        %1090 = vmatprep.subr.bf16.mxu0 0
        %1091 = vmatpush2.bf16.xpose.msra.mxu0 0
        %1092 = vmatprep.subr.bf16.mxu0 0
        %1093 = vmatpush2.bf16.xpose.msra.mxu0 0
        %1094 = vmatprep.subr.bf16.mxu0 0
        %1095 = vmatpush2.bf16.xpose.msra.mxu0 0
        %1096 = vmatprep.subr.bf16.mxu0 0
        %1097 = vmatpush2.bf16.xpose.msra.mxu0 0
        %1098 = vmatprep.subr.bf16.mxu0 0
        %1099 = vmatpush2.bf16.xpose.msra.mxu0 0
        %1100 = vmatprep.subr.bf16.mxu0 0
        %1101 = vmatpush2.bf16.xpose.msra.mxu0 0
        %1102 = vmatprep.subr.bf16.mxu0 0
        %1103 = vmatpush2.bf16.xpose.msra.mxu0 0
        %1104 = vmatprep.subr.bf16.mxu0 0
        %1105 = vmatpush2.bf16.xpose.msra.mxu0 0
        %1106 = vmatprep.mubr.bf16.mxu0 0
        %1107 = vmatmul.mubr.bf16.gmra.mxu0 %v1069
        %v1108 = vpop.f32.mrf.mxu0
        %v1109 = vadd.f32 0.0, %v1108
        %v1110 = vpop.f32.mrf.mxu0
        %v1111 = vpop.f32.mrf.mxu0
        %v1112 = vadd.f32 0.0, %v1111
        %v1113 = vpop.f32.mrf.mxu0
        %1114 = vdwg.mxu0
        %v1115 = vmul.f32 %v1109, 0.17677669
        %v1116 = vmul.f32 %v1112, 0.17677669
        %v1117 = vsel %vm686, -1e+09, %v1115
        %v1118 = vsel %vm687, -1e+09, %v1116
        %v1119 = vsel %vm743, %v1117, -inf
        %1120 = vmax.xlane.f32.xlu0 %v1119
        %v1121 = vpop.xlane.xlu0 %1120
        %v1122 = vsel %vm743, %v1118, -inf
        %1123 = vmax.xlane.f32.xlu0 %v1122
        %v1124 = vpop.xlane.xlu0 %1123
        %v1125 = vsub.f32 %v1117, %v1121
        %v1126 = vsub.f32 %v1118, %v1124
        %v1127 = vmul.f32 %v1125, 1.442695
        %v1128 = vpow.pop %v1127
        %v1129 = vmul.f32 %v1126, 1.442695
        %v1130 = vpow.pop %v1129
        %v1131 = vsel %vm743, %v1128, 0.0
        %1132 = vadd.xlane.f32.xlu0 %v1131
        %v1133 = vpop.xlane.xlu0 %1132
        %v1134 = vsel %vm743, %v1130, 0.0
        %1135 = vadd.xlane.f32.xlu0 %v1134
        %v1136 = vpop.xlane.xlu0 %1135
        %v1137 = vrcp.pop %v1133
        %v1138 = vrcp.pop %v1136
        %v1139 = vmul.f32 %v1128, %v1137
        %v1140 = vmul.f32 %v1130, %v1138
        %v1141 = vpack.c.bf16 %v1140, %v1139
        %1142 = vrot.lane.b32.xlu0 %v690, 32
        %v1143 = vpop.permute.xlu0 %1142
        %v1146 = vsel %vm743, %v1141, 0
        %1148 = vmatprep.subr.bf16.mxu0 0
        %1149 = vmatpush1.bf16.msra.mxu0 0
        %1150 = vmatprep.subr.bf16.mxu0 0
        %1151 = vmatpush1.bf16.msra.mxu0 0
        %1152 = vmatprep.subr.bf16.mxu0 0
        %1153 = vmatpush1.bf16.msra.mxu0 0
        %1154 = vmatprep.subr.bf16.mxu0 0
        %1155 = vmatpush1.bf16.msra.mxu0 0
        %1156 = vmatprep.subr.bf16.mxu0 0
        %1157 = vmatpush1.bf16.msra.mxu0 0
        %1158 = vmatprep.subr.bf16.mxu0 0
        %1159 = vmatpush1.bf16.msra.mxu0 0
        %1160 = vmatprep.subr.bf16.mxu0 0
        %1161 = vmatpush1.bf16.msra.mxu0 0
        %1162 = vmatprep.subr.bf16.mxu0 0
        %1163 = vmatpush1.bf16.msra.mxu0 %v1143
        %1164 = vmatprep.subr.bf16.mxu0 0
        %1165 = vmatpush2.bf16.msra.mxu0 0
        %1166 = vmatprep.subr.bf16.mxu0 0
        %1167 = vmatpush2.bf16.msra.mxu0 0
        %1168 = vmatprep.subr.bf16.mxu0 0
        %1169 = vmatpush2.bf16.msra.mxu0 0
        %1170 = vmatprep.subr.bf16.mxu0 0
        %1171 = vmatpush2.bf16.msra.mxu0 0
        %1172 = vmatprep.subr.bf16.mxu0 0
        %1173 = vmatpush2.bf16.msra.mxu0 0
        %1174 = vmatprep.subr.bf16.mxu0 0
        %1175 = vmatpush2.bf16.msra.mxu0 0
        %1176 = vmatprep.subr.bf16.mxu0 0
        %1177 = vmatpush2.bf16.msra.mxu0 0
        %1178 = vmatprep.subr.bf16.mxu0 0
        %1179 = vmatpush2.bf16.msra.mxu0 0
        %1180 = vmatprep.mubr.bf16.mxu0 0
        %1181 = vmatmul.mubr.bf16.gmra.mxu0 %v1146
        %v1182 = vpop.f32.mrf.mxu0
        %v1183 = vadd.f32 0.0, %v1182
        %v1184 = vpop.f32.mrf.mxu0
        %v1185 = vpop.f32.mrf.mxu0
        %v1186 = vadd.f32 0.0, %v1185
        %v1187 = vpop.f32.mrf.mxu0
        %1188 = vdwg.mxu0
        %1191 = vrot.lane.b32.xlu0 %v933, 32
        %v1192 = vpop.permute.xlu0 %1191
        %1193 = vrot.lane.b32.xlu0 %v936, 32
        %v1194 = vpop.permute.xlu0 %1193
        %1199 = vrot.lane.b32.xlu0 %v1058, 64
        %v1200 = vpop.permute.xlu0 %1199
        %1201 = vrot.lane.b32.xlu0 %v1061, 64
        %v1202 = vpop.permute.xlu0 %1201
        %1207 = vrot.lane.b32.xlu0 %v1183, 96
        %v1208 = vpop.permute.xlu0 %1207
        %1209 = vrot.lane.b32.xlu0 %v1186, 96
        %v1210 = vpop.permute.xlu0 %1209
        %v1213 = vsel %vm691, %v805, %v1192
        %v1214 = vsel %vm691, %v808, %v1194
        %vm1215 = vcmask 523264
        %v1216 = vsel %vm1215, %v1213, %v1200
        %v1217 = vsel %vm1215, %v1214, %v1202
        %vm1218 = vcmask 785408
        %v1219 = vsel %vm1218, %v1216, %v1208
        %v1220 = vsel %vm1218, %v1217, %v1210
        %v1221 = vpack.c.bf16 %v1220, %v1219
        %v1222 = vld [vmem:[#allocation6] sm:$0xf]
        %v1223 = vld [vmem:[#allocation6 + $0x4] sm:$0xf]
        %v1224 = vld [vmem:[#allocation6 + $0x8] sm:$0xf]
        %v1225 = vld [vmem:[#allocation6 + $0xc] sm:$0xf]
        %v1226 = vld [vmem:[#allocation6 + $0x10] sm:$0xf]
        %v1227 = vld [vmem:[#allocation6 + $0x14] sm:$0xf]
        %v1228 = vld [vmem:[#allocation6 + $0x18] sm:$0xf]
        %v1229 = vld [vmem:[#allocation6 + $0x1c] sm:$0xf]
        %v1230 = vld [vmem:[#allocation6 + $0x20] sm:$0xf]
        %v1231 = vld [vmem:[#allocation6 + $0x24] sm:$0xf]
        %v1232 = vld [vmem:[#allocation6 + $0x28] sm:$0xf]
        %v1233 = vld [vmem:[#allocation6 + $0x2c] sm:$0xf]
        %v1234 = vld [vmem:[#allocation6 + $0x30] sm:$0xf]
        %v1235 = vld [vmem:[#allocation6 + $0x34] sm:$0xf]
        %v1236 = vld [vmem:[#allocation6 + $0x38] sm:$0xf]
        %v1237 = vld [vmem:[#allocation6 + $0x3c] sm:$0xf]
        %v1238 = vld [vmem:[%s7] sm:$0x1]
        %v1240 = vlaneseq
        %v1241 = vshrl.u32 %v1240, 7
        %v1242 = vsub.s32 0, %v1241
        %v1243 = vrot.slane %v1238, %v1242
        %v1261 = vunpack.c.l.b16 %v1222
        %v1262 = vunpack.c.l.b16 %v1223
        %v1263 = vunpack.c.l.b16 %v1224
        %v1264 = vunpack.c.l.b16 %v1225
        %v1265 = vunpack.c.l.b16 %v1226
        %v1266 = vunpack.c.l.b16 %v1227
        %v1267 = vunpack.c.l.b16 %v1228
        %v1268 = vunpack.c.l.b16 %v1229
        %v1269 = vunpack.c.l.b16 %v1230
        %v1270 = vunpack.c.l.b16 %v1231
        %v1271 = vunpack.c.l.b16 %v1232
        %v1272 = vunpack.c.l.b16 %v1233
        %v1273 = vunpack.c.l.b16 %v1234
        %v1274 = vunpack.c.l.b16 %v1235
        %v1275 = vunpack.c.l.b16 %v1236
        %v1276 = vunpack.c.l.b16 %v1237
        %v1277 = vpack.c.b16 %v1262, %v1261
        %v1278 = vpack.c.b16 %v1264, %v1263
        %v1279 = vpack.c.b16 %v1266, %v1265
        %v1280 = vpack.c.b16 %v1268, %v1267
        %v1281 = vpack.c.b16 %v1270, %v1269
        %v1282 = vpack.c.b16 %v1272, %v1271
        %v1283 = vpack.c.b16 %v1274, %v1273
        %v1284 = vpack.c.b16 %v1276, %v1275
        %1293 = vmatprep.subr.bf16.mxu0 0
        %1294 = vmatpush1.bf16.msra.mxu0 %v1284
        %1295 = vmatprep.subr.bf16.mxu0 0
        %1296 = vmatpush1.bf16.msra.mxu0 %v1283
        %1297 = vmatprep.subr.bf16.mxu0 0
        %1298 = vmatpush1.bf16.msra.mxu0 %v1282
        %1299 = vmatprep.subr.bf16.mxu0 0
        %1300 = vmatpush1.bf16.msra.mxu0 %v1281
        %1301 = vmatprep.subr.bf16.mxu0 0
        %1302 = vmatpush1.bf16.msra.mxu0 %v1280
        %1303 = vmatprep.subr.bf16.mxu0 0
        %1304 = vmatpush1.bf16.msra.mxu0 %v1279
        %1305 = vmatprep.subr.bf16.mxu0 0
        %1306 = vmatpush1.bf16.msra.mxu0 %v1278
        %1307 = vmatprep.subr.bf16.mxu0 0
        %1308 = vmatpush1.bf16.msra.mxu0 %v1277
        %1309 = vmatprep.subr.bf16.mxu0 0
        %1310 = vmatpush2.bf16.msra.mxu0 0
        %1311 = vmatprep.subr.bf16.mxu0 0
        %1312 = vmatpush2.bf16.msra.mxu0 0
        %1313 = vmatprep.subr.bf16.mxu0 0
        %1314 = vmatpush2.bf16.msra.mxu0 0
        %1315 = vmatprep.subr.bf16.mxu0 0
        %1316 = vmatpush2.bf16.msra.mxu0 0
        %1317 = vmatprep.subr.bf16.mxu0 0
        %1318 = vmatpush2.bf16.msra.mxu0 0
        %1319 = vmatprep.subr.bf16.mxu0 0
        %1320 = vmatpush2.bf16.msra.mxu0 0
        %1321 = vmatprep.subr.bf16.mxu0 0
        %1322 = vmatpush2.bf16.msra.mxu0 0
        %1323 = vmatprep.subr.bf16.mxu0 0
        %1324 = vmatpush2.bf16.msra.mxu0 0
        %1325 = vmatprep.mubr.bf16.mxu0 0
        %1326 = vmatmul.mubr.bf16.gmra.mxu0 %v1221
        %v1327 = vpop.f32.mrf.mxu0
        %v1328 = vadd.f32 %v1243, %v1327
        %v1329 = vpop.f32.mrf.mxu0
        %v1330 = vpop.f32.mrf.mxu0
        %v1331 = vadd.f32 %v1243, %v1330
        %v1332 = vpop.f32.mrf.mxu0
        %1333 = vdwg.mxu0
        %v1334 = vadd.f32 %v379, %v1328
        %v1335 = vadd.f32 %v380, %v1331
        %1336 = vst [vmem:[%s376] sm:$0xff] %v1334
        %1337 = vst [vmem:[%s376 + $0x8] sm:$0xff] %v1335
        %s1338 = smul.u32 2, %s23
        %p1339 = scmp.lt.s32.totalorder %s1338, 3
        %s1340 = scalar_select %p1339, %s1338, 3
        %s1341 = smul.addr %s1340, 8
        %s1342 = scalar_lea.vmem %s8, %s1341
        // Predicated region
        $region65: #{decoder_layer_forward.3} parent=51 // pred_check
          %p1343 = pneg %p219
        $region66: #{decoder_layer_forward.3} parent=51 // pred_check_branch
          %1345 = sbr.rel (%p1343) target = $region68
        $region67: #{decoder_layer_forward.3} parent=51 // pred_region
          %s1346 = smul.u32 2, %s23
        $region68: #{decoder_layer_forward.3} parent=51 // pred_fallthru
          _
      $region52: #{decoder_layer_forward.3} parent=5 // pred_fallthru
        _
      %p1347 = scmp.le.s32.totalorder 2, %s18
      // Predicated region
      $region69: #{decoder_layer_forward.3} parent=5 // pred_check
        %p1348 = pneg %p1347
      $region70: #{decoder_layer_forward.3} parent=5 // pred_check_branch
        %1350 = sbr.rel (%p1348) target = $region72
      $region71: #{decoder_layer_forward.3} parent=5 // pred_region
        %s1351 = ssub.s32 %s18, 2
        // Predicated region
        $region73: #{decoder_layer_forward.3} parent=71 // pred_check
          %p1352 = pneg %p225
        $region74: #{decoder_layer_forward.3} parent=71 // pred_check_branch
          %1354 = sbr.rel (%p1352) target = $region76
        $region75: #{decoder_layer_forward.3} parent=71 // pred_region
          %s1355 = smul.u32 2, %s24
          %p1356 = scmp.lt.s32.totalorder %s1355, 3
          %s1357 = scalar_select %p1356, %s1355, 3
          %s1358 = smul.addr %s1357, 8
          %s1359 = scalar_lea.vmem %s8, %s1358
        $region76: #{decoder_layer_forward.3} parent=71 // pred_fallthru
          _
      $region72: #{decoder_layer_forward.3} parent=5 // pred_fallthru
        _
    $region6: #{decoder_layer_forward.3} parent=1 // loop_footer
      %s22 = sadd.s32 1, %s18
    $region7: #{decoder_layer_forward.3} parent=1 // loop_footer_branch
      %17 = sbr.rel target = $region3
    $region8: #{decoder_layer_forward.3} parent=1 // loop_exit
      _
    %1360 = vsyncpa [#allocation3], 1
    %s1361 = scalar_lea.sflag [#allocation3], 1
    %1362 = vsyncpa %s1361, 1
    %1363 = vsyncpa [#allocation5], 1

</llo_original>
